<compile_context>
chip_gen: v7x
topology: tpu7x:2x2x1
jax: 0.10.0
libtpu: 0.0.40
codegen_flags: <defaults>
</compile_context>

<pallas_src>
import functools

import jax
import jax.numpy as jnp
from jax.experimental import pallas as pl
from jax.experimental.pallas import tpu as pltpu


def _round_up(x, m):
    return (x + m - 1) // m * m


def _lstm_block_kernel(lens_ref, x_ref, wih_ref, whh_ref, b_ref, y_ref,
                       h_ref, c_ref, gx_ref, *, hidden, time_block):
    """One grid step == one block of TT timesteps of the packed-sequence LSTM.

    lens_ref: (B, 1) int32   sequence lengths (resident, single-buffered)
    x_ref:    (B, TT, D)     current input time block (batch-first stream)
    wih_ref:  (D, 4H)        input->gates weights  (resident, single-buffered)
    whh_ref:  (H, 4H)        hidden->gates weights (resident, single-buffered)
    b_ref:    (1, 4H)        combined bias         (resident, single-buffered)
    y_ref:    (B, TT, H)     output time block
    h_ref:    (B, H) f32     hidden state scratch (persists across grid steps)
    c_ref:    (B, H) f32     cell   state scratch (persists across grid steps)
    gx_ref:   (B, TT, 4H) f32  per-block input pre-activations scratch
    """
    tb = pl.program_id(0)
    B = h_ref.shape[0]
    H = hidden
    TT = time_block

    @pl.when(tb == 0)
    def _():
        h_ref[...] = jnp.zeros_like(h_ref)
        c_ref[...] = jnp.zeros_like(c_ref)

    # ---- block input projection: ONE MXU GEMM with M = B*TT (hoisted out of
    # the recurrence), bias folded in once per block. ----
    x_blk = x_ref[...]                                     # (B, TT, D)
    x2d = x_blk.reshape(B * TT, x_blk.shape[-1])           # collapse leading dims
    gx = jnp.dot(x2d.astype(wih_ref.dtype), wih_ref[...],
                 preferred_element_type=jnp.float32)       # (B*TT, 4H) f32
    gx = gx + b_ref[...].astype(jnp.float32)
    gx_ref[...] = gx.reshape(B, TT, 4 * H)

    # ---- loop-invariant loads hoisted out of the inner time loop ----
    whh = whh_ref[...]                                     # native dtype -> MXU
    lens_vec = lens_ref[...]                               # (B, 1) int32
    t0 = tb * TT

    def step(t, carry):
        h, c = carry                                       # (B, H) f32 each
        g = gx_ref[:, pl.ds(t, 1), :].reshape(B, 4 * H)    # precomputed x-part
        g = g + jnp.dot(h.astype(whh.dtype), whh,
                        preferred_element_type=jnp.float32)

        i_g = jax.nn.sigmoid(g[:, 0 * H:1 * H])
        f_g = jax.nn.sigmoid(g[:, 1 * H:2 * H])
        g_g = jnp.tanh(g[:, 2 * H:3 * H])
        o_g = jax.nn.sigmoid(g[:, 3 * H:4 * H])

        c_new = f_g * c + i_g * g_g
        h_new = o_g * jnp.tanh(c_new)

        # pack_padded_sequence semantics: sequences shorter than t are not
        # stepped (state frozen); pad_packed_sequence zero-fills their output.
        valid = lens_vec > (t0 + t)                        # (B, 1) bool
        c = jnp.where(valid, c_new, c)
        h = jnp.where(valid, h_new, h)
        y_ref[:, pl.ds(t, 1), :] = (
            jnp.where(valid, h_new, 0.0)[:, None, :].astype(y_ref.dtype))
        return h, c

    h_out, c_out = jax.lax.fori_loop(
        0, TT, step, (h_ref[...], c_ref[...]), unroll=min(8, TT))
    h_ref[...] = h_out
    c_ref[...] = c_out


def padding_forward(xs, xlens, w_ih, w_hh, b, *, time_block=8):
    """Pallas implementation of Padding.forward with rnn = 1-layer uni LSTM.

    xs:    [B, T, D]  batch-first inputs (T == max(xlens) at the call site)
    xlens: [B]        int lengths (mask does not require them sorted)
    w_ih:  [D, 4H]    transposed PyTorch weight_ih_l0, gate order (i, f, g, o)
    w_hh:  [H, 4H]    transposed PyTorch weight_hh_l0
    b:     [4H]       b_ih + b_hh
    returns ys: [B, T, H] with ys[b, t] == 0 for t >= xlens[b]
    """
    B, T, D = xs.shape
    H = w_hh.shape[0]
    assert w_ih.shape == (D, 4 * H) and w_hh.shape == (H, 4 * H)
    assert b.shape == (4 * H,)

    TT = time_block
    B_pad = _round_up(max(B, 8), 8)     # full f32 sublanes / MXU rows
    T_pad = _round_up(T, TT)

    if (B_pad, T_pad) != (B, T):
        xs_p = jnp.pad(xs, ((0, B_pad - B), (0, T_pad - T), (0, 0)))
        xlens_p = jnp.pad(xlens.astype(jnp.int32), (0, B_pad - B))
    else:
        xs_p = xs
        xlens_p = xlens.astype(jnp.int32)

    lens2d = xlens_p.reshape(B_pad, 1)
    b2d = b.reshape(1, 4 * H)
    n_blocks = T_pad // TT

    resident = pl.Buffered(1)   # grid-invariant operands: no double buffering

    y_p = pl.pallas_call(
        functools.partial(_lstm_block_kernel, hidden=H, time_block=TT),
        out_shape=jax.ShapeDtypeStruct((B_pad, T_pad, H), xs.dtype),
        grid_spec=pltpu.PrefetchScalarGridSpec(
            num_scalar_prefetch=0,
            grid=(n_blocks,),
            in_specs=[
                pl.BlockSpec((B_pad, 1), lambda tb: (0, 0),
                             pipeline_mode=resident),                   # xlens
                pl.BlockSpec((B_pad, TT, D), lambda tb: (0, tb, 0)),    # x block
                pl.BlockSpec((D, 4 * H), lambda tb: (0, 0),
                             pipeline_mode=resident),                   # W_ih
                pl.BlockSpec((H, 4 * H), lambda tb: (0, 0),
                             pipeline_mode=resident),                   # W_hh
                pl.BlockSpec((1, 4 * H), lambda tb: (0, 0),
                             pipeline_mode=resident),                   # bias
            ],
            out_specs=pl.BlockSpec((B_pad, TT, H), lambda tb: (0, tb, 0)),
            scratch_shapes=[
                pltpu.VMEM((B_pad, H), jnp.float32),          # h state
                pltpu.VMEM((B_pad, H), jnp.float32),          # c state
                pltpu.VMEM((B_pad, TT, 4 * H), jnp.float32),  # block pre-acts
            ],
        ),
        compiler_params=pltpu.CompilerParams(
            # Recurrence is sequential in time -> "arbitrary".
            # (For production shapes also set vmem_limit_bytes explicitly.)
            dimension_semantics=("arbitrary",),
        ),
    )(lens2d, xs_p, w_ih, w_hh, b2d)

    if (B_pad, T_pad) != (B, T):
        y_p = y_p[:B, :T]
    return y_p


def _reference_padding_forward(xs, xlens, w_ih, w_hh, b):
    """Pure-JAX masked LSTM == pack -> LSTM -> pad (outputs only)."""
    B, T, D = xs.shape
    H = w_hh.shape[0]

    def step(carry, inp):
        h, c = carry
        x_t, t = inp
        gates = x_t @ w_ih + h @ w_hh + b
        i_g = jax.nn.sigmoid(gates[:, 0 * H:1 * H])
        f_g = jax.nn.sigmoid(gates[:, 1 * H:2 * H])
        g_g = jnp.tanh(gates[:, 2 * H:3 * H])
        o_g = jax.nn.sigmoid(gates[:, 3 * H:4 * H])
        c_new = f_g * c + i_g * g_g
        h_new = o_g * jnp.tanh(c_new)
        valid = (xlens > t)[:, None]
        h = jnp.where(valid, h_new, h)
        c = jnp.where(valid, c_new, c)
        y = jnp.where(valid, h_new, 0.0)
        return (h, c), y

    init = (jnp.zeros((B, H), jnp.float32), jnp.zeros((B, H), jnp.float32))
    _, ys = jax.lax.scan(
        step, init,
        (jnp.transpose(xs, (1, 0, 2)).astype(jnp.float32),
         jnp.arange(T, dtype=jnp.int32)))
    return jnp.transpose(ys, (1, 0, 2)).astype(xs.dtype)


if __name__ == "__main__":
    # Small shapes: B=2, T=20 frames, D=32 features, H=128 hidden units
    # (H multiple of 128 so output stores are lane-dense / unmasked).
    # T=20 is intentionally NOT a multiple of the time block (exercises the
    # pad path), and the second length crosses a block boundary.
    B, T, D, H = 2, 20, 32, 128
    TT = 8

    key = jax.random.PRNGKey(0)
    k_x, k_wih, k_whh, k_b = jax.random.split(key, 4)
    xs = jax.random.normal(k_x, (B, T, D), dtype=jnp.float32)
    # Lengths sorted descending (pack_padded_sequence enforce_sorted=True),
    # max(xlens) == T as in the neural_sp call site.
    xlens = jnp.array([T, 13], dtype=jnp.int32)

    w_ih = 0.1 * jax.random.normal(k_wih, (D, 4 * H), dtype=jnp.float32)
    w_hh = 0.1 * jax.random.normal(k_whh, (H, 4 * H), dtype=jnp.float32)
    b = 0.1 * jax.random.normal(k_b, (4 * H,), dtype=jnp.float32)

    out = padding_forward(xs, xlens, w_ih, w_hh, b, time_block=TT)
    out = jax.block_until_ready(out)

    ref = _reference_padding_forward(xs, xlens, w_ih, w_hh, b)
    ref = jax.block_until_ready(ref)

    assert out.shape == (B, T, H)
    # pad_packed_sequence semantics: padded positions are exactly zero.
    pad_mask = (jnp.arange(T)[None, :] >= xlens[:, None])[:, :, None]
    assert bool(jnp.all(jnp.where(pad_mask, out == 0.0, True)))
    # LSTM recurrence matches the pure-JAX reference.
    assert bool(jnp.allclose(out, ref, atol=2e-2, rtol=2e-2))

    print("KERNEL_OK")
</pallas_src>

<mosaic_0001>
module attributes {stable_mosaic.version = 11 : i64} {
  func.func @_lstm_block_kernel(%arg0: i32, %arg1: memref<8x1xi32, #tpu.memory_space<vmem>>, %arg2: memref<8x8x32xf32, #tpu.memory_space<vmem>>, %arg3: memref<32x512xf32, #tpu.memory_space<vmem>>, %arg4: memref<128x512xf32, #tpu.memory_space<vmem>>, %arg5: memref<1x512xf32, #tpu.memory_space<vmem>>, %arg6: memref<8x8x128xf32, #tpu.memory_space<vmem>>, %arg7: memref<8x128xf32, #tpu.memory_space<vmem>>, %arg8: memref<8x128xf32, #tpu.memory_space<vmem>>, %arg9: memref<8x8x512xf32, #tpu.memory_space<vmem>>) attributes {dimension_semantics = [#tpu.dimension_semantics<arbitrary>], iteration_bounds = array<i64: 3>, scalar_prefetch = 0 : i64, scratch_operands = 3 : i64, tpu.core_type = #tpu.core_type<tc>, window_params = [{pipeline_mode = #tpu.pipeline_mode<synchronous>, transform_indices = @transform_0, window_bounds = array<i64: 8, 1>}, {transform_indices = @transform_1, window_bounds = array<i64: 8, 8, 32>}, {pipeline_mode = #tpu.pipeline_mode<synchronous>, transform_indices = @transform_2, window_bounds = array<i64: 32, 512>}, {pipeline_mode = #tpu.pipeline_mode<synchronous>, transform_indices = @transform_3, window_bounds = array<i64: 128, 512>}, {pipeline_mode = #tpu.pipeline_mode<synchronous>, transform_indices = @transform_4, window_bounds = array<i64: 1, 512>}, {transform_indices = @transform_5, window_bounds = array<i64: 8, 8, 128>}]} {
    %c0_i32 = arith.constant 0 : i32
    %0 = arith.cmpi eq, %arg0, %c0_i32 : i32
    %1 = arith.extui %0 : i1 to i32
    %c0_i32_0 = arith.constant 0 : i32
    %2 = arith.cmpi ne, %1, %c0_i32_0 : i32
    scf.if %2 {
      %cst_96 = arith.constant 0.000000e+00 : f32
      %387 = vector.broadcast %cst_96 : f32 to vector<8x128xf32>
      %c0_97 = arith.constant 0 : index
      %c0_98 = arith.constant 0 : index
      %388 = vector.load %arg7[%c0_97, %c0_98] : memref<8x128xf32, #tpu.memory_space<vmem>>, vector<8x128xf32>
      tpu.vector_store %arg7[%c0_97, %c0_98], %387 {strides = array<i32>} : memref<8x128xf32, #tpu.memory_space<vmem>>, vector<8x128xf32>,
      %cst_99 = arith.constant 0.000000e+00 : f32
      %389 = vector.broadcast %cst_99 : f32 to vector<8x128xf32>
      %c0_100 = arith.constant 0 : index
      %c0_101 = arith.constant 0 : index
      %390 = vector.load %arg8[%c0_100, %c0_101] : memref<8x128xf32, #tpu.memory_space<vmem>>, vector<8x128xf32>
      tpu.vector_store %arg8[%c0_100, %c0_101], %389 {strides = array<i32>} : memref<8x128xf32, #tpu.memory_space<vmem>>, vector<8x128xf32>,
    } else {
    }
    %c0 = arith.constant 0 : index
    %c0_1 = arith.constant 0 : index
    %c0_2 = arith.constant 0 : index
    %3 = vector.load %arg2[%c0, %c0_1, %c0_2] : memref<8x8x32xf32, #tpu.memory_space<vmem>>, vector<8x8x32xf32>
    %4 = vector.shape_cast %3 : vector<8x8x32xf32> to vector<64x32xf32>
    %c0_3 = arith.constant 0 : index
    %c0_4 = arith.constant 0 : index
    %5 = vector.load %arg3[%c0_3, %c0_4] : memref<32x512xf32, #tpu.memory_space<vmem>>, vector<32x512xf32>
    %cst = arith.constant dense<0.000000e+00> : vector<64x512xf32>
    %6 = tpu.matmul %4, %5, %cst {dimension_numbers = #tpu.dot_dimension_numbers<[1], [0], [0], [1], [0, 0, 1, 1], [], []>} : vector<64x32xf32>, vector<32x512xf32>, vector<64x512xf32> -> vector<64x512xf32>
    %c0_5 = arith.constant 0 : index
    %c0_6 = arith.constant 0 : index
    %7 = vector.load %arg5[%c0_5, %c0_6] : memref<1x512xf32, #tpu.memory_space<vmem>>, vector<1x512xf32>
    %8 = vector.broadcast %7 : vector<1x512xf32> to vector<64x512xf32>
    %9 = arith.addf %6, %8 : vector<64x512xf32>
    %10 = vector.shape_cast %9 : vector<64x512xf32> to vector<8x8x512xf32>
    %c0_7 = arith.constant 0 : index
    %c0_8 = arith.constant 0 : index
    %c0_9 = arith.constant 0 : index
    %11 = vector.load %arg9[%c0_7, %c0_8, %c0_9] : memref<8x8x512xf32, #tpu.memory_space<vmem>>, vector<8x8x512xf32>
    tpu.vector_store %arg9[%c0_7, %c0_8, %c0_9], %10 {strides = array<i32>} : memref<8x8x512xf32, #tpu.memory_space<vmem>>, vector<8x8x512xf32>,
    %c0_10 = arith.constant 0 : index
    %c0_11 = arith.constant 0 : index
    %12 = vector.load %arg4[%c0_10, %c0_11] : memref<128x512xf32, #tpu.memory_space<vmem>>, vector<128x512xf32>
    %c0_12 = arith.constant 0 : index
    %c0_13 = arith.constant 0 : index
    %13 = vector.load %arg1[%c0_12, %c0_13] : memref<8x1xi32, #tpu.memory_space<vmem>>, vector<8x1xi32>
    %c8_i32 = arith.constant 8 : i32
    %14 = arith.muli %arg0, %c8_i32 : i32
    %c0_14 = arith.constant 0 : index
    %c0_15 = arith.constant 0 : index
    %15 = vector.load %arg7[%c0_14, %c0_15] : memref<8x128xf32, #tpu.memory_space<vmem>>, vector<8x128xf32>
    %c0_16 = arith.constant 0 : index
    %c0_17 = arith.constant 0 : index
    %16 = vector.load %arg8[%c0_16, %c0_17] : memref<8x128xf32, #tpu.memory_space<vmem>>, vector<8x128xf32>
    %c0_i32_18 = arith.constant 0 : i32
    %c0_19 = arith.constant 0 : index
    %17 = arith.index_cast %c0_i32_18 : i32 to index
    %c0_20 = arith.constant 0 : index
    %18 = vector.load %arg9[%c0_19, %17, %c0_20] : memref<8x8x512xf32, #tpu.memory_space<vmem>>, vector<8x1x512xf32>
    %19 = vector.shape_cast %18 : vector<8x1x512xf32> to vector<8x512xf32>
    %cst_21 = arith.constant dense<0.000000e+00> : vector<8x512xf32>
    %20 = tpu.matmul %15, %12, %cst_21 {dimension_numbers = #tpu.dot_dimension_numbers<[1], [0], [0], [1], [0, 0, 1, 1], [], []>} : vector<8x128xf32>, vector<128x512xf32>, vector<8x512xf32> -> vector<8x512xf32>
    %21 = arith.addf %19, %20 : vector<8x512xf32>
    %22 = vector.extract_strided_slice %21 {offsets = [0, 0], sizes = [8, 128], strides = [1, 1]} : vector<8x512xf32> to vector<8x128xf32>
    %23 = arith.negf %22 : vector<8x128xf32>
    %24 = math.exp %23 : vector<8x128xf32>
    %cst_22 = arith.constant 1.000000e+00 : f32
    %25 = vector.broadcast %cst_22 : f32 to vector<8x128xf32>
    %26 = arith.addf %25, %24 : vector<8x128xf32>
    %27 = arith.divf %25, %26 : vector<8x128xf32>
    %28 = vector.extract_strided_slice %21 {offsets = [0, 128], sizes = [8, 128], strides = [1, 1]} : vector<8x512xf32> to vector<8x128xf32>
    %29 = arith.negf %28 : vector<8x128xf32>
    %30 = math.exp %29 : vector<8x128xf32>
    %cst_23 = arith.constant 1.000000e+00 : f32
    %31 = vector.broadcast %cst_23 : f32 to vector<8x128xf32>
    %32 = arith.addf %31, %30 : vector<8x128xf32>
    %33 = arith.divf %31, %32 : vector<8x128xf32>
    %34 = vector.extract_strided_slice %21 {offsets = [0, 256], sizes = [8, 128], strides = [1, 1]} : vector<8x512xf32> to vector<8x128xf32>
    %35 = math.tanh %34 : vector<8x128xf32>
    %36 = vector.extract_strided_slice %21 {offsets = [0, 384], sizes = [8, 128], strides = [1, 1]} : vector<8x512xf32> to vector<8x128xf32>
    %37 = arith.negf %36 : vector<8x128xf32>
    %38 = math.exp %37 : vector<8x128xf32>
    %cst_24 = arith.constant 1.000000e+00 : f32
    %39 = vector.broadcast %cst_24 : f32 to vector<8x128xf32>
    %40 = arith.addf %39, %38 : vector<8x128xf32>
    %41 = arith.divf %39, %40 : vector<8x128xf32>
    %42 = arith.mulf %33, %16 : vector<8x128xf32>
    %43 = arith.mulf %27, %35 : vector<8x128xf32>
    %44 = arith.addf %42, %43 : vector<8x128xf32>
    %45 = math.tanh %44 : vector<8x128xf32>
    %46 = arith.mulf %41, %45 : vector<8x128xf32>
    %47 = arith.addi %14, %c0_i32_18 : i32
    %48 = vector.broadcast %47 : i32 to vector<8x1xi32>
    %49 = arith.cmpi sgt, %13, %48 : vector<8x1xi32>
    %50 = vector.shape_cast %49 : vector<8x1xi1> to vector<8x1xi1>
    %51 = vector.broadcast %50 : vector<8x1xi1> to vector<8x128xi1>
    %52 = arith.select %51, %44, %16 : vector<8x128xi1>, vector<8x128xf32>
    %53 = vector.shape_cast %49 : vector<8x1xi1> to vector<8x1xi1>
    %54 = vector.broadcast %53 : vector<8x1xi1> to vector<8x128xi1>
    %55 = arith.select %54, %46, %15 : vector<8x128xi1>, vector<8x128xf32>
    %cst_25 = arith.constant 0.000000e+00 : f32
    %56 = vector.shape_cast %49 : vector<8x1xi1> to vector<8x1xi1>
    %57 = vector.broadcast %56 : vector<8x1xi1> to vector<8x128xi1>
    %58 = vector.broadcast %cst_25 : f32 to vector<8x128xf32>
    %59 = arith.select %57, %46, %58 : vector<8x128xi1>, vector<8x128xf32>
    %60 = vector.shape_cast %59 : vector<8x128xf32> to vector<8x1x128xf32>
    %c0_26 = arith.constant 0 : index
    %61 = arith.index_cast %c0_i32_18 : i32 to index
    %c0_27 = arith.constant 0 : index
    %62 = vector.load %arg6[%c0_26, %61, %c0_27] : memref<8x8x128xf32, #tpu.memory_space<vmem>>, vector<8x1x128xf32>
    tpu.vector_store %arg6[%c0_26, %61, %c0_27], %60 {strides = array<i32>} : memref<8x8x128xf32, #tpu.memory_space<vmem>>, vector<8x1x128xf32>,
    %c1_i32 = arith.constant 1 : i32
    %c0_28 = arith.constant 0 : index
    %63 = arith.index_cast %c1_i32 : i32 to index
    %c0_29 = arith.constant 0 : index
    %64 = vector.load %arg9[%c0_28, %63, %c0_29] : memref<8x8x512xf32, #tpu.memory_space<vmem>>, vector<8x1x512xf32>
    %65 = vector.shape_cast %64 : vector<8x1x512xf32> to vector<8x512xf32>
    %cst_30 = arith.constant dense<0.000000e+00> : vector<8x512xf32>
    %66 = tpu.matmul %55, %12, %cst_30 {dimension_numbers = #tpu.dot_dimension_numbers<[1], [0], [0], [1], [0, 0, 1, 1], [], []>} : vector<8x128xf32>, vector<128x512xf32>, vector<8x512xf32> -> vector<8x512xf32>
    %67 = arith.addf %65, %66 : vector<8x512xf32>
    %68 = vector.extract_strided_slice %67 {offsets = [0, 0], sizes = [8, 128], strides = [1, 1]} : vector<8x512xf32> to vector<8x128xf32>
    %69 = arith.negf %68 : vector<8x128xf32>
    %70 = math.exp %69 : vector<8x128xf32>
    %cst_31 = arith.constant 1.000000e+00 : f32
    %71 = vector.broadcast %cst_31 : f32 to vector<8x128xf32>
    %72 = arith.addf %71, %70 : vector<8x128xf32>
    %73 = arith.divf %71, %72 : vector<8x128xf32>
    %74 = vector.extract_strided_slice %67 {offsets = [0, 128], sizes = [8, 128], strides = [1, 1]} : vector<8x512xf32> to vector<8x128xf32>
    %75 = arith.negf %74 : vector<8x128xf32>
    %76 = math.exp %75 : vector<8x128xf32>
    %cst_32 = arith.constant 1.000000e+00 : f32
    %77 = vector.broadcast %cst_32 : f32 to vector<8x128xf32>
    %78 = arith.addf %77, %76 : vector<8x128xf32>
    %79 = arith.divf %77, %78 : vector<8x128xf32>
    %80 = vector.extract_strided_slice %67 {offsets = [0, 256], sizes = [8, 128], strides = [1, 1]} : vector<8x512xf32> to vector<8x128xf32>
    %81 = math.tanh %80 : vector<8x128xf32>
    %82 = vector.extract_strided_slice %67 {offsets = [0, 384], sizes = [8, 128], strides = [1, 1]} : vector<8x512xf32> to vector<8x128xf32>
    %83 = arith.negf %82 : vector<8x128xf32>
    %84 = math.exp %83 : vector<8x128xf32>
    %cst_33 = arith.constant 1.000000e+00 : f32
    %85 = vector.broadcast %cst_33 : f32 to vector<8x128xf32>
    %86 = arith.addf %85, %84 : vector<8x128xf32>
    %87 = arith.divf %85, %86 : vector<8x128xf32>
    %88 = arith.mulf %79, %52 : vector<8x128xf32>
    %89 = arith.mulf %73, %81 : vector<8x128xf32>
    %90 = arith.addf %88, %89 : vector<8x128xf32>
    %91 = math.tanh %90 : vector<8x128xf32>
    %92 = arith.mulf %87, %91 : vector<8x128xf32>
    %93 = arith.addi %14, %c1_i32 : i32
    %94 = vector.broadcast %93 : i32 to vector<8x1xi32>
    %95 = arith.cmpi sgt, %13, %94 : vector<8x1xi32>
    %96 = vector.shape_cast %95 : vector<8x1xi1> to vector<8x1xi1>
    %97 = vector.broadcast %96 : vector<8x1xi1> to vector<8x128xi1>
    %98 = arith.select %97, %90, %52 : vector<8x128xi1>, vector<8x128xf32>
    %99 = vector.shape_cast %95 : vector<8x1xi1> to vector<8x1xi1>
    %100 = vector.broadcast %99 : vector<8x1xi1> to vector<8x128xi1>
    %101 = arith.select %100, %92, %55 : vector<8x128xi1>, vector<8x128xf32>
    %cst_34 = arith.constant 0.000000e+00 : f32
    %102 = vector.shape_cast %95 : vector<8x1xi1> to vector<8x1xi1>
    %103 = vector.broadcast %102 : vector<8x1xi1> to vector<8x128xi1>
    %104 = vector.broadcast %cst_34 : f32 to vector<8x128xf32>
    %105 = arith.select %103, %92, %104 : vector<8x128xi1>, vector<8x128xf32>
    %106 = vector.shape_cast %105 : vector<8x128xf32> to vector<8x1x128xf32>
    %c0_35 = arith.constant 0 : index
    %107 = arith.index_cast %c1_i32 : i32 to index
    %c0_36 = arith.constant 0 : index
    %108 = vector.load %arg6[%c0_35, %107, %c0_36] : memref<8x8x128xf32, #tpu.memory_space<vmem>>, vector<8x1x128xf32>
    tpu.vector_store %arg6[%c0_35, %107, %c0_36], %106 {strides = array<i32>} : memref<8x8x128xf32, #tpu.memory_space<vmem>>, vector<8x1x128xf32>,
    %c2_i32 = arith.constant 2 : i32
    %c0_37 = arith.constant 0 : index
    %109 = arith.index_cast %c2_i32 : i32 to index
    %c0_38 = arith.constant 0 : index
    %110 = vector.load %arg9[%c0_37, %109, %c0_38] : memref<8x8x512xf32, #tpu.memory_space<vmem>>, vector<8x1x512xf32>
    %111 = vector.shape_cast %110 : vector<8x1x512xf32> to vector<8x512xf32>
    %cst_39 = arith.constant dense<0.000000e+00> : vector<8x512xf32>
    %112 = tpu.matmul %101, %12, %cst_39 {dimension_numbers = #tpu.dot_dimension_numbers<[1], [0], [0], [1], [0, 0, 1, 1], [], []>} : vector<8x128xf32>, vector<128x512xf32>, vector<8x512xf32> -> vector<8x512xf32>
    %113 = arith.addf %111, %112 : vector<8x512xf32>
    %114 = vector.extract_strided_slice %113 {offsets = [0, 0], sizes = [8, 128], strides = [1, 1]} : vector<8x512xf32> to vector<8x128xf32>
    %115 = arith.negf %114 : vector<8x128xf32>
    %116 = math.exp %115 : vector<8x128xf32>
    %cst_40 = arith.constant 1.000000e+00 : f32
    %117 = vector.broadcast %cst_40 : f32 to vector<8x128xf32>
    %118 = arith.addf %117, %116 : vector<8x128xf32>
    %119 = arith.divf %117, %118 : vector<8x128xf32>
    %120 = vector.extract_strided_slice %113 {offsets = [0, 128], sizes = [8, 128], strides = [1, 1]} : vector<8x512xf32> to vector<8x128xf32>
    %121 = arith.negf %120 : vector<8x128xf32>
    %122 = math.exp %121 : vector<8x128xf32>
    %cst_41 = arith.constant 1.000000e+00 : f32
    %123 = vector.broadcast %cst_41 : f32 to vector<8x128xf32>
    %124 = arith.addf %123, %122 : vector<8x128xf32>
    %125 = arith.divf %123, %124 : vector<8x128xf32>
    %126 = vector.extract_strided_slice %113 {offsets = [0, 256], sizes = [8, 128], strides = [1, 1]} : vector<8x512xf32> to vector<8x128xf32>
    %127 = math.tanh %126 : vector<8x128xf32>
    %128 = vector.extract_strided_slice %113 {offsets = [0, 384], sizes = [8, 128], strides = [1, 1]} : vector<8x512xf32> to vector<8x128xf32>
    %129 = arith.negf %128 : vector<8x128xf32>
    %130 = math.exp %129 : vector<8x128xf32>
    %cst_42 = arith.constant 1.000000e+00 : f32
    %131 = vector.broadcast %cst_42 : f32 to vector<8x128xf32>
    %132 = arith.addf %131, %130 : vector<8x128xf32>
    %133 = arith.divf %131, %132 : vector<8x128xf32>
    %134 = arith.mulf %125, %98 : vector<8x128xf32>
    %135 = arith.mulf %119, %127 : vector<8x128xf32>
    %136 = arith.addf %134, %135 : vector<8x128xf32>
    %137 = math.tanh %136 : vector<8x128xf32>
    %138 = arith.mulf %133, %137 : vector<8x128xf32>
    %139 = arith.addi %14, %c2_i32 : i32
    %140 = vector.broadcast %139 : i32 to vector<8x1xi32>
    %141 = arith.cmpi sgt, %13, %140 : vector<8x1xi32>
    %142 = vector.shape_cast %141 : vector<8x1xi1> to vector<8x1xi1>
    %143 = vector.broadcast %142 : vector<8x1xi1> to vector<8x128xi1>
    %144 = arith.select %143, %136, %98 : vector<8x128xi1>, vector<8x128xf32>
    %145 = vector.shape_cast %141 : vector<8x1xi1> to vector<8x1xi1>
    %146 = vector.broadcast %145 : vector<8x1xi1> to vector<8x128xi1>
    %147 = arith.select %146, %138, %101 : vector<8x128xi1>, vector<8x128xf32>
    %cst_43 = arith.constant 0.000000e+00 : f32
    %148 = vector.shape_cast %141 : vector<8x1xi1> to vector<8x1xi1>
    %149 = vector.broadcast %148 : vector<8x1xi1> to vector<8x128xi1>
    %150 = vector.broadcast %cst_43 : f32 to vector<8x128xf32>
    %151 = arith.select %149, %138, %150 : vector<8x128xi1>, vector<8x128xf32>
    %152 = vector.shape_cast %151 : vector<8x128xf32> to vector<8x1x128xf32>
    %c0_44 = arith.constant 0 : index
    %153 = arith.index_cast %c2_i32 : i32 to index
    %c0_45 = arith.constant 0 : index
    %154 = vector.load %arg6[%c0_44, %153, %c0_45] : memref<8x8x128xf32, #tpu.memory_space<vmem>>, vector<8x1x128xf32>
    tpu.vector_store %arg6[%c0_44, %153, %c0_45], %152 {strides = array<i32>} : memref<8x8x128xf32, #tpu.memory_space<vmem>>, vector<8x1x128xf32>,
    %c3_i32 = arith.constant 3 : i32
    %c0_46 = arith.constant 0 : index
    %155 = arith.index_cast %c3_i32 : i32 to index
    %c0_47 = arith.constant 0 : index
    %156 = vector.load %arg9[%c0_46, %155, %c0_47] : memref<8x8x512xf32, #tpu.memory_space<vmem>>, vector<8x1x512xf32>
    %157 = vector.shape_cast %156 : vector<8x1x512xf32> to vector<8x512xf32>
    %cst_48 = arith.constant dense<0.000000e+00> : vector<8x512xf32>
    %158 = tpu.matmul %147, %12, %cst_48 {dimension_numbers = #tpu.dot_dimension_numbers<[1], [0], [0], [1], [0, 0, 1, 1], [], []>} : vector<8x128xf32>, vector<128x512xf32>, vector<8x512xf32> -> vector<8x512xf32>
    %159 = arith.addf %157, %158 : vector<8x512xf32>
    %160 = vector.extract_strided_slice %159 {offsets = [0, 0], sizes = [8, 128], strides = [1, 1]} : vector<8x512xf32> to vector<8x128xf32>
    %161 = arith.negf %160 : vector<8x128xf32>
    %162 = math.exp %161 : vector<8x128xf32>
    %cst_49 = arith.constant 1.000000e+00 : f32
    %163 = vector.broadcast %cst_49 : f32 to vector<8x128xf32>
    %164 = arith.addf %163, %162 : vector<8x128xf32>
    %165 = arith.divf %163, %164 : vector<8x128xf32>
    %166 = vector.extract_strided_slice %159 {offsets = [0, 128], sizes = [8, 128], strides = [1, 1]} : vector<8x512xf32> to vector<8x128xf32>
    %167 = arith.negf %166 : vector<8x128xf32>
    %168 = math.exp %167 : vector<8x128xf32>
    %cst_50 = arith.constant 1.000000e+00 : f32
    %169 = vector.broadcast %cst_50 : f32 to vector<8x128xf32>
    %170 = arith.addf %169, %168 : vector<8x128xf32>
    %171 = arith.divf %169, %170 : vector<8x128xf32>
    %172 = vector.extract_strided_slice %159 {offsets = [0, 256], sizes = [8, 128], strides = [1, 1]} : vector<8x512xf32> to vector<8x128xf32>
    %173 = math.tanh %172 : vector<8x128xf32>
    %174 = vector.extract_strided_slice %159 {offsets = [0, 384], sizes = [8, 128], strides = [1, 1]} : vector<8x512xf32> to vector<8x128xf32>
    %175 = arith.negf %174 : vector<8x128xf32>
    %176 = math.exp %175 : vector<8x128xf32>
    %cst_51 = arith.constant 1.000000e+00 : f32
    %177 = vector.broadcast %cst_51 : f32 to vector<8x128xf32>
    %178 = arith.addf %177, %176 : vector<8x128xf32>
    %179 = arith.divf %177, %178 : vector<8x128xf32>
    %180 = arith.mulf %171, %144 : vector<8x128xf32>
    %181 = arith.mulf %165, %173 : vector<8x128xf32>
    %182 = arith.addf %180, %181 : vector<8x128xf32>
    %183 = math.tanh %182 : vector<8x128xf32>
    %184 = arith.mulf %179, %183 : vector<8x128xf32>
    %185 = arith.addi %14, %c3_i32 : i32
    %186 = vector.broadcast %185 : i32 to vector<8x1xi32>
    %187 = arith.cmpi sgt, %13, %186 : vector<8x1xi32>
    %188 = vector.shape_cast %187 : vector<8x1xi1> to vector<8x1xi1>
    %189 = vector.broadcast %188 : vector<8x1xi1> to vector<8x128xi1>
    %190 = arith.select %189, %182, %144 : vector<8x128xi1>, vector<8x128xf32>
    %191 = vector.shape_cast %187 : vector<8x1xi1> to vector<8x1xi1>
    %192 = vector.broadcast %191 : vector<8x1xi1> to vector<8x128xi1>
    %193 = arith.select %192, %184, %147 : vector<8x128xi1>, vector<8x128xf32>
    %cst_52 = arith.constant 0.000000e+00 : f32
    %194 = vector.shape_cast %187 : vector<8x1xi1> to vector<8x1xi1>
    %195 = vector.broadcast %194 : vector<8x1xi1> to vector<8x128xi1>
    %196 = vector.broadcast %cst_52 : f32 to vector<8x128xf32>
    %197 = arith.select %195, %184, %196 : vector<8x128xi1>, vector<8x128xf32>
    %198 = vector.shape_cast %197 : vector<8x128xf32> to vector<8x1x128xf32>
    %c0_53 = arith.constant 0 : index
    %199 = arith.index_cast %c3_i32 : i32 to index
    %c0_54 = arith.constant 0 : index
    %200 = vector.load %arg6[%c0_53, %199, %c0_54] : memref<8x8x128xf32, #tpu.memory_space<vmem>>, vector<8x1x128xf32>
    tpu.vector_store %arg6[%c0_53, %199, %c0_54], %198 {strides = array<i32>} : memref<8x8x128xf32, #tpu.memory_space<vmem>>, vector<8x1x128xf32>,
    %c4_i32 = arith.constant 4 : i32
    %c0_55 = arith.constant 0 : index
    %201 = arith.index_cast %c4_i32 : i32 to index
    %c0_56 = arith.constant 0 : index
    %202 = vector.load %arg9[%c0_55, %201, %c0_56] : memref<8x8x512xf32, #tpu.memory_space<vmem>>, vector<8x1x512xf32>
    %203 = vector.shape_cast %202 : vector<8x1x512xf32> to vector<8x512xf32>
    %cst_57 = arith.constant dense<0.000000e+00> : vector<8x512xf32>
    %204 = tpu.matmul %193, %12, %cst_57 {dimension_numbers = #tpu.dot_dimension_numbers<[1], [0], [0], [1], [0, 0, 1, 1], [], []>} : vector<8x128xf32>, vector<128x512xf32>, vector<8x512xf32> -> vector<8x512xf32>
    %205 = arith.addf %203, %204 : vector<8x512xf32>
    %206 = vector.extract_strided_slice %205 {offsets = [0, 0], sizes = [8, 128], strides = [1, 1]} : vector<8x512xf32> to vector<8x128xf32>
    %207 = arith.negf %206 : vector<8x128xf32>
    %208 = math.exp %207 : vector<8x128xf32>
    %cst_58 = arith.constant 1.000000e+00 : f32
    %209 = vector.broadcast %cst_58 : f32 to vector<8x128xf32>
    %210 = arith.addf %209, %208 : vector<8x128xf32>
    %211 = arith.divf %209, %210 : vector<8x128xf32>
    %212 = vector.extract_strided_slice %205 {offsets = [0, 128], sizes = [8, 128], strides = [1, 1]} : vector<8x512xf32> to vector<8x128xf32>
    %213 = arith.negf %212 : vector<8x128xf32>
    %214 = math.exp %213 : vector<8x128xf32>
    %cst_59 = arith.constant 1.000000e+00 : f32
    %215 = vector.broadcast %cst_59 : f32 to vector<8x128xf32>
    %216 = arith.addf %215, %214 : vector<8x128xf32>
    %217 = arith.divf %215, %216 : vector<8x128xf32>
    %218 = vector.extract_strided_slice %205 {offsets = [0, 256], sizes = [8, 128], strides = [1, 1]} : vector<8x512xf32> to vector<8x128xf32>
    %219 = math.tanh %218 : vector<8x128xf32>
    %220 = vector.extract_strided_slice %205 {offsets = [0, 384], sizes = [8, 128], strides = [1, 1]} : vector<8x512xf32> to vector<8x128xf32>
    %221 = arith.negf %220 : vector<8x128xf32>
    %222 = math.exp %221 : vector<8x128xf32>
    %cst_60 = arith.constant 1.000000e+00 : f32
    %223 = vector.broadcast %cst_60 : f32 to vector<8x128xf32>
    %224 = arith.addf %223, %222 : vector<8x128xf32>
    %225 = arith.divf %223, %224 : vector<8x128xf32>
    %226 = arith.mulf %217, %190 : vector<8x128xf32>
    %227 = arith.mulf %211, %219 : vector<8x128xf32>
    %228 = arith.addf %226, %227 : vector<8x128xf32>
    %229 = math.tanh %228 : vector<8x128xf32>
    %230 = arith.mulf %225, %229 : vector<8x128xf32>
    %231 = arith.addi %14, %c4_i32 : i32
    %232 = vector.broadcast %231 : i32 to vector<8x1xi32>
    %233 = arith.cmpi sgt, %13, %232 : vector<8x1xi32>
    %234 = vector.shape_cast %233 : vector<8x1xi1> to vector<8x1xi1>
    %235 = vector.broadcast %234 : vector<8x1xi1> to vector<8x128xi1>
    %236 = arith.select %235, %228, %190 : vector<8x128xi1>, vector<8x128xf32>
    %237 = vector.shape_cast %233 : vector<8x1xi1> to vector<8x1xi1>
    %238 = vector.broadcast %237 : vector<8x1xi1> to vector<8x128xi1>
    %239 = arith.select %238, %230, %193 : vector<8x128xi1>, vector<8x128xf32>
    %cst_61 = arith.constant 0.000000e+00 : f32
    %240 = vector.shape_cast %233 : vector<8x1xi1> to vector<8x1xi1>
    %241 = vector.broadcast %240 : vector<8x1xi1> to vector<8x128xi1>
    %242 = vector.broadcast %cst_61 : f32 to vector<8x128xf32>
    %243 = arith.select %241, %230, %242 : vector<8x128xi1>, vector<8x128xf32>
    %244 = vector.shape_cast %243 : vector<8x128xf32> to vector<8x1x128xf32>
    %c0_62 = arith.constant 0 : index
    %245 = arith.index_cast %c4_i32 : i32 to index
    %c0_63 = arith.constant 0 : index
    %246 = vector.load %arg6[%c0_62, %245, %c0_63] : memref<8x8x128xf32, #tpu.memory_space<vmem>>, vector<8x1x128xf32>
    tpu.vector_store %arg6[%c0_62, %245, %c0_63], %244 {strides = array<i32>} : memref<8x8x128xf32, #tpu.memory_space<vmem>>, vector<8x1x128xf32>,
    %c5_i32 = arith.constant 5 : i32
    %c0_64 = arith.constant 0 : index
    %247 = arith.index_cast %c5_i32 : i32 to index
    %c0_65 = arith.constant 0 : index
    %248 = vector.load %arg9[%c0_64, %247, %c0_65] : memref<8x8x512xf32, #tpu.memory_space<vmem>>, vector<8x1x512xf32>
    %249 = vector.shape_cast %248 : vector<8x1x512xf32> to vector<8x512xf32>
    %cst_66 = arith.constant dense<0.000000e+00> : vector<8x512xf32>
    %250 = tpu.matmul %239, %12, %cst_66 {dimension_numbers = #tpu.dot_dimension_numbers<[1], [0], [0], [1], [0, 0, 1, 1], [], []>} : vector<8x128xf32>, vector<128x512xf32>, vector<8x512xf32> -> vector<8x512xf32>
    %251 = arith.addf %249, %250 : vector<8x512xf32>
    %252 = vector.extract_strided_slice %251 {offsets = [0, 0], sizes = [8, 128], strides = [1, 1]} : vector<8x512xf32> to vector<8x128xf32>
    %253 = arith.negf %252 : vector<8x128xf32>
    %254 = math.exp %253 : vector<8x128xf32>
    %cst_67 = arith.constant 1.000000e+00 : f32
    %255 = vector.broadcast %cst_67 : f32 to vector<8x128xf32>
    %256 = arith.addf %255, %254 : vector<8x128xf32>
    %257 = arith.divf %255, %256 : vector<8x128xf32>
    %258 = vector.extract_strided_slice %251 {offsets = [0, 128], sizes = [8, 128], strides = [1, 1]} : vector<8x512xf32> to vector<8x128xf32>
    %259 = arith.negf %258 : vector<8x128xf32>
    %260 = math.exp %259 : vector<8x128xf32>
    %cst_68 = arith.constant 1.000000e+00 : f32
    %261 = vector.broadcast %cst_68 : f32 to vector<8x128xf32>
    %262 = arith.addf %261, %260 : vector<8x128xf32>
    %263 = arith.divf %261, %262 : vector<8x128xf32>
    %264 = vector.extract_strided_slice %251 {offsets = [0, 256], sizes = [8, 128], strides = [1, 1]} : vector<8x512xf32> to vector<8x128xf32>
    %265 = math.tanh %264 : vector<8x128xf32>
    %266 = vector.extract_strided_slice %251 {offsets = [0, 384], sizes = [8, 128], strides = [1, 1]} : vector<8x512xf32> to vector<8x128xf32>
    %267 = arith.negf %266 : vector<8x128xf32>
    %268 = math.exp %267 : vector<8x128xf32>
    %cst_69 = arith.constant 1.000000e+00 : f32
    %269 = vector.broadcast %cst_69 : f32 to vector<8x128xf32>
    %270 = arith.addf %269, %268 : vector<8x128xf32>
    %271 = arith.divf %269, %270 : vector<8x128xf32>
    %272 = arith.mulf %263, %236 : vector<8x128xf32>
    %273 = arith.mulf %257, %265 : vector<8x128xf32>
    %274 = arith.addf %272, %273 : vector<8x128xf32>
    %275 = math.tanh %274 : vector<8x128xf32>
    %276 = arith.mulf %271, %275 : vector<8x128xf32>
    %277 = arith.addi %14, %c5_i32 : i32
    %278 = vector.broadcast %277 : i32 to vector<8x1xi32>
    %279 = arith.cmpi sgt, %13, %278 : vector<8x1xi32>
    %280 = vector.shape_cast %279 : vector<8x1xi1> to vector<8x1xi1>
    %281 = vector.broadcast %280 : vector<8x1xi1> to vector<8x128xi1>
    %282 = arith.select %281, %274, %236 : vector<8x128xi1>, vector<8x128xf32>
    %283 = vector.shape_cast %279 : vector<8x1xi1> to vector<8x1xi1>
    %284 = vector.broadcast %283 : vector<8x1xi1> to vector<8x128xi1>
    %285 = arith.select %284, %276, %239 : vector<8x128xi1>, vector<8x128xf32>
    %cst_70 = arith.constant 0.000000e+00 : f32
    %286 = vector.shape_cast %279 : vector<8x1xi1> to vector<8x1xi1>
    %287 = vector.broadcast %286 : vector<8x1xi1> to vector<8x128xi1>
    %288 = vector.broadcast %cst_70 : f32 to vector<8x128xf32>
    %289 = arith.select %287, %276, %288 : vector<8x128xi1>, vector<8x128xf32>
    %290 = vector.shape_cast %289 : vector<8x128xf32> to vector<8x1x128xf32>
    %c0_71 = arith.constant 0 : index
    %291 = arith.index_cast %c5_i32 : i32 to index
    %c0_72 = arith.constant 0 : index
    %292 = vector.load %arg6[%c0_71, %291, %c0_72] : memref<8x8x128xf32, #tpu.memory_space<vmem>>, vector<8x1x128xf32>
    tpu.vector_store %arg6[%c0_71, %291, %c0_72], %290 {strides = array<i32>} : memref<8x8x128xf32, #tpu.memory_space<vmem>>, vector<8x1x128xf32>,
    %c6_i32 = arith.constant 6 : i32
    %c0_73 = arith.constant 0 : index
    %293 = arith.index_cast %c6_i32 : i32 to index
    %c0_74 = arith.constant 0 : index
    %294 = vector.load %arg9[%c0_73, %293, %c0_74] : memref<8x8x512xf32, #tpu.memory_space<vmem>>, vector<8x1x512xf32>
    %295 = vector.shape_cast %294 : vector<8x1x512xf32> to vector<8x512xf32>
    %cst_75 = arith.constant dense<0.000000e+00> : vector<8x512xf32>
    %296 = tpu.matmul %285, %12, %cst_75 {dimension_numbers = #tpu.dot_dimension_numbers<[1], [0], [0], [1], [0, 0, 1, 1], [], []>} : vector<8x128xf32>, vector<128x512xf32>, vector<8x512xf32> -> vector<8x512xf32>
    %297 = arith.addf %295, %296 : vector<8x512xf32>
    %298 = vector.extract_strided_slice %297 {offsets = [0, 0], sizes = [8, 128], strides = [1, 1]} : vector<8x512xf32> to vector<8x128xf32>
    %299 = arith.negf %298 : vector<8x128xf32>
    %300 = math.exp %299 : vector<8x128xf32>
    %cst_76 = arith.constant 1.000000e+00 : f32
    %301 = vector.broadcast %cst_76 : f32 to vector<8x128xf32>
    %302 = arith.addf %301, %300 : vector<8x128xf32>
    %303 = arith.divf %301, %302 : vector<8x128xf32>
    %304 = vector.extract_strided_slice %297 {offsets = [0, 128], sizes = [8, 128], strides = [1, 1]} : vector<8x512xf32> to vector<8x128xf32>
    %305 = arith.negf %304 : vector<8x128xf32>
    %306 = math.exp %305 : vector<8x128xf32>
    %cst_77 = arith.constant 1.000000e+00 : f32
    %307 = vector.broadcast %cst_77 : f32 to vector<8x128xf32>
    %308 = arith.addf %307, %306 : vector<8x128xf32>
    %309 = arith.divf %307, %308 : vector<8x128xf32>
    %310 = vector.extract_strided_slice %297 {offsets = [0, 256], sizes = [8, 128], strides = [1, 1]} : vector<8x512xf32> to vector<8x128xf32>
    %311 = math.tanh %310 : vector<8x128xf32>
    %312 = vector.extract_strided_slice %297 {offsets = [0, 384], sizes = [8, 128], strides = [1, 1]} : vector<8x512xf32> to vector<8x128xf32>
    %313 = arith.negf %312 : vector<8x128xf32>
    %314 = math.exp %313 : vector<8x128xf32>
    %cst_78 = arith.constant 1.000000e+00 : f32
    %315 = vector.broadcast %cst_78 : f32 to vector<8x128xf32>
    %316 = arith.addf %315, %314 : vector<8x128xf32>
    %317 = arith.divf %315, %316 : vector<8x128xf32>
    %318 = arith.mulf %309, %282 : vector<8x128xf32>
    %319 = arith.mulf %303, %311 : vector<8x128xf32>
    %320 = arith.addf %318, %319 : vector<8x128xf32>
    %321 = math.tanh %320 : vector<8x128xf32>
    %322 = arith.mulf %317, %321 : vector<8x128xf32>
    %323 = arith.addi %14, %c6_i32 : i32
    %324 = vector.broadcast %323 : i32 to vector<8x1xi32>
    %325 = arith.cmpi sgt, %13, %324 : vector<8x1xi32>
    %326 = vector.shape_cast %325 : vector<8x1xi1> to vector<8x1xi1>
    %327 = vector.broadcast %326 : vector<8x1xi1> to vector<8x128xi1>
    %328 = arith.select %327, %320, %282 : vector<8x128xi1>, vector<8x128xf32>
    %329 = vector.shape_cast %325 : vector<8x1xi1> to vector<8x1xi1>
    %330 = vector.broadcast %329 : vector<8x1xi1> to vector<8x128xi1>
    %331 = arith.select %330, %322, %285 : vector<8x128xi1>, vector<8x128xf32>
    %cst_79 = arith.constant 0.000000e+00 : f32
    %332 = vector.shape_cast %325 : vector<8x1xi1> to vector<8x1xi1>
    %333 = vector.broadcast %332 : vector<8x1xi1> to vector<8x128xi1>
    %334 = vector.broadcast %cst_79 : f32 to vector<8x128xf32>
    %335 = arith.select %333, %322, %334 : vector<8x128xi1>, vector<8x128xf32>
    %336 = vector.shape_cast %335 : vector<8x128xf32> to vector<8x1x128xf32>
    %c0_80 = arith.constant 0 : index
    %337 = arith.index_cast %c6_i32 : i32 to index
    %c0_81 = arith.constant 0 : index
    %338 = vector.load %arg6[%c0_80, %337, %c0_81] : memref<8x8x128xf32, #tpu.memory_space<vmem>>, vector<8x1x128xf32>
    tpu.vector_store %arg6[%c0_80, %337, %c0_81], %336 {strides = array<i32>} : memref<8x8x128xf32, #tpu.memory_space<vmem>>, vector<8x1x128xf32>,
    %c7_i32 = arith.constant 7 : i32
    %c0_82 = arith.constant 0 : index
    %339 = arith.index_cast %c7_i32 : i32 to index
    %c0_83 = arith.constant 0 : index
    %340 = vector.load %arg9[%c0_82, %339, %c0_83] : memref<8x8x512xf32, #tpu.memory_space<vmem>>, vector<8x1x512xf32>
    %341 = vector.shape_cast %340 : vector<8x1x512xf32> to vector<8x512xf32>
    %cst_84 = arith.constant dense<0.000000e+00> : vector<8x512xf32>
    %342 = tpu.matmul %331, %12, %cst_84 {dimension_numbers = #tpu.dot_dimension_numbers<[1], [0], [0], [1], [0, 0, 1, 1], [], []>} : vector<8x128xf32>, vector<128x512xf32>, vector<8x512xf32> -> vector<8x512xf32>
    %343 = arith.addf %341, %342 : vector<8x512xf32>
    %344 = vector.extract_strided_slice %343 {offsets = [0, 0], sizes = [8, 128], strides = [1, 1]} : vector<8x512xf32> to vector<8x128xf32>
    %345 = arith.negf %344 : vector<8x128xf32>
    %346 = math.exp %345 : vector<8x128xf32>
    %cst_85 = arith.constant 1.000000e+00 : f32
    %347 = vector.broadcast %cst_85 : f32 to vector<8x128xf32>
    %348 = arith.addf %347, %346 : vector<8x128xf32>
    %349 = arith.divf %347, %348 : vector<8x128xf32>
    %350 = vector.extract_strided_slice %343 {offsets = [0, 128], sizes = [8, 128], strides = [1, 1]} : vector<8x512xf32> to vector<8x128xf32>
    %351 = arith.negf %350 : vector<8x128xf32>
    %352 = math.exp %351 : vector<8x128xf32>
    %cst_86 = arith.constant 1.000000e+00 : f32
    %353 = vector.broadcast %cst_86 : f32 to vector<8x128xf32>
    %354 = arith.addf %353, %352 : vector<8x128xf32>
    %355 = arith.divf %353, %354 : vector<8x128xf32>
    %356 = vector.extract_strided_slice %343 {offsets = [0, 256], sizes = [8, 128], strides = [1, 1]} : vector<8x512xf32> to vector<8x128xf32>
    %357 = math.tanh %356 : vector<8x128xf32>
    %358 = vector.extract_strided_slice %343 {offsets = [0, 384], sizes = [8, 128], strides = [1, 1]} : vector<8x512xf32> to vector<8x128xf32>
    %359 = arith.negf %358 : vector<8x128xf32>
    %360 = math.exp %359 : vector<8x128xf32>
    %cst_87 = arith.constant 1.000000e+00 : f32
    %361 = vector.broadcast %cst_87 : f32 to vector<8x128xf32>
    %362 = arith.addf %361, %360 : vector<8x128xf32>
    %363 = arith.divf %361, %362 : vector<8x128xf32>
    %364 = arith.mulf %355, %328 : vector<8x128xf32>
    %365 = arith.mulf %349, %357 : vector<8x128xf32>
    %366 = arith.addf %364, %365 : vector<8x128xf32>
    %367 = math.tanh %366 : vector<8x128xf32>
    %368 = arith.mulf %363, %367 : vector<8x128xf32>
    %369 = arith.addi %14, %c7_i32 : i32
    %370 = vector.broadcast %369 : i32 to vector<8x1xi32>
    %371 = arith.cmpi sgt, %13, %370 : vector<8x1xi32>
    %372 = vector.shape_cast %371 : vector<8x1xi1> to vector<8x1xi1>
    %373 = vector.broadcast %372 : vector<8x1xi1> to vector<8x128xi1>
    %374 = arith.select %373, %366, %328 : vector<8x128xi1>, vector<8x128xf32>
    %375 = vector.shape_cast %371 : vector<8x1xi1> to vector<8x1xi1>
    %376 = vector.broadcast %375 : vector<8x1xi1> to vector<8x128xi1>
    %377 = arith.select %376, %368, %331 : vector<8x128xi1>, vector<8x128xf32>
    %cst_88 = arith.constant 0.000000e+00 : f32
    %378 = vector.shape_cast %371 : vector<8x1xi1> to vector<8x1xi1>
    %379 = vector.broadcast %378 : vector<8x1xi1> to vector<8x128xi1>
    %380 = vector.broadcast %cst_88 : f32 to vector<8x128xf32>
    %381 = arith.select %379, %368, %380 : vector<8x128xi1>, vector<8x128xf32>
    %382 = vector.shape_cast %381 : vector<8x128xf32> to vector<8x1x128xf32>
    %c0_89 = arith.constant 0 : index
    %383 = arith.index_cast %c7_i32 : i32 to index
    %c0_90 = arith.constant 0 : index
    %384 = vector.load %arg6[%c0_89, %383, %c0_90] : memref<8x8x128xf32, #tpu.memory_space<vmem>>, vector<8x1x128xf32>
    tpu.vector_store %arg6[%c0_89, %383, %c0_90], %382 {strides = array<i32>} : memref<8x8x128xf32, #tpu.memory_space<vmem>>, vector<8x1x128xf32>,
    %c8_i32_91 = arith.constant 8 : i32
    %c0_92 = arith.constant 0 : index
    %c0_93 = arith.constant 0 : index
    %385 = vector.load %arg7[%c0_92, %c0_93] : memref<8x128xf32, #tpu.memory_space<vmem>>, vector<8x128xf32>
    tpu.vector_store %arg7[%c0_92, %c0_93], %377 {strides = array<i32>} : memref<8x128xf32, #tpu.memory_space<vmem>>, vector<8x128xf32>,
    %c0_94 = arith.constant 0 : index
    %c0_95 = arith.constant 0 : index
    %386 = vector.load %arg8[%c0_94, %c0_95] : memref<8x128xf32, #tpu.memory_space<vmem>>, vector<8x128xf32>
    tpu.vector_store %arg8[%c0_94, %c0_95], %374 {strides = array<i32>} : memref<8x128xf32, #tpu.memory_space<vmem>>, vector<8x128xf32>,
    return
  }
  func.func @transform_0(%arg0: i32) -> (i32, i32) {
    %c0_i32 = arith.constant 0 : i32
    %c0_i32_0 = arith.constant 0 : i32
    %c0_i32_1 = arith.constant 0 : i32
    return %c0_i32, %c0_i32_0 : i32, i32
  }
  func.func @transform_1(%arg0: i32) -> (i32, i32, i32) {
    %c0_i32 = arith.constant 0 : i32
    %c0_i32_0 = arith.constant 0 : i32
    %c0_i32_1 = arith.constant 0 : i32
    return %c0_i32, %arg0, %c0_i32_0 : i32, i32, i32
  }
  func.func @transform_2(%arg0: i32) -> (i32, i32) {
    %c0_i32 = arith.constant 0 : i32
    %c0_i32_0 = arith.constant 0 : i32
    %c0_i32_1 = arith.constant 0 : i32
    return %c0_i32, %c0_i32_0 : i32, i32
  }
  func.func @transform_3(%arg0: i32) -> (i32, i32) {
    %c0_i32 = arith.constant 0 : i32
    %c0_i32_0 = arith.constant 0 : i32
    %c0_i32_1 = arith.constant 0 : i32
    return %c0_i32, %c0_i32_0 : i32, i32
  }
  func.func @transform_4(%arg0: i32) -> (i32, i32) {
    %c0_i32 = arith.constant 0 : i32
    %c0_i32_0 = arith.constant 0 : i32
    %c0_i32_1 = arith.constant 0 : i32
    return %c0_i32, %c0_i32_0 : i32, i32
  }
  func.func @transform_5(%arg0: i32) -> (i32, i32, i32) {
    %c0_i32 = arith.constant 0 : i32
    %c0_i32_0 = arith.constant 0 : i32
    %c0_i32_1 = arith.constant 0 : i32
    return %c0_i32, %arg0, %c0_i32_0 : i32, i32, i32
  }
}

</mosaic_0001>

<llo_original>
// kernel: tpu_custom_call.1
$region0: #{tpu_custom_call.1}
  #allocation0 [shape = 'u32[]', space=smem, size = 0x4, offset = 0x4, fixed_abs, tag = 'smem constant byte address 0x4 - core index']
  #allocation1 [shape = 'u32[144,128]{1,0:T(1,128)}', space=vmem, size = 0x12000, scoped, tag = 'internal scratch']
  #allocation2 [shape = 'f32[8,128]{1,0:T(8,128)}', space=vmem, size = 0x1000, scoped, tag = 'scratch operand']
  #allocation3 [shape = 'f32[8,128]{1,0:T(8,128)}', space=vmem, size = 0x1000, scoped, tag = 'scratch operand']
  #allocation4 [shape = 'f32[8,8,512]{2,1,0:T(8,128)}', space=vmem, size = 0x20000, scoped, tag = 'scratch operand']
  %s0 = inlined_call_operand.vmem [shape: s32[8,1], index: 0, kind: input, shape index: {}]
  %s1 = inlined_call_operand.hbm [shape: f32[8,24,32], index: 1, kind: input, shape index: {}]
  %s2 = inlined_call_operand.hbm [shape: f32[32,512], index: 2, kind: input, shape index: {}]
  %s3 = inlined_call_operand.hbm [shape: f32[128,512], index: 3, kind: input, shape index: {}]
  %s4 = inlined_call_operand.vmem [shape: f32[1,512], index: 4, kind: input, shape index: {}]
  %s5 = inlined_call_operand.hbm [shape: f32[8,24,128], index: 5, kind: output, shape index: {}]
  %s6 = sld [smem:[#allocation0]]
  $region69: #{tpu_custom_call.1} parent=0
    _
  %s8 = ssub.s32 1, %s6
  %s9 = scalar_select 0, %s8, %s6
  $region1: #{tpu_custom_call.1} parent=0
    #allocation5 [shape = 'u8[65536]{0}', space=vmem, size = 0x10000, scoped, tag = 'input window, operand 1']
    #allocation6 [shape = 's32[2]{0}', space=sflag, size = 0x8, scoped, tag = 'scoped memory for tpu_custom_call.1']
    #allocation7 [shape = 's32[2]{0}', space=sflag, size = 0x8, scoped, tag = 'scoped memory for tpu_custom_call.1']
    #allocation8 [shape = 'u8[65536]{0}', space=vmem, size = 0x10000, scoped, tag = 'input window, operand 2, single buffered']
    #allocation9 [shape = 's32[1]{0}', space=sflag, size = 0x4, scoped, tag = 'scoped memory for tpu_custom_call.1']
    #allocation10 [shape = 'u8[262144]{0}', space=vmem, size = 0x40000, scoped, tag = 'input window, operand 3, single buffered']
    #allocation11 [shape = 'u8[65536]{0}', space=vmem, size = 0x10000, scoped, tag = 'output window, operand 0']
    %10 = vsyncpa [#allocation6], 0
    %s11 = scalar_lea.sflag [#allocation6], 1
    %12 = vsyncpa %s11, 0
    %13 = vsyncpa [#allocation9], 0
    %14 = vsyncpa [#allocation7], 0
    %s15 = scalar_lea.sflag [#allocation7], 1
    %16 = vsyncpa %s15, 0
    loop: start=0, step=1, limit=5
    $region2: #{tpu_custom_call.1} parent=1 // loop_pre_header
      _
    $region3: #{tpu_custom_call.1} parent=1 // loop_header
      %s18 = sphi 0, %s22
      %p19 = scmp.ge.s32.totalorder %s18, 5
      %s26 = sphi 0, %s26
      %s28 = sphi 0, %s26
      %s29 = sphi 0, %s28
      %s43 = sphi 0, %s29
      %s49 = sphi 0, %s51
      %s52 = sphi 0, %s49
      %s53 = sphi 0, %s52
      %s69 = sphi 0, %s53
      %s73 = sphi 0, %s73
      %s75 = sphi 0, %s73
      %s76 = sphi 0, %s75
      %s90 = sphi 0, %s76
      %s94 = sphi 0, %s94
      %s96 = sphi 0, %s94
      %s97 = sphi 0, %s96
      %s111 = sphi 0, %s97
      %s115 = sphi 0, %s115
      %s117 = sphi 0, %s115
      %s118 = sphi 0, %s117
      %s132 = sphi 0, %s118
      %s138 = sphi 0, %s140
      %s141 = sphi 0, %s138
      %s142 = sphi 0, %s141
      %s158 = sphi 0, %s142
    $region4: #{tpu_custom_call.1} parent=1 // loop_header_branch
      %21 = sbr.rel (%p19) target = $region8
    $region5: #{tpu_custom_call.1} parent=1 // loop_body
      %s23 = ssub.s32 %s18, 1
      %s24 = ssub.s32 %s18, 2
      %s25 = sadd.s32 %s18, 1
      %s27 = sadd.s32 %s26, 1
      %p30 = scmp.eq.s32.totalorder %s18, 2
      %p31 = scmp.ne.s32.totalorder %s26, %s28
      %p32 = scmp.eq.s32.totalorder %s18, 0
      %p33 = por %p31, %p32
      %p34 = scmp.ne.s32.totalorder %s26, %s28
      %p35 = scmp.eq.s32.totalorder %s23, 2
      %p36 = por %p34, %p35
      %p37 = scmp.ne.s32.totalorder %s28, %s29
      %p38 = scmp.eq.s32.totalorder %s23, 0
      %p39 = por %p37, %p38
      %p40 = scmp.ne.s32.totalorder %s28, %s29
      %p41 = scmp.eq.s32.totalorder %s24, 2
      %p42 = por %p40, %p41
      %p44 = scmp.ne.s32.totalorder %s29, %s43
      %p45 = scmp.eq.s32.totalorder %s24, 0
      %p46 = por %p44, %p45
      %s47 = ssub.s32 %s18, %s25
      %p48 = scmp.eq.s32.totalorder %s47, 0
      %s50 = sadd.s32 %s49, 1
      %s51 = scalar_select %p48, %s49, %s50
      %p54 = pneg %p48
      %p55 = scmp.eq.s32.totalorder %s18, 2
      %p56 = por %p54, %p55
      %p57 = scmp.ne.s32.totalorder %s49, %s52
      %p58 = scmp.eq.s32.totalorder %s18, 0
      %p59 = por %p57, %p58
      %p60 = scmp.ne.s32.totalorder %s49, %s52
      %p61 = scmp.eq.s32.totalorder %s23, 2
      %p62 = por %p60, %p61
      %p63 = scmp.ne.s32.totalorder %s52, %s53
      %p64 = scmp.eq.s32.totalorder %s23, 0
      %p65 = por %p63, %p64
      %p66 = scmp.ne.s32.totalorder %s52, %s53
      %p67 = scmp.eq.s32.totalorder %s24, 2
      %p68 = por %p66, %p67
      %p70 = scmp.ne.s32.totalorder %s53, %s69
      %p71 = scmp.eq.s32.totalorder %s24, 0
      %p72 = por %p70, %p71
      %s74 = sadd.s32 %s73, 1
      %p77 = scmp.eq.s32.totalorder %s18, 2
      %p78 = scmp.ne.s32.totalorder %s73, %s75
      %p79 = scmp.eq.s32.totalorder %s18, 0
      %p80 = por %p78, %p79
      %p81 = scmp.ne.s32.totalorder %s73, %s75
      %p82 = scmp.eq.s32.totalorder %s23, 2
      %p83 = por %p81, %p82
      %p84 = scmp.ne.s32.totalorder %s75, %s76
      %p85 = scmp.eq.s32.totalorder %s23, 0
      %p86 = por %p84, %p85
      %p87 = scmp.ne.s32.totalorder %s75, %s76
      %p88 = scmp.eq.s32.totalorder %s24, 2
      %p89 = por %p87, %p88
      %p91 = scmp.ne.s32.totalorder %s76, %s90
      %p92 = scmp.eq.s32.totalorder %s24, 0
      %p93 = por %p91, %p92
      %s95 = sadd.s32 %s94, 1
      %p98 = scmp.eq.s32.totalorder %s18, 2
      %p99 = scmp.ne.s32.totalorder %s94, %s96
      %p100 = scmp.eq.s32.totalorder %s18, 0
      %p101 = por %p99, %p100
      %p102 = scmp.ne.s32.totalorder %s94, %s96
      %p103 = scmp.eq.s32.totalorder %s23, 2
      %p104 = por %p102, %p103
      %p105 = scmp.ne.s32.totalorder %s96, %s97
      %p106 = scmp.eq.s32.totalorder %s23, 0
      %p107 = por %p105, %p106
      %p108 = scmp.ne.s32.totalorder %s96, %s97
      %p109 = scmp.eq.s32.totalorder %s24, 2
      %p110 = por %p108, %p109
      %p112 = scmp.ne.s32.totalorder %s97, %s111
      %p113 = scmp.eq.s32.totalorder %s24, 0
      %p114 = por %p112, %p113
      %s116 = sadd.s32 %s115, 1
      %p119 = scmp.eq.s32.totalorder %s18, 2
      %p120 = scmp.ne.s32.totalorder %s115, %s117
      %p121 = scmp.eq.s32.totalorder %s18, 0
      %p122 = por %p120, %p121
      %p123 = scmp.ne.s32.totalorder %s115, %s117
      %p124 = scmp.eq.s32.totalorder %s23, 2
      %p125 = por %p123, %p124
      %p126 = scmp.ne.s32.totalorder %s117, %s118
      %p127 = scmp.eq.s32.totalorder %s23, 0
      %p128 = por %p126, %p127
      %p129 = scmp.ne.s32.totalorder %s117, %s118
      %p130 = scmp.eq.s32.totalorder %s24, 2
      %p131 = por %p129, %p130
      %p133 = scmp.ne.s32.totalorder %s118, %s132
      %p134 = scmp.eq.s32.totalorder %s24, 0
      %p135 = por %p133, %p134
      %s136 = ssub.s32 %s18, %s25
      %p137 = scmp.eq.s32.totalorder %s136, 0
      %s139 = sadd.s32 %s138, 1
      %s140 = scalar_select %p137, %s138, %s139
      %p143 = pneg %p137
      %p144 = scmp.eq.s32.totalorder %s18, 2
      %p145 = por %p143, %p144
      %p146 = scmp.ne.s32.totalorder %s138, %s141
      %p147 = scmp.eq.s32.totalorder %s18, 0
      %p148 = por %p146, %p147
      %p149 = scmp.ne.s32.totalorder %s138, %s141
      %p150 = scmp.eq.s32.totalorder %s23, 2
      %p151 = por %p149, %p150
      %p152 = scmp.ne.s32.totalorder %s141, %s142
      %p153 = scmp.eq.s32.totalorder %s23, 0
      %p154 = por %p152, %p153
      %p155 = scmp.ne.s32.totalorder %s141, %s142
      %p156 = scmp.eq.s32.totalorder %s24, 2
      %p157 = por %p155, %p156
      %p159 = scmp.ne.s32.totalorder %s142, %s158
      %p160 = scmp.eq.s32.totalorder %s24, 0
      %p161 = por %p159, %p160
      %p162 = scmp.le.s32.totalorder 1, %s18
      %p163 = scmp.lt.s32.totalorder %s18, 4
      %p164 = pnand %p162, %p163
      %p165 = pneg %p164
      // Predicated region
      $region9: #{tpu_custom_call.1} parent=5 // pred_check
        _
      $region10: #{tpu_custom_call.1} parent=5 // pred_check_branch
        %167 = sbr.rel (%p164) target = $region12
      $region11: #{tpu_custom_call.1} parent=5 // pred_region
        %s168 = ssub.s32 %s18, 1
        // Predicated region
        $region13: #{tpu_custom_call.1} parent=11 // pred_check
          %p169 = pneg %p39
        $region14: #{tpu_custom_call.1} parent=11 // pred_check_branch
          %171 = sbr.rel (%p169) target = $region16
        $region15: #{tpu_custom_call.1} parent=11 // pred_region
          _
        $region16: #{tpu_custom_call.1} parent=11 // pred_fallthru
          _
        // Predicated region
        $region17: #{tpu_custom_call.1} parent=11 // pred_check
          %p172 = pneg %p86
        $region18: #{tpu_custom_call.1} parent=11 // pred_check_branch
          %174 = sbr.rel (%p172) target = $region20
        $region19: #{tpu_custom_call.1} parent=11 // pred_region
          %s176 = ssub.s32 2048, 2048
          %177 = vsyncadd [#allocation9], %s176
          %s178 = sshll.u32 [#allocation8], 4
          %s179 = int_to_ptr.vmem [resolvable:$true] %s178
          %184 = dma.hbm_to_vmem [thread:$0]  %s2, 2048, %s179, [#allocation9], 512, 512, 32
        $region20: #{tpu_custom_call.1} parent=11 // pred_fallthru
          _
        // Predicated region
        $region21: #{tpu_custom_call.1} parent=11 // pred_check
          %p185 = pneg %p107
        $region22: #{tpu_custom_call.1} parent=11 // pred_check_branch
          %187 = sbr.rel (%p185) target = $region24
        $region23: #{tpu_custom_call.1} parent=11 // pred_region
          %s189 = ssub.s32 8192, 8192
          %190 = vsyncadd [#allocation9], %s189
          %s191 = sshll.u32 [#allocation10], 4
          %s192 = int_to_ptr.vmem [resolvable:$true] %s191
          %197 = dma.hbm_to_vmem [thread:$0]  %s3, 8192, %s192, [#allocation9], 512, 512, 32
        $region24: #{tpu_custom_call.1} parent=11 // pred_fallthru
          _
        // Predicated region
        $region25: #{tpu_custom_call.1} parent=11 // pred_check
          %p198 = pneg %p128
        $region26: #{tpu_custom_call.1} parent=11 // pred_check_branch
          %200 = sbr.rel (%p198) target = $region28
        $region27: #{tpu_custom_call.1} parent=11 // pred_region
          _
        $region28: #{tpu_custom_call.1} parent=11 // pred_fallthru
          _
      $region12: #{tpu_custom_call.1} parent=5 // pred_fallthru
        _
      %p201 = scmp.lt.s32.totalorder %s18, 3
      // Predicated region
      $region29: #{tpu_custom_call.1} parent=5 // pred_check
        %p202 = pneg %p201
      $region30: #{tpu_custom_call.1} parent=5 // pred_check_branch
        %204 = sbr.rel (%p202) target = $region32
      $region31: #{tpu_custom_call.1} parent=5 // pred_region
        // Predicated region
        $region33: #{tpu_custom_call.1} parent=31 // pred_check
          %p205 = pneg %p59
        $region34: #{tpu_custom_call.1} parent=31 // pred_check_branch
          %207 = sbr.rel (%p205) target = $region36
        $region35: #{tpu_custom_call.1} parent=31 // pred_region
          %s208 = sand.u32 %s49, 1
          %s209 = scalar_lea.sflag [#allocation6], %s208
          %s210 = sand.u32 %s49, 1
          %s211 = smul.addr %s210, 64
          %s212 = scalar_lea.vmem [#allocation5], %s211
          %s214 = ssub.s32 1024, 1024
          %215 = vsyncadd %s209, %s214
          %s216 = smul.addr %s18, 128
          %s217 = scalar_lea.hbm %s1, %s216
          %s218 = sshll.u32 %s212, 4
          %s219 = int_to_ptr.vmem [resolvable:$true] %s218
          %224 = dma.hbm_to_vmem [thread:$0]  %s217, 1024, %s219, %s209, 384, 128, 8
        $region36: #{tpu_custom_call.1} parent=31 // pred_fallthru
          _
      $region32: #{tpu_custom_call.1} parent=5 // pred_fallthru
        _
      %p225 = scmp.le.s32.totalorder 1, %s18
      %p226 = scmp.lt.s32.totalorder %s18, 4
      %p227 = pnand %p225, %p226
      %p228 = pneg %p227
      // Predicated region
      $region37: #{tpu_custom_call.1} parent=5 // pred_check
        _
      $region38: #{tpu_custom_call.1} parent=5 // pred_check_branch
        %230 = sbr.rel (%p227) target = $region40
      $region39: #{tpu_custom_call.1} parent=5 // pred_region
        %s231 = ssub.s32 %s18, 1
        %s232 = sand.u32 %s52, 1
        %s233 = scalar_lea.sflag [#allocation6], %s232
        %s234 = sand.u32 %s52, 1
        %s235 = smul.addr %s234, 64
        %s236 = scalar_lea.vmem [#allocation5], %s235
        // Predicated region
        $region41: #{tpu_custom_call.1} parent=39 // pred_check
          %p237 = pneg %p65
        $region42: #{tpu_custom_call.1} parent=39 // pred_check_branch
          %239 = sbr.rel (%p237) target = $region44
        $region43: #{tpu_custom_call.1} parent=39 // pred_region
          %240 = dma.done %s233, 1024
        $region44: #{tpu_custom_call.1} parent=39 // pred_fallthru
          _
        // Predicated region
        $region45: #{tpu_custom_call.1} parent=39 // pred_check
          %p241 = pneg %p86
        $region46: #{tpu_custom_call.1} parent=39 // pred_check_branch
          %243 = sbr.rel (%p241) target = $region48
        $region47: #{tpu_custom_call.1} parent=39 // pred_region
          %244 = dma.done [#allocation9], 2048
        $region48: #{tpu_custom_call.1} parent=39 // pred_fallthru
          _
        // Predicated region
        $region49: #{tpu_custom_call.1} parent=39 // pred_check
          %p245 = pneg %p107
        $region50: #{tpu_custom_call.1} parent=39 // pred_check_branch
          %247 = sbr.rel (%p245) target = $region52
        $region51: #{tpu_custom_call.1} parent=39 // pred_region
          %248 = dma.done [#allocation9], 8192
        $region52: #{tpu_custom_call.1} parent=39 // pred_fallthru
          _
        %p249 = pneg %p39
        %p250 = pneg %p36
        %s251 = sand.u32 %s52, 1
        %s252 = scalar_lea.sflag [#allocation6], %s251
        %s253 = sand.u32 %s52, 1
        %s254 = smul.addr %s253, 64
        %s255 = scalar_lea.vmem [#allocation5], %s254
        %p256 = pneg %p65
        %p257 = pneg %p62
        %p258 = pneg %p86
        %p259 = pneg %p83
        %p260 = pneg %p107
        %p261 = pneg %p104
        %p262 = pneg %p128
        %p263 = pneg %p125
        %p264 = pneg %p154
        %p265 = pneg %p151
        %s266 = sand.u32 %s141, 1
        %s267 = scalar_lea.sflag [#allocation7], %s266
        %s268 = sand.u32 %s141, 1
        %s269 = smul.addr %s268, 64
        %s270 = scalar_lea.vmem [#allocation11], %s269
        %p271 = scmp.eq.s32.totalorder %s23, 0
        // Predicated region
        $region53: #{tpu_custom_call.1} parent=39 // pred_check
          %p272 = pneg %p271
        $region54: #{tpu_custom_call.1} parent=39 // pred_check_branch
          %274 = sbr.rel (%p272) target = $region56
        $region55: #{tpu_custom_call.1} parent=39 // pred_region
          %275 = vst [vmem:[#allocation2] sm:$0xff] 0.0
          %276 = vst [vmem:[#allocation3] sm:$0xff] 0.0
        $region56: #{tpu_custom_call.1} parent=39 // pred_fallthru
          _
        %v277 = vld [vmem:[%s236] sm:$0xff]
        %v278 = vld [vmem:[%s236 + $0x8] sm:$0xff]
        %v279 = vld [vmem:[%s236 + $0x10] sm:$0xff]
        %v280 = vld [vmem:[%s236 + $0x18] sm:$0xff]
        %v281 = vld [vmem:[%s236 + $0x20] sm:$0xff]
        %v282 = vld [vmem:[%s236 + $0x28] sm:$0xff]
        %v283 = vld [vmem:[%s236 + $0x30] sm:$0xff]
        %v284 = vld [vmem:[%s236 + $0x38] sm:$0xff]
        %v285 = vld [vmem:[#allocation8] sm:$0xff]
        %v286 = vld [vmem:[#allocation8 + $0x8] sm:$0xff]
        %v287 = vld [vmem:[#allocation8 + $0x10] sm:$0xff]
        %v288 = vld [vmem:[#allocation8 + $0x18] sm:$0xff]
        %v289 = vld [vmem:[#allocation8 + $0x20] sm:$0xff]
        %v290 = vld [vmem:[#allocation8 + $0x28] sm:$0xff]
        %v291 = vld [vmem:[#allocation8 + $0x30] sm:$0xff]
        %v292 = vld [vmem:[#allocation8 + $0x38] sm:$0xff]
        %v293 = vld [vmem:[#allocation8 + $0x40] sm:$0xff]
        %v294 = vld [vmem:[#allocation8 + $0x48] sm:$0xff]
        %v295 = vld [vmem:[#allocation8 + $0x50] sm:$0xff]
        %v296 = vld [vmem:[#allocation8 + $0x58] sm:$0xff]
        %v297 = vld [vmem:[#allocation8 + $0x60] sm:$0xff]
        %v298 = vld [vmem:[#allocation8 + $0x68] sm:$0xff]
        %v299 = vld [vmem:[#allocation8 + $0x70] sm:$0xff]
        %v300 = vld [vmem:[#allocation8 + $0x78] sm:$0xff]
        %v301 = vld [vmem:[%s4] sm:$0xf]
        %v303 = vlaneseq
        %v304 = vshrl.u32 %v303, 7
        %v305 = vsub.s32 0, %v304
        %v306 = vrot.slane %v301, %v305
        %v307 = vlaneseq
        %v308 = vshrl.u32 %v307, 7
        %v309 = vsub.s32 1, %v308
        %v310 = vrot.slane %v301, %v309
        %v311 = vlaneseq
        %v312 = vshrl.u32 %v311, 7
        %v313 = vsub.s32 2, %v312
        %v314 = vrot.slane %v301, %v313
        %v315 = vlaneseq
        %v316 = vshrl.u32 %v315, 7
        %v317 = vsub.s32 3, %v316
        %v318 = vrot.slane %v301, %v317
        %vm323 = vcmask 261120
        %v325 = vsel %vm323, %v277, 0
        %v328 = vsel %vm323, %v278, 0
        %v331 = vsel %vm323, %v279, 0
        %v334 = vsel %vm323, %v280, 0
        %v337 = vsel %vm323, %v281, 0
        %v340 = vsel %vm323, %v282, 0
        %v343 = vsel %vm323, %v283, 0
        %v346 = vsel %vm323, %v284, 0
        %348 = vmatprep.subr.mxu0 %v286
        %349 = vmatpush1.msra.mxu0 %v285
        %350 = vmatprep.subr.mxu0 %v290
        %351 = vmatpush1.msra.mxu0 %v289
        %352 = vmatprep.subr.mxu0 %v294
        %353 = vmatpush1.msra.mxu0 %v293
        %354 = vmatprep.subr.mxu0 %v298
        %355 = vmatpush1.msra.mxu0 %v297
        %356 = vmatprep.subr.mxu0 0.0
        %357 = vmatpush1.msra.mxu0 0.0
        %358 = vmatprep.subr.mxu0 0.0
        %359 = vmatpush1.msra.mxu0 0.0
        %360 = vmatprep.subr.mxu0 0.0
        %361 = vmatpush1.msra.mxu0 0.0
        %362 = vmatprep.subr.mxu0 0.0
        %363 = vmatpush1.msra.mxu0 0.0
        %364 = vmatprep.subr.mxu0 0.0
        %365 = vmatpush1.msra.mxu0 0.0
        %366 = vmatprep.subr.mxu0 0.0
        %367 = vmatpush1.msra.mxu0 0.0
        %368 = vmatprep.subr.mxu0 0.0
        %369 = vmatpush1.msra.mxu0 0.0
        %370 = vmatprep.subr.mxu0 0.0
        %371 = vmatpush1.msra.mxu0 0.0
        %372 = vmatprep.subr.mxu0 0.0
        %373 = vmatpush1.msra.mxu0 0.0
        %374 = vmatprep.subr.mxu0 0.0
        %375 = vmatpush1.msra.mxu0 0.0
        %376 = vmatprep.subr.mxu0 0.0
        %377 = vmatpush1.msra.mxu0 0.0
        %378 = vmatprep.subr.mxu0 0.0
        %379 = vmatpush1.msra.mxu0 0.0
        %380 = vmatprep.subr.mxu0 0.0
        %381 = vmatpush1.msra.mxu0 0.0
        %382 = vmatprep.subr.mxu0 0.0
        %383 = vmatpush1.msra.mxu0 0.0
        %384 = vmatprep.subr.mxu0 0.0
        %385 = vmatpush1.msra.mxu0 0.0
        %386 = vmatprep.subr.mxu0 0.0
        %387 = vmatpush1.msra.mxu0 0.0
        %388 = vmatprep.subr.mxu0 0.0
        %389 = vmatpush1.msra.mxu0 0.0
        %390 = vmatprep.subr.mxu0 0.0
        %391 = vmatpush1.msra.mxu0 0.0
        %392 = vmatprep.subr.mxu0 0.0
        %393 = vmatpush1.msra.mxu0 0.0
        %394 = vmatprep.subr.mxu0 0.0
        %395 = vmatpush1.msra.mxu0 0.0
        %396 = vmatprep.subr.mxu0 0.0
        %397 = vmatpush1.msra.mxu0 0.0
        %398 = vmatprep.subr.mxu0 0.0
        %399 = vmatpush1.msra.mxu0 0.0
        %400 = vmatprep.subr.mxu0 0.0
        %401 = vmatpush1.msra.mxu0 0.0
        %402 = vmatprep.subr.mxu0 0.0
        %403 = vmatpush1.msra.mxu0 0.0
        %404 = vmatprep.subr.mxu0 0.0
        %405 = vmatpush1.msra.mxu0 0.0
        %406 = vmatprep.subr.mxu0 0.0
        %407 = vmatpush1.msra.mxu0 0.0
        %408 = vmatprep.subr.mxu0 0.0
        %409 = vmatpush1.msra.mxu0 0.0
        %410 = vmatprep.subr.mxu0 0.0
        %411 = vmatpush1.msra.mxu0 0.0
        %412 = vmatprep.mubr.f32.mxu0 0.0
        %413 = vmatmul.mubr.f32.gmra.mrb[0].mxu0 %v325
        %v414 = vpop.f32.mrb[0].mxu0
        %v415 = vadd.f32 %v306, %v414
        %v416 = vpop.f32.mrb[0].mxu0
        %v417 = vadd.f32 %v310, %v416
        %418 = vmatprep.mubr.f32.mxu0 0.0
        %419 = vmatmul.mubr.f32.gmra.mrb[0].mxu0 %v328
        %v420 = vpop.f32.mrb[0].mxu0
        %v421 = vadd.f32 %v306, %v420
        %v422 = vpop.f32.mrb[0].mxu0
        %v423 = vadd.f32 %v310, %v422
        %424 = vmatprep.mubr.f32.mxu0 0.0
        %425 = vmatmul.mubr.f32.gmra.mrb[0].mxu0 %v331
        %v426 = vpop.f32.mrb[0].mxu0
        %v427 = vadd.f32 %v306, %v426
        %v428 = vpop.f32.mrb[0].mxu0
        %v429 = vadd.f32 %v310, %v428
        %430 = vmatprep.mubr.f32.mxu0 0.0
        %431 = vmatmul.mubr.f32.gmra.mrb[0].mxu0 %v334
        %v432 = vpop.f32.mrb[0].mxu0
        %v433 = vadd.f32 %v306, %v432
        %v434 = vpop.f32.mrb[0].mxu0
        %v435 = vadd.f32 %v310, %v434
        %436 = vmatprep.mubr.f32.mxu0 0.0
        %437 = vmatmul.mubr.f32.gmra.mrb[0].mxu0 %v337
        %v438 = vpop.f32.mrb[0].mxu0
        %v439 = vadd.f32 %v306, %v438
        %v440 = vpop.f32.mrb[0].mxu0
        %v441 = vadd.f32 %v310, %v440
        %442 = vmatprep.mubr.f32.mxu0 0.0
        %443 = vmatmul.mubr.f32.gmra.mrb[0].mxu0 %v340
        %v444 = vpop.f32.mrb[0].mxu0
        %v445 = vadd.f32 %v306, %v444
        %v446 = vpop.f32.mrb[0].mxu0
        %v447 = vadd.f32 %v310, %v446
        %448 = vmatprep.mubr.f32.mxu0 0.0
        %449 = vmatmul.mubr.f32.gmra.mrb[0].mxu0 %v343
        %v450 = vpop.f32.mrb[0].mxu0
        %v451 = vadd.f32 %v306, %v450
        %v452 = vpop.f32.mrb[0].mxu0
        %v453 = vadd.f32 %v310, %v452
        %454 = vmatprep.mubr.f32.mxu0 0.0
        %455 = vmatmul.mubr.f32.gmra.mrb[0].mxu0 %v346
        %v456 = vpop.f32.mrb[0].mxu0
        %v457 = vadd.f32 %v306, %v456
        %v458 = vpop.f32.mrb[0].mxu0
        %v459 = vadd.f32 %v310, %v458
        %460 = vdwg.mxu0
        %461 = vmatprep.subr.mxu0 %v288
        %462 = vmatpush1.msra.mxu0 %v287
        %463 = vmatprep.subr.mxu0 %v292
        %464 = vmatpush1.msra.mxu0 %v291
        %465 = vmatprep.subr.mxu0 %v296
        %466 = vmatpush1.msra.mxu0 %v295
        %467 = vmatprep.subr.mxu0 %v300
        %468 = vmatpush1.msra.mxu0 %v299
        %469 = vmatprep.subr.mxu0 0.0
        %470 = vmatpush1.msra.mxu0 0.0
        %471 = vmatprep.subr.mxu0 0.0
        %472 = vmatpush1.msra.mxu0 0.0
        %473 = vmatprep.subr.mxu0 0.0
        %474 = vmatpush1.msra.mxu0 0.0
        %475 = vmatprep.subr.mxu0 0.0
        %476 = vmatpush1.msra.mxu0 0.0
        %477 = vmatprep.subr.mxu0 0.0
        %478 = vmatpush1.msra.mxu0 0.0
        %479 = vmatprep.subr.mxu0 0.0
        %480 = vmatpush1.msra.mxu0 0.0
        %481 = vmatprep.subr.mxu0 0.0
        %482 = vmatpush1.msra.mxu0 0.0
        %483 = vmatprep.subr.mxu0 0.0
        %484 = vmatpush1.msra.mxu0 0.0
        %485 = vmatprep.subr.mxu0 0.0
        %486 = vmatpush1.msra.mxu0 0.0
        %487 = vmatprep.subr.mxu0 0.0
        %488 = vmatpush1.msra.mxu0 0.0
        %489 = vmatprep.subr.mxu0 0.0
        %490 = vmatpush1.msra.mxu0 0.0
        %491 = vmatprep.subr.mxu0 0.0
        %492 = vmatpush1.msra.mxu0 0.0
        %493 = vmatprep.subr.mxu0 0.0
        %494 = vmatpush1.msra.mxu0 0.0
        %495 = vmatprep.subr.mxu0 0.0
        %496 = vmatpush1.msra.mxu0 0.0
        %497 = vmatprep.subr.mxu0 0.0
        %498 = vmatpush1.msra.mxu0 0.0
        %499 = vmatprep.subr.mxu0 0.0
        %500 = vmatpush1.msra.mxu0 0.0
        %501 = vmatprep.subr.mxu0 0.0
        %502 = vmatpush1.msra.mxu0 0.0
        %503 = vmatprep.subr.mxu0 0.0
        %504 = vmatpush1.msra.mxu0 0.0
        %505 = vmatprep.subr.mxu0 0.0
        %506 = vmatpush1.msra.mxu0 0.0
        %507 = vmatprep.subr.mxu0 0.0
        %508 = vmatpush1.msra.mxu0 0.0
        %509 = vmatprep.subr.mxu0 0.0
        %510 = vmatpush1.msra.mxu0 0.0
        %511 = vmatprep.subr.mxu0 0.0
        %512 = vmatpush1.msra.mxu0 0.0
        %513 = vmatprep.subr.mxu0 0.0
        %514 = vmatpush1.msra.mxu0 0.0
        %515 = vmatprep.subr.mxu0 0.0
        %516 = vmatpush1.msra.mxu0 0.0
        %517 = vmatprep.subr.mxu0 0.0
        %518 = vmatpush1.msra.mxu0 0.0
        %519 = vmatprep.subr.mxu0 0.0
        %520 = vmatpush1.msra.mxu0 0.0
        %521 = vmatprep.subr.mxu0 0.0
        %522 = vmatpush1.msra.mxu0 0.0
        %523 = vmatprep.subr.mxu0 0.0
        %524 = vmatpush1.msra.mxu0 0.0
        %525 = vmatprep.mubr.f32.mxu0 0.0
        %526 = vmatmul.mubr.f32.gmra.mrb[0].mxu0 %v325
        %v527 = vpop.f32.mrb[0].mxu0
        %v528 = vadd.f32 %v314, %v527
        %v529 = vpop.f32.mrb[0].mxu0
        %v530 = vadd.f32 %v318, %v529
        %531 = vmatprep.mubr.f32.mxu0 0.0
        %532 = vmatmul.mubr.f32.gmra.mrb[0].mxu0 %v328
        %v533 = vpop.f32.mrb[0].mxu0
        %v534 = vadd.f32 %v314, %v533
        %v535 = vpop.f32.mrb[0].mxu0
        %v536 = vadd.f32 %v318, %v535
        %537 = vmatprep.mubr.f32.mxu0 0.0
        %538 = vmatmul.mubr.f32.gmra.mrb[0].mxu0 %v331
        %v539 = vpop.f32.mrb[0].mxu0
        %v540 = vadd.f32 %v314, %v539
        %v541 = vpop.f32.mrb[0].mxu0
        %v542 = vadd.f32 %v318, %v541
        %543 = vmatprep.mubr.f32.mxu0 0.0
        %544 = vmatmul.mubr.f32.gmra.mrb[0].mxu0 %v334
        %v545 = vpop.f32.mrb[0].mxu0
        %v546 = vadd.f32 %v314, %v545
        %v547 = vpop.f32.mrb[0].mxu0
        %v548 = vadd.f32 %v318, %v547
        %549 = vmatprep.mubr.f32.mxu0 0.0
        %550 = vmatmul.mubr.f32.gmra.mrb[0].mxu0 %v337
        %v551 = vpop.f32.mrb[0].mxu0
        %v552 = vadd.f32 %v314, %v551
        %v553 = vpop.f32.mrb[0].mxu0
        %v554 = vadd.f32 %v318, %v553
        %555 = vmatprep.mubr.f32.mxu0 0.0
        %556 = vmatmul.mubr.f32.gmra.mrb[0].mxu0 %v340
        %v557 = vpop.f32.mrb[0].mxu0
        %v558 = vadd.f32 %v314, %v557
        %v559 = vpop.f32.mrb[0].mxu0
        %v560 = vadd.f32 %v318, %v559
        %561 = vmatprep.mubr.f32.mxu0 0.0
        %562 = vmatmul.mubr.f32.gmra.mrb[0].mxu0 %v343
        %v563 = vpop.f32.mrb[0].mxu0
        %v564 = vadd.f32 %v314, %v563
        %v565 = vpop.f32.mrb[0].mxu0
        %v566 = vadd.f32 %v318, %v565
        %567 = vmatprep.mubr.f32.mxu0 0.0
        %568 = vmatmul.mubr.f32.gmra.mrb[0].mxu0 %v346
        %v569 = vpop.f32.mrb[0].mxu0
        %v570 = vadd.f32 %v314, %v569
        %v571 = vpop.f32.mrb[0].mxu0
        %v572 = vadd.f32 %v318, %v571
        %573 = vdwg.mxu0
        %574 = vst [vmem:[#allocation4] sm:$0xff] %v415
        %575 = vst [vmem:[#allocation4 + $0x8] sm:$0xff] %v417
        %576 = vst [vmem:[#allocation4 + $0x10] sm:$0xff] %v528
        %577 = vst [vmem:[#allocation4 + $0x18] sm:$0xff] %v530
        %578 = vst [vmem:[#allocation4 + $0x20] sm:$0xff] %v421
        %579 = vst [vmem:[#allocation4 + $0x28] sm:$0xff] %v423
        %580 = vst [vmem:[#allocation4 + $0x30] sm:$0xff] %v534
        %581 = vst [vmem:[#allocation4 + $0x38] sm:$0xff] %v536
        %582 = vst [vmem:[#allocation4 + $0x40] sm:$0xff] %v427
        %583 = vst [vmem:[#allocation4 + $0x48] sm:$0xff] %v429
        %584 = vst [vmem:[#allocation4 + $0x50] sm:$0xff] %v540
        %585 = vst [vmem:[#allocation4 + $0x58] sm:$0xff] %v542
        %586 = vst [vmem:[#allocation4 + $0x60] sm:$0xff] %v433
        %587 = vst [vmem:[#allocation4 + $0x68] sm:$0xff] %v435
        %588 = vst [vmem:[#allocation4 + $0x70] sm:$0xff] %v546
        %589 = vst [vmem:[#allocation4 + $0x78] sm:$0xff] %v548
        %590 = vst [vmem:[#allocation4 + $0x80] sm:$0xff] %v439
        %591 = vst [vmem:[#allocation4 + $0x88] sm:$0xff] %v441
        %592 = vst [vmem:[#allocation4 + $0x90] sm:$0xff] %v552
        %593 = vst [vmem:[#allocation4 + $0x98] sm:$0xff] %v554
        %594 = vst [vmem:[#allocation4 + $0xa0] sm:$0xff] %v445
        %595 = vst [vmem:[#allocation4 + $0xa8] sm:$0xff] %v447
        %596 = vst [vmem:[#allocation4 + $0xb0] sm:$0xff] %v558
        %597 = vst [vmem:[#allocation4 + $0xb8] sm:$0xff] %v560
        %598 = vst [vmem:[#allocation4 + $0xc0] sm:$0xff] %v451
        %599 = vst [vmem:[#allocation4 + $0xc8] sm:$0xff] %v453
        %600 = vst [vmem:[#allocation4 + $0xd0] sm:$0xff] %v564
        %601 = vst [vmem:[#allocation4 + $0xd8] sm:$0xff] %v566
        %602 = vst [vmem:[#allocation4 + $0xe0] sm:$0xff] %v457
        %603 = vst [vmem:[#allocation4 + $0xe8] sm:$0xff] %v459
        %604 = vst [vmem:[#allocation4 + $0xf0] sm:$0xff] %v570
        %605 = vst [vmem:[#allocation4 + $0xf8] sm:$0xff] %v572
        %v606 = vld [vmem:[#allocation10] sm:$0xff]
        %v607 = vld [vmem:[#allocation10 + $0x8] sm:$0xff]
        %v608 = vld [vmem:[#allocation10 + $0x10] sm:$0xff]
        %v609 = vld [vmem:[#allocation10 + $0x18] sm:$0xff]
        %v610 = vld [vmem:[#allocation10 + $0x20] sm:$0xff]
        %v611 = vld [vmem:[#allocation10 + $0x28] sm:$0xff]
        %v612 = vld [vmem:[#allocation10 + $0x30] sm:$0xff]
        %v613 = vld [vmem:[#allocation10 + $0x38] sm:$0xff]
        %v614 = vld [vmem:[#allocation10 + $0x40] sm:$0xff]
        %v615 = vld [vmem:[#allocation10 + $0x48] sm:$0xff]
        %v616 = vld [vmem:[#allocation10 + $0x50] sm:$0xff]
        %v617 = vld [vmem:[#allocation10 + $0x58] sm:$0xff]
        %v618 = vld [vmem:[#allocation10 + $0x60] sm:$0xff]
        %v619 = vld [vmem:[#allocation10 + $0x68] sm:$0xff]
        %v620 = vld [vmem:[#allocation10 + $0x70] sm:$0xff]
        %v621 = vld [vmem:[#allocation10 + $0x78] sm:$0xff]
        %v622 = vld [vmem:[#allocation10 + $0x80] sm:$0xff]
        %v623 = vld [vmem:[#allocation10 + $0x88] sm:$0xff]
        %v624 = vld [vmem:[#allocation10 + $0x90] sm:$0xff]
        %v625 = vld [vmem:[#allocation10 + $0x98] sm:$0xff]
        %v626 = vld [vmem:[#allocation10 + $0xa0] sm:$0xff]
        %v627 = vld [vmem:[#allocation10 + $0xa8] sm:$0xff]
        %v628 = vld [vmem:[#allocation10 + $0xb0] sm:$0xff]
        %v629 = vld [vmem:[#allocation10 + $0xb8] sm:$0xff]
        %v630 = vld [vmem:[#allocation10 + $0xc0] sm:$0xff]
        %v631 = vld [vmem:[#allocation10 + $0xc8] sm:$0xff]
        %v632 = vld [vmem:[#allocation10 + $0xd0] sm:$0xff]
        %v633 = vld [vmem:[#allocation10 + $0xd8] sm:$0xff]
        %v634 = vld [vmem:[#allocation10 + $0xe0] sm:$0xff]
        %v635 = vld [vmem:[#allocation10 + $0xe8] sm:$0xff]
        %v636 = vld [vmem:[#allocation10 + $0xf0] sm:$0xff]
        %v637 = vld [vmem:[#allocation10 + $0xf8] sm:$0xff]
        %v638 = vld [vmem:[#allocation10 + $0x100] sm:$0xff]
        %v639 = vld [vmem:[#allocation10 + $0x108] sm:$0xff]
        %v640 = vld [vmem:[#allocation10 + $0x110] sm:$0xff]
        %v641 = vld [vmem:[#allocation10 + $0x118] sm:$0xff]
        %v642 = vld [vmem:[#allocation10 + $0x120] sm:$0xff]
        %v643 = vld [vmem:[#allocation10 + $0x128] sm:$0xff]
        %v644 = vld [vmem:[#allocation10 + $0x130] sm:$0xff]
        %v645 = vld [vmem:[#allocation10 + $0x138] sm:$0xff]
        %v646 = vld [vmem:[#allocation10 + $0x140] sm:$0xff]
        %v647 = vld [vmem:[#allocation10 + $0x148] sm:$0xff]
        %v648 = vld [vmem:[#allocation10 + $0x150] sm:$0xff]
        %v649 = vld [vmem:[#allocation10 + $0x158] sm:$0xff]
        %v650 = vld [vmem:[#allocation10 + $0x160] sm:$0xff]
        %v651 = vld [vmem:[#allocation10 + $0x168] sm:$0xff]
        %v652 = vld [vmem:[#allocation10 + $0x170] sm:$0xff]
        %v653 = vld [vmem:[#allocation10 + $0x178] sm:$0xff]
        %v654 = vld [vmem:[#allocation10 + $0x180] sm:$0xff]
        %v655 = vld [vmem:[#allocation10 + $0x188] sm:$0xff]
        %v656 = vld [vmem:[#allocation10 + $0x190] sm:$0xff]
        %v657 = vld [vmem:[#allocation10 + $0x198] sm:$0xff]
        %v658 = vld [vmem:[#allocation10 + $0x1a0] sm:$0xff]
        %v659 = vld [vmem:[#allocation10 + $0x1a8] sm:$0xff]
        %v660 = vld [vmem:[#allocation10 + $0x1b0] sm:$0xff]
        %v661 = vld [vmem:[#allocation10 + $0x1b8] sm:$0xff]
        %v662 = vld [vmem:[#allocation10 + $0x1c0] sm:$0xff]
        %v663 = vld [vmem:[#allocation10 + $0x1c8] sm:$0xff]
        %v664 = vld [vmem:[#allocation10 + $0x1d0] sm:$0xff]
        %v665 = vld [vmem:[#allocation10 + $0x1d8] sm:$0xff]
        %v666 = vld [vmem:[#allocation10 + $0x1e0] sm:$0xff]
        %v667 = vld [vmem:[#allocation10 + $0x1e8] sm:$0xff]
        %v668 = vld [vmem:[#allocation10 + $0x1f0] sm:$0xff]
        %v669 = vld [vmem:[#allocation10 + $0x1f8] sm:$0xff]
        %v670 = vld [vmem:[%s0] sm:$0xff]
        %s671 = smul.u32 %s23, 8
        %v672 = vld [vmem:[#allocation2] sm:$0xff]
        %v673 = vld [vmem:[#allocation3] sm:$0xff]
        %v674 = vld [vmem:[#allocation4] ss:$8 sm:$0xf]
        %s675 = scalar_lea.vmem [#allocation4], 32
        %v676 = vld [vmem:[%s675] ss:$8 sm:$0xf]
        %s677 = scalar_lea.vmem [#allocation4], 64
        %v678 = vld [vmem:[%s677] ss:$8 sm:$0xf]
        %s679 = scalar_lea.vmem [#allocation4], 96
        %v680 = vld [vmem:[%s679] ss:$8 sm:$0xf]
        %s681 = scalar_lea.vmem [#allocation4], 128
        %v682 = vld [vmem:[%s681] ss:$8 sm:$0xf]
        %s683 = scalar_lea.vmem [#allocation4], 160
        %v684 = vld [vmem:[%s683] ss:$8 sm:$0xf]
        %s685 = scalar_lea.vmem [#allocation4], 192
        %v686 = vld [vmem:[%s685] ss:$8 sm:$0xf]
        %s687 = scalar_lea.vmem [#allocation4], 224
        %v688 = vld [vmem:[%s687] ss:$8 sm:$0xf]
        %689 = vmatprep.subr.mxu0 %v607
        %690 = vmatpush1.msra.mxu0 %v606
        %691 = vmatprep.subr.mxu0 %v611
        %692 = vmatpush1.msra.mxu0 %v610
        %693 = vmatprep.subr.mxu0 %v615
        %694 = vmatpush1.msra.mxu0 %v614
        %695 = vmatprep.subr.mxu0 %v619
        %696 = vmatpush1.msra.mxu0 %v618
        %697 = vmatprep.subr.mxu0 %v623
        %698 = vmatpush1.msra.mxu0 %v622
        %699 = vmatprep.subr.mxu0 %v627
        %700 = vmatpush1.msra.mxu0 %v626
        %701 = vmatprep.subr.mxu0 %v631
        %702 = vmatpush1.msra.mxu0 %v630
        %703 = vmatprep.subr.mxu0 %v635
        %704 = vmatpush1.msra.mxu0 %v634
        %705 = vmatprep.subr.mxu0 %v639
        %706 = vmatpush1.msra.mxu0 %v638
        %707 = vmatprep.subr.mxu0 %v643
        %708 = vmatpush1.msra.mxu0 %v642
        %709 = vmatprep.subr.mxu0 %v647
        %710 = vmatpush1.msra.mxu0 %v646
        %711 = vmatprep.subr.mxu0 %v651
        %712 = vmatpush1.msra.mxu0 %v650
        %713 = vmatprep.subr.mxu0 %v655
        %714 = vmatpush1.msra.mxu0 %v654
        %715 = vmatprep.subr.mxu0 %v659
        %716 = vmatpush1.msra.mxu0 %v658
        %717 = vmatprep.subr.mxu0 %v663
        %718 = vmatpush1.msra.mxu0 %v662
        %719 = vmatprep.subr.mxu0 %v667
        %720 = vmatpush1.msra.mxu0 %v666
        %721 = vmatprep.subr.mxu0 0.0
        %722 = vmatpush1.msra.mxu0 0.0
        %723 = vmatprep.subr.mxu0 0.0
        %724 = vmatpush1.msra.mxu0 0.0
        %725 = vmatprep.subr.mxu0 0.0
        %726 = vmatpush1.msra.mxu0 0.0
        %727 = vmatprep.subr.mxu0 0.0
        %728 = vmatpush1.msra.mxu0 0.0
        %729 = vmatprep.subr.mxu0 0.0
        %730 = vmatpush1.msra.mxu0 0.0
        %731 = vmatprep.subr.mxu0 0.0
        %732 = vmatpush1.msra.mxu0 0.0
        %733 = vmatprep.subr.mxu0 0.0
        %734 = vmatpush1.msra.mxu0 0.0
        %735 = vmatprep.subr.mxu0 0.0
        %736 = vmatpush1.msra.mxu0 0.0
        %737 = vmatprep.subr.mxu0 0.0
        %738 = vmatpush1.msra.mxu0 0.0
        %739 = vmatprep.subr.mxu0 0.0
        %740 = vmatpush1.msra.mxu0 0.0
        %741 = vmatprep.subr.mxu0 0.0
        %742 = vmatpush1.msra.mxu0 0.0
        %743 = vmatprep.subr.mxu0 0.0
        %744 = vmatpush1.msra.mxu0 0.0
        %745 = vmatprep.subr.mxu0 0.0
        %746 = vmatpush1.msra.mxu0 0.0
        %747 = vmatprep.subr.mxu0 0.0
        %748 = vmatpush1.msra.mxu0 0.0
        %749 = vmatprep.subr.mxu0 0.0
        %750 = vmatpush1.msra.mxu0 0.0
        %751 = vmatprep.subr.mxu0 0.0
        %752 = vmatpush1.msra.mxu0 0.0
        %753 = vmatprep.mubr.f32.mxu0 0.0
        %754 = vmatmul.mubr.f32.gmra.mrb[0].mxu0 %v672
        %v755 = vpop.f32.mrb[0].mxu0
        %v756 = vadd.f32 0.0, %v755
        %v757 = vpop.f32.mrb[0].mxu0
        %v758 = vadd.f32 0.0, %v757
        %759 = vdwg.mxu0
        %760 = vmatprep.subr.mxu0 %v609
        %761 = vmatpush1.msra.mxu0 %v608
        %762 = vmatprep.subr.mxu0 %v613
        %763 = vmatpush1.msra.mxu0 %v612
        %764 = vmatprep.subr.mxu0 %v617
        %765 = vmatpush1.msra.mxu0 %v616
        %766 = vmatprep.subr.mxu0 %v621
        %767 = vmatpush1.msra.mxu0 %v620
        %768 = vmatprep.subr.mxu0 %v625
        %769 = vmatpush1.msra.mxu0 %v624
        %770 = vmatprep.subr.mxu0 %v629
        %771 = vmatpush1.msra.mxu0 %v628
        %772 = vmatprep.subr.mxu0 %v633
        %773 = vmatpush1.msra.mxu0 %v632
        %774 = vmatprep.subr.mxu0 %v637
        %775 = vmatpush1.msra.mxu0 %v636
        %776 = vmatprep.subr.mxu0 %v641
        %777 = vmatpush1.msra.mxu0 %v640
        %778 = vmatprep.subr.mxu0 %v645
        %779 = vmatpush1.msra.mxu0 %v644
        %780 = vmatprep.subr.mxu0 %v649
        %781 = vmatpush1.msra.mxu0 %v648
        %782 = vmatprep.subr.mxu0 %v653
        %783 = vmatpush1.msra.mxu0 %v652
        %784 = vmatprep.subr.mxu0 %v657
        %785 = vmatpush1.msra.mxu0 %v656
        %786 = vmatprep.subr.mxu0 %v661
        %787 = vmatpush1.msra.mxu0 %v660
        %788 = vmatprep.subr.mxu0 %v665
        %789 = vmatpush1.msra.mxu0 %v664
        %790 = vmatprep.subr.mxu0 %v669
        %791 = vmatpush1.msra.mxu0 %v668
        %792 = vmatprep.subr.mxu0 0.0
        %793 = vmatpush1.msra.mxu0 0.0
        %794 = vmatprep.subr.mxu0 0.0
        %795 = vmatpush1.msra.mxu0 0.0
        %796 = vmatprep.subr.mxu0 0.0
        %797 = vmatpush1.msra.mxu0 0.0
        %798 = vmatprep.subr.mxu0 0.0
        %799 = vmatpush1.msra.mxu0 0.0
        %800 = vmatprep.subr.mxu0 0.0
        %801 = vmatpush1.msra.mxu0 0.0
        %802 = vmatprep.subr.mxu0 0.0
        %803 = vmatpush1.msra.mxu0 0.0
        %804 = vmatprep.subr.mxu0 0.0
        %805 = vmatpush1.msra.mxu0 0.0
        %806 = vmatprep.subr.mxu0 0.0
        %807 = vmatpush1.msra.mxu0 0.0
        %808 = vmatprep.subr.mxu0 0.0
        %809 = vmatpush1.msra.mxu0 0.0
        %810 = vmatprep.subr.mxu0 0.0
        %811 = vmatpush1.msra.mxu0 0.0
        %812 = vmatprep.subr.mxu0 0.0
        %813 = vmatpush1.msra.mxu0 0.0
        %814 = vmatprep.subr.mxu0 0.0
        %815 = vmatpush1.msra.mxu0 0.0
        %816 = vmatprep.subr.mxu0 0.0
        %817 = vmatpush1.msra.mxu0 0.0
        %818 = vmatprep.subr.mxu0 0.0
        %819 = vmatpush1.msra.mxu0 0.0
        %820 = vmatprep.subr.mxu0 0.0
        %821 = vmatpush1.msra.mxu0 0.0
        %822 = vmatprep.subr.mxu0 0.0
        %823 = vmatpush1.msra.mxu0 0.0
        %824 = vmatprep.mubr.f32.mxu0 0.0
        %825 = vmatmul.mubr.f32.gmra.mrb[0].mxu0 %v672
        %v826 = vpop.f32.mrb[0].mxu0
        %v827 = vadd.f32 0.0, %v826
        %v828 = vpop.f32.mrb[0].mxu0
        %v829 = vadd.f32 0.0, %v828
        %830 = vdwg.mxu0
        %v835 = vcombine.low %v756, %v758
        %v836 = vcombine.high %v756, %v758
        %v837 = vcombine.low %v827, %v829
        %v838 = vcombine.high %v827, %v829
        %v840 = vunpack.c.l.s4 1966171168
        %v841 = vunpack.c.0.s8 %v840
        %v842 = vlaneseq
        %v843 = vshrl.u32 %v842, 7
        %v844 = vsub.s32 %v841, %v843
        %v845 = vrot.slane %v835, %v844
        %v847 = vunpack.c.l.s4 1966171168
        %v848 = vunpack.c.0.s8 %v847
        %v849 = vlaneseq
        %v850 = vshrl.u32 %v849, 7
        %v851 = vsub.s32 %v848, %v850
        %v852 = vrot.slane %v836, %v851
        %v854 = vunpack.c.l.s4 1966171168
        %v855 = vunpack.c.0.s8 %v854
        %v856 = vlaneseq
        %v857 = vshrl.u32 %v856, 7
        %v858 = vsub.s32 %v855, %v857
        %v859 = vrot.slane %v837, %v858
        %v861 = vunpack.c.l.s4 1966171168
        %v862 = vunpack.c.0.s8 %v861
        %v863 = vlaneseq
        %v864 = vshrl.u32 %v863, 7
        %v865 = vsub.s32 %v862, %v864
        %v866 = vrot.slane %v838, %v865
        %v867 = vcombine.low %v845, %v859
        %v868 = vcombine.high %v845, %v859
        %v869 = vcombine.low %v852, %v866
        %v870 = vcombine.high %v852, %v866
        %v872 = vunpack.c.l.s4 1966171168
        %v873 = vunpack.c.0.s8 %v872
        %v874 = vlaneseq
        %v875 = vshrl.u32 %v874, 7
        %v876 = vsub.s32 %v873, %v875
        %v877 = vrot.slane %v867, %v876
        %v879 = vunpack.c.l.s4 1966171168
        %v880 = vunpack.c.0.s8 %v879
        %v881 = vlaneseq
        %v882 = vshrl.u32 %v881, 7
        %v883 = vsub.s32 %v880, %v882
        %v884 = vrot.slane %v869, %v883
        %v886 = vunpack.c.l.s4 1966171168
        %v887 = vunpack.c.0.s8 %v886
        %v888 = vlaneseq
        %v889 = vshrl.u32 %v888, 7
        %v890 = vsub.s32 %v887, %v889
        %v891 = vrot.slane %v868, %v890
        %v893 = vunpack.c.l.s4 1966171168
        %v894 = vunpack.c.0.s8 %v893
        %v895 = vlaneseq
        %v896 = vshrl.u32 %v895, 7
        %v897 = vsub.s32 %v894, %v896
        %v898 = vrot.slane %v870, %v897
        %v899 = vcombine.high %v877, %v877
        %v900 = vcombine.high %v884, %v884
        %v901 = vcombine.high %v891, %v891
        %v902 = vcombine.high %v898, %v898
        %v911 = vadd.f32 %v674, %v877
        %v912 = vadd.f32 %v676, %v891
        %v913 = vadd.f32 %v678, %v899
        %v914 = vadd.f32 %v680, %v901
        %v915 = vadd.f32 %v682, %v884
        %v916 = vadd.f32 %v684, %v898
        %v917 = vadd.f32 %v686, %v900
        %v918 = vadd.f32 %v688, %v902
        %v919 = vxor.u32 %v911, 2147483648
        %v920 = vxor.u32 %v912, 2147483648
        %v921 = vxor.u32 %v913, 2147483648
        %v922 = vxor.u32 %v914, 2147483648
        %v923 = vxor.u32 %v915, 2147483648
        %v924 = vxor.u32 %v916, 2147483648
        %v925 = vxor.u32 %v917, 2147483648
        %v926 = vxor.u32 %v918, 2147483648
        %v927 = vmul.f32 %v919, 1.442695
        %v928 = vpow.pop %v927
        %v929 = vmul.f32 %v920, 1.442695
        %v930 = vpow.pop %v929
        %v931 = vmul.f32 %v921, 1.442695
        %v932 = vpow.pop %v931
        %v933 = vmul.f32 %v922, 1.442695
        %v934 = vpow.pop %v933
        %v935 = vmul.f32 %v923, 1.442695
        %v936 = vpow.pop %v935
        %v937 = vmul.f32 %v924, 1.442695
        %v938 = vpow.pop %v937
        %v939 = vmul.f32 %v925, 1.442695
        %v940 = vpow.pop %v939
        %v941 = vmul.f32 %v926, 1.442695
        %v942 = vpow.pop %v941
        %v943 = vadd.f32 %v928, 1.0
        %v944 = vadd.f32 %v930, 1.0
        %v945 = vadd.f32 %v932, 1.0
        %v946 = vadd.f32 %v934, 1.0
        %v947 = vadd.f32 %v936, 1.0
        %v948 = vadd.f32 %v938, 1.0
        %v949 = vadd.f32 %v940, 1.0
        %v950 = vadd.f32 %v942, 1.0
        %v951 = vrcp.pop %v943
        %v952 = vmul.f32 1.0, %v951
        %v953 = vrcp.pop %v944
        %v954 = vmul.f32 1.0, %v953
        %v955 = vrcp.pop %v945
        %v956 = vmul.f32 1.0, %v955
        %v957 = vrcp.pop %v946
        %v958 = vmul.f32 1.0, %v957
        %v959 = vrcp.pop %v947
        %v960 = vmul.f32 1.0, %v959
        %v961 = vrcp.pop %v948
        %v962 = vmul.f32 1.0, %v961
        %v963 = vrcp.pop %v949
        %v964 = vmul.f32 1.0, %v963
        %v965 = vrcp.pop %v950
        %v966 = vmul.f32 1.0, %v965
        %v975 = vrot.slane %v911, 1
        %v976 = vrot.slane %v912, 1
        %v977 = vrot.slane %v913, 1
        %v978 = vrot.slane %v914, 1
        %v979 = vrot.slane %v915, 1
        %v980 = vrot.slane %v916, 1
        %v981 = vrot.slane %v917, 1
        %v982 = vrot.slane %v918, 1
        %v991 = vxor.u32 %v975, 2147483648
        %v992 = vxor.u32 %v976, 2147483648
        %v993 = vxor.u32 %v977, 2147483648
        %v994 = vxor.u32 %v978, 2147483648
        %v995 = vxor.u32 %v979, 2147483648
        %v996 = vxor.u32 %v980, 2147483648
        %v997 = vxor.u32 %v981, 2147483648
        %v998 = vxor.u32 %v982, 2147483648
        %v999 = vmul.f32 %v991, 1.442695
        %v1000 = vpow.pop %v999
        %v1001 = vmul.f32 %v992, 1.442695
        %v1002 = vpow.pop %v1001
        %v1003 = vmul.f32 %v993, 1.442695
        %v1004 = vpow.pop %v1003
        %v1005 = vmul.f32 %v994, 1.442695
        %v1006 = vpow.pop %v1005
        %v1007 = vmul.f32 %v995, 1.442695
        %v1008 = vpow.pop %v1007
        %v1009 = vmul.f32 %v996, 1.442695
        %v1010 = vpow.pop %v1009
        %v1011 = vmul.f32 %v997, 1.442695
        %v1012 = vpow.pop %v1011
        %v1013 = vmul.f32 %v998, 1.442695
        %v1014 = vpow.pop %v1013
        %v1015 = vadd.f32 %v1000, 1.0
        %v1016 = vadd.f32 %v1002, 1.0
        %v1017 = vadd.f32 %v1004, 1.0
        %v1018 = vadd.f32 %v1006, 1.0
        %v1019 = vadd.f32 %v1008, 1.0
        %v1020 = vadd.f32 %v1010, 1.0
        %v1021 = vadd.f32 %v1012, 1.0
        %v1022 = vadd.f32 %v1014, 1.0
        %v1023 = vrcp.pop %v1015
        %v1024 = vmul.f32 1.0, %v1023
        %v1025 = vrcp.pop %v1016
        %v1026 = vmul.f32 1.0, %v1025
        %v1027 = vrcp.pop %v1017
        %v1028 = vmul.f32 1.0, %v1027
        %v1029 = vrcp.pop %v1018
        %v1030 = vmul.f32 1.0, %v1029
        %v1031 = vrcp.pop %v1019
        %v1032 = vmul.f32 1.0, %v1031
        %v1033 = vrcp.pop %v1020
        %v1034 = vmul.f32 1.0, %v1033
        %v1035 = vrcp.pop %v1021
        %v1036 = vmul.f32 1.0, %v1035
        %v1037 = vrcp.pop %v1022
        %v1038 = vmul.f32 1.0, %v1037
        %v1039 = vrot.slane %v911, 2
        %v1040 = vrot.slane %v912, 2
        %v1041 = vrot.slane %v913, 2
        %v1042 = vrot.slane %v914, 2
        %v1043 = vrot.slane %v915, 2
        %v1044 = vrot.slane %v916, 2
        %v1045 = vrot.slane %v917, 2
        %v1046 = vrot.slane %v918, 2
        %v1055 = vtanh.pop %v1039
        %v1056 = vtanh.pop %v1040
        %v1057 = vtanh.pop %v1041
        %v1058 = vtanh.pop %v1042
        %v1059 = vtanh.pop %v1043
        %v1060 = vtanh.pop %v1044
        %v1061 = vtanh.pop %v1045
        %v1062 = vtanh.pop %v1046
        %v1063 = vrot.slane %v911, 3
        %v1064 = vrot.slane %v912, 3
        %v1065 = vrot.slane %v913, 3
        %v1066 = vrot.slane %v914, 3
        %v1067 = vrot.slane %v915, 3
        %v1068 = vrot.slane %v916, 3
        %v1069 = vrot.slane %v917, 3
        %v1070 = vrot.slane %v918, 3
        %v1079 = vxor.u32 %v1063, 2147483648
        %v1080 = vxor.u32 %v1064, 2147483648
        %v1081 = vxor.u32 %v1065, 2147483648
        %v1082 = vxor.u32 %v1066, 2147483648
        %v1083 = vxor.u32 %v1067, 2147483648
        %v1084 = vxor.u32 %v1068, 2147483648
        %v1085 = vxor.u32 %v1069, 2147483648
        %v1086 = vxor.u32 %v1070, 2147483648
        %v1087 = vmul.f32 %v1079, 1.442695
        %v1088 = vpow.pop %v1087
        %v1089 = vmul.f32 %v1080, 1.442695
        %v1090 = vpow.pop %v1089
        %v1091 = vmul.f32 %v1081, 1.442695
        %v1092 = vpow.pop %v1091
        %v1093 = vmul.f32 %v1082, 1.442695
        %v1094 = vpow.pop %v1093
        %v1095 = vmul.f32 %v1083, 1.442695
        %v1096 = vpow.pop %v1095
        %v1097 = vmul.f32 %v1084, 1.442695
        %v1098 = vpow.pop %v1097
        %v1099 = vmul.f32 %v1085, 1.442695
        %v1100 = vpow.pop %v1099
        %v1101 = vmul.f32 %v1086, 1.442695
        %v1102 = vpow.pop %v1101
        %v1103 = vadd.f32 %v1088, 1.0
        %v1104 = vadd.f32 %v1090, 1.0
        %v1105 = vadd.f32 %v1092, 1.0
        %v1106 = vadd.f32 %v1094, 1.0
        %v1107 = vadd.f32 %v1096, 1.0
        %v1108 = vadd.f32 %v1098, 1.0
        %v1109 = vadd.f32 %v1100, 1.0
        %v1110 = vadd.f32 %v1102, 1.0
        %v1111 = vrcp.pop %v1103
        %v1112 = vmul.f32 1.0, %v1111
        %v1113 = vrcp.pop %v1104
        %v1114 = vmul.f32 1.0, %v1113
        %v1115 = vrcp.pop %v1105
        %v1116 = vmul.f32 1.0, %v1115
        %v1117 = vrcp.pop %v1106
        %v1118 = vmul.f32 1.0, %v1117
        %v1119 = vrcp.pop %v1107
        %v1120 = vmul.f32 1.0, %v1119
        %v1121 = vrcp.pop %v1108
        %v1122 = vmul.f32 1.0, %v1121
        %v1123 = vrcp.pop %v1109
        %v1124 = vmul.f32 1.0, %v1123
        %v1125 = vrcp.pop %v1110
        %v1126 = vmul.f32 1.0, %v1125
        %v1128 = vcombine.high %v673, %v673
        %v1130 = vunpack.c.l.s4 1966171168
        %v1131 = vunpack.c.0.s8 %v1130
        %v1132 = vlaneseq
        %v1133 = vshrl.u32 %v1132, 7
        %v1134 = vsub.s32 %v1131, %v1133
        %v1135 = vrot.slane %v673, %v1134
        %v1137 = vunpack.c.l.s4 1966171168
        %v1138 = vunpack.c.0.s8 %v1137
        %v1139 = vlaneseq
        %v1140 = vshrl.u32 %v1139, 7
        %v1141 = vsub.s32 %v1138, %v1140
        %v1142 = vrot.slane %v1128, %v1141
        %v1143 = vcombine.high %v1135, %v1135
        %v1144 = vcombine.high %v1142, %v1142
        %v1146 = vunpack.c.l.s4 1966171168
        %v1147 = vunpack.c.0.s8 %v1146
        %v1148 = vlaneseq
        %v1149 = vshrl.u32 %v1148, 7
        %v1150 = vsub.s32 %v1147, %v1149
        %v1151 = vrot.slane %v1135, %v1150
        %v1153 = vunpack.c.l.s4 1966171168
        %v1154 = vunpack.c.0.s8 %v1153
        %v1155 = vlaneseq
        %v1156 = vshrl.u32 %v1155, 7
        %v1157 = vsub.s32 %v1154, %v1156
        %v1158 = vrot.slane %v1142, %v1157
        %v1160 = vunpack.c.l.s4 1966171168
        %v1161 = vunpack.c.0.s8 %v1160
        %v1162 = vlaneseq
        %v1163 = vshrl.u32 %v1162, 7
        %v1164 = vsub.s32 %v1161, %v1163
        %v1165 = vrot.slane %v1143, %v1164
        %v1167 = vunpack.c.l.s4 1966171168
        %v1168 = vunpack.c.0.s8 %v1167
        %v1169 = vlaneseq
        %v1170 = vshrl.u32 %v1169, 7
        %v1171 = vsub.s32 %v1168, %v1170
        %v1172 = vrot.slane %v1144, %v1171
        %v1173 = vcombine.high %v1151, %v1151
        %v1174 = vcombine.high %v1158, %v1158
        %v1175 = vcombine.high %v1165, %v1165
        %v1176 = vcombine.high %v1172, %v1172
        %v1185 = vmul.f32 %v1024, %v1151
        %v1186 = vmul.f32 %v1026, %v1165
        %v1187 = vmul.f32 %v1028, %v1173
        %v1188 = vmul.f32 %v1030, %v1175
        %v1189 = vmul.f32 %v1032, %v1158
        %v1190 = vmul.f32 %v1034, %v1172
        %v1191 = vmul.f32 %v1036, %v1174
        %v1192 = vmul.f32 %v1038, %v1176
        %v1193 = vmul.f32 %v952, %v1055
        %v1194 = vmul.f32 %v954, %v1056
        %v1195 = vmul.f32 %v956, %v1057
        %v1196 = vmul.f32 %v958, %v1058
        %v1197 = vmul.f32 %v960, %v1059
        %v1198 = vmul.f32 %v962, %v1060
        %v1199 = vmul.f32 %v964, %v1061
        %v1200 = vmul.f32 %v966, %v1062
        %v1201 = vadd.f32 %v1185, %v1193
        %v1202 = vadd.f32 %v1186, %v1194
        %v1203 = vadd.f32 %v1187, %v1195
        %v1204 = vadd.f32 %v1188, %v1196
        %v1205 = vadd.f32 %v1189, %v1197
        %v1206 = vadd.f32 %v1190, %v1198
        %v1207 = vadd.f32 %v1191, %v1199
        %v1208 = vadd.f32 %v1192, %v1200
        %v1209 = vtanh.pop %v1201
        %v1210 = vtanh.pop %v1202
        %v1211 = vtanh.pop %v1203
        %v1212 = vtanh.pop %v1204
        %v1213 = vtanh.pop %v1205
        %v1214 = vtanh.pop %v1206
        %v1215 = vtanh.pop %v1207
        %v1216 = vtanh.pop %v1208
        %v1217 = vmul.f32 %v1112, %v1209
        %v1218 = vmul.f32 %v1114, %v1210
        %v1219 = vmul.f32 %v1116, %v1211
        %v1220 = vmul.f32 %v1118, %v1212
        %v1221 = vmul.f32 %v1120, %v1213
        %v1222 = vmul.f32 %v1122, %v1214
        %v1223 = vmul.f32 %v1124, %v1215
        %v1224 = vmul.f32 %v1126, %v1216
        %v1225 = vstv %s671
        %vm1226 = vcmp.gt.s32.totalorder %v670, %v1225
        %v1227 = vsel %vm1226, 1, 0
        %1228 = vset.pattern.permute.xlu0 0
        %1229 = vperm.xlu0 %1228, %v1227
        %v1230 = vpop.permute.xlu0 %1229
        %vm1231 = vcmp.eq.s32.totalorder %v1230, 1
        %v1240 = vcombine.low %v1201, %v1202
        %v1241 = vcombine.low %v1203, %v1204
        %v1242 = vcombine.low %v1205, %v1206
        %v1243 = vcombine.low %v1207, %v1208
        %v1245 = vunpack.c.l.s4 1966171168
        %v1246 = vunpack.c.0.s8 %v1245
        %v1247 = vlaneseq
        %v1248 = vshrl.u32 %v1247, 7
        %v1249 = vsub.s32 %v1246, %v1248
        %v1250 = vrot.slane %v1240, %v1249
        %v1252 = vunpack.c.l.s4 1966171168
        %v1253 = vunpack.c.0.s8 %v1252
        %v1254 = vlaneseq
        %v1255 = vshrl.u32 %v1254, 7
        %v1256 = vsub.s32 %v1253, %v1255
        %v1257 = vrot.slane %v1241, %v1256
        %v1259 = vunpack.c.l.s4 1966171168
        %v1260 = vunpack.c.0.s8 %v1259
        %v1261 = vlaneseq
        %v1262 = vshrl.u32 %v1261, 7
        %v1263 = vsub.s32 %v1260, %v1262
        %v1264 = vrot.slane %v1242, %v1263
        %v1266 = vunpack.c.l.s4 1966171168
        %v1267 = vunpack.c.0.s8 %v1266
        %v1268 = vlaneseq
        %v1269 = vshrl.u32 %v1268, 7
        %v1270 = vsub.s32 %v1267, %v1269
        %v1271 = vrot.slane %v1243, %v1270
        %v1272 = vcombine.low %v1250, %v1257
        %v1273 = vcombine.low %v1264, %v1271
        %v1275 = vunpack.c.l.s4 1966171168
        %v1276 = vunpack.c.0.s8 %v1275
        %v1277 = vlaneseq
        %v1278 = vshrl.u32 %v1277, 7
        %v1279 = vsub.s32 %v1276, %v1278
        %v1280 = vrot.slane %v1272, %v1279
        %v1282 = vunpack.c.l.s4 1966171168
        %v1283 = vunpack.c.0.s8 %v1282
        %v1284 = vlaneseq
        %v1285 = vshrl.u32 %v1284, 7
        %v1286 = vsub.s32 %v1283, %v1285
        %v1287 = vrot.slane %v1273, %v1286
        %v1288 = vcombine.low %v1280, %v1287
        %v1290 = vsel %vm1231, %v1288, %v673
        %v1299 = vcombine.low %v1217, %v1218
        %v1300 = vcombine.low %v1219, %v1220
        %v1301 = vcombine.low %v1221, %v1222
        %v1302 = vcombine.low %v1223, %v1224
        %v1304 = vunpack.c.l.s4 1966171168
        %v1305 = vunpack.c.0.s8 %v1304
        %v1306 = vlaneseq
        %v1307 = vshrl.u32 %v1306, 7
        %v1308 = vsub.s32 %v1305, %v1307
        %v1309 = vrot.slane %v1299, %v1308
        %v1311 = vunpack.c.l.s4 1966171168
        %v1312 = vunpack.c.0.s8 %v1311
        %v1313 = vlaneseq
        %v1314 = vshrl.u32 %v1313, 7
        %v1315 = vsub.s32 %v1312, %v1314
        %v1316 = vrot.slane %v1300, %v1315
        %v1318 = vunpack.c.l.s4 1966171168
        %v1319 = vunpack.c.0.s8 %v1318
        %v1320 = vlaneseq
        %v1321 = vshrl.u32 %v1320, 7
        %v1322 = vsub.s32 %v1319, %v1321
        %v1323 = vrot.slane %v1301, %v1322
        %v1325 = vunpack.c.l.s4 1966171168
        %v1326 = vunpack.c.0.s8 %v1325
        %v1327 = vlaneseq
        %v1328 = vshrl.u32 %v1327, 7
        %v1329 = vsub.s32 %v1326, %v1328
        %v1330 = vrot.slane %v1302, %v1329
        %v1331 = vcombine.low %v1309, %v1316
        %v1332 = vcombine.low %v1323, %v1330
        %v1334 = vunpack.c.l.s4 1966171168
        %v1335 = vunpack.c.0.s8 %v1334
        %v1336 = vlaneseq
        %v1337 = vshrl.u32 %v1336, 7
        %v1338 = vsub.s32 %v1335, %v1337
        %v1339 = vrot.slane %v1331, %v1338
        %v1341 = vunpack.c.l.s4 1966171168
        %v1342 = vunpack.c.0.s8 %v1341
        %v1343 = vlaneseq
        %v1344 = vshrl.u32 %v1343, 7
        %v1345 = vsub.s32 %v1342, %v1344
        %v1346 = vrot.slane %v1332, %v1345
        %v1347 = vcombine.low %v1339, %v1346
        %v1349 = vsel %vm1231, %v1347, %v672
        %v1350 = vsel %vm1231, %v1347, 0.0
        %v1352 = vcombine.high %v1350, %v1350
        %v1354 = vunpack.c.l.s4 1966171168
        %v1355 = vunpack.c.0.s8 %v1354
        %v1356 = vlaneseq
        %v1357 = vshrl.u32 %v1356, 7
        %v1358 = vsub.s32 %v1355, %v1357
        %v1359 = vrot.slane %v1350, %v1358
        %v1361 = vunpack.c.l.s4 1966171168
        %v1362 = vunpack.c.0.s8 %v1361
        %v1363 = vlaneseq
        %v1364 = vshrl.u32 %v1363, 7
        %v1365 = vsub.s32 %v1362, %v1364
        %v1366 = vrot.slane %v1352, %v1365
        %v1367 = vcombine.high %v1359, %v1359
        %v1368 = vcombine.high %v1366, %v1366
        %v1370 = vunpack.c.l.s4 1966171168
        %v1371 = vunpack.c.0.s8 %v1370
        %v1372 = vlaneseq
        %v1373 = vshrl.u32 %v1372, 7
        %v1374 = vsub.s32 %v1371, %v1373
        %v1375 = vrot.slane %v1359, %v1374
        %v1377 = vunpack.c.l.s4 1966171168
        %v1378 = vunpack.c.0.s8 %v1377
        %v1379 = vlaneseq
        %v1380 = vshrl.u32 %v1379, 7
        %v1381 = vsub.s32 %v1378, %v1380
        %v1382 = vrot.slane %v1366, %v1381
        %v1384 = vunpack.c.l.s4 1966171168
        %v1385 = vunpack.c.0.s8 %v1384
        %v1386 = vlaneseq
        %v1387 = vshrl.u32 %v1386, 7
        %v1388 = vsub.s32 %v1385, %v1387
        %v1389 = vrot.slane %v1367, %v1388
        %v1391 = vunpack.c.l.s4 1966171168
        %v1392 = vunpack.c.0.s8 %v1391
        %v1393 = vlaneseq
        %v1394 = vshrl.u32 %v1393, 7
        %v1395 = vsub.s32 %v1392, %v1394
        %v1396 = vrot.slane %v1368, %v1395
        %v1397 = vcombine.high %v1375, %v1375
        %v1398 = vcombine.high %v1382, %v1382
        %v1399 = vcombine.high %v1389, %v1389
        %v1400 = vcombine.high %v1396, %v1396
        %1409 = vst [vmem:[%s270] sm:$0x1] %v1375
        %1410 = vst [vmem:[%s270 + $0x8] sm:$0x1] %v1389
        %1411 = vst [vmem:[%s270 + $0x10] sm:$0x1] %v1397
        %1412 = vst [vmem:[%s270 + $0x18] sm:$0x1] %v1399
        %1413 = vst [vmem:[%s270 + $0x20] sm:$0x1] %v1382
        %1414 = vst [vmem:[%s270 + $0x28] sm:$0x1] %v1396
        %1415 = vst [vmem:[%s270 + $0x30] sm:$0x1] %v1398
        %1416 = vst [vmem:[%s270 + $0x38] sm:$0x1] %v1400
        %s1417 = scalar_lea.vmem [#allocation4], 1
        %v1418 = vld [vmem:[%s1417] ss:$8 sm:$0xf]
        %s1419 = scalar_lea.vmem [#allocation4], 33
        %v1420 = vld [vmem:[%s1419] ss:$8 sm:$0xf]
        %s1421 = scalar_lea.vmem [#allocation4], 65
        %v1422 = vld [vmem:[%s1421] ss:$8 sm:$0xf]
        %s1423 = scalar_lea.vmem [#allocation4], 97
        %v1424 = vld [vmem:[%s1423] ss:$8 sm:$0xf]
        %s1425 = scalar_lea.vmem [#allocation4], 129
        %v1426 = vld [vmem:[%s1425] ss:$8 sm:$0xf]
        %s1427 = scalar_lea.vmem [#allocation4], 161
        %v1428 = vld [vmem:[%s1427] ss:$8 sm:$0xf]
        %s1429 = scalar_lea.vmem [#allocation4], 193
        %v1430 = vld [vmem:[%s1429] ss:$8 sm:$0xf]
        %s1431 = scalar_lea.vmem [#allocation4], 225
        %v1432 = vld [vmem:[%s1431] ss:$8 sm:$0xf]
        %1433 = vmatprep.subr.mxu0 %v607
        %1434 = vmatpush1.msra.mxu0 %v606
        %1435 = vmatprep.subr.mxu0 %v611
        %1436 = vmatpush1.msra.mxu0 %v610
        %1437 = vmatprep.subr.mxu0 %v615
        %1438 = vmatpush1.msra.mxu0 %v614
        %1439 = vmatprep.subr.mxu0 %v619
        %1440 = vmatpush1.msra.mxu0 %v618
        %1441 = vmatprep.subr.mxu0 %v623
        %1442 = vmatpush1.msra.mxu0 %v622
        %1443 = vmatprep.subr.mxu0 %v627
        %1444 = vmatpush1.msra.mxu0 %v626
        %1445 = vmatprep.subr.mxu0 %v631
        %1446 = vmatpush1.msra.mxu0 %v630
        %1447 = vmatprep.subr.mxu0 %v635
        %1448 = vmatpush1.msra.mxu0 %v634
        %1449 = vmatprep.subr.mxu0 %v639
        %1450 = vmatpush1.msra.mxu0 %v638
        %1451 = vmatprep.subr.mxu0 %v643
        %1452 = vmatpush1.msra.mxu0 %v642
        %1453 = vmatprep.subr.mxu0 %v647
        %1454 = vmatpush1.msra.mxu0 %v646
        %1455 = vmatprep.subr.mxu0 %v651
        %1456 = vmatpush1.msra.mxu0 %v650
        %1457 = vmatprep.subr.mxu0 %v655
        %1458 = vmatpush1.msra.mxu0 %v654
        %1459 = vmatprep.subr.mxu0 %v659
        %1460 = vmatpush1.msra.mxu0 %v658
        %1461 = vmatprep.subr.mxu0 %v663
        %1462 = vmatpush1.msra.mxu0 %v662
        %1463 = vmatprep.subr.mxu0 %v667
        %1464 = vmatpush1.msra.mxu0 %v666
        %1465 = vmatprep.subr.mxu0 0.0
        %1466 = vmatpush1.msra.mxu0 0.0
        %1467 = vmatprep.subr.mxu0 0.0
        %1468 = vmatpush1.msra.mxu0 0.0
        %1469 = vmatprep.subr.mxu0 0.0
        %1470 = vmatpush1.msra.mxu0 0.0
        %1471 = vmatprep.subr.mxu0 0.0
        %1472 = vmatpush1.msra.mxu0 0.0
        %1473 = vmatprep.subr.mxu0 0.0
        %1474 = vmatpush1.msra.mxu0 0.0
        %1475 = vmatprep.subr.mxu0 0.0
        %1476 = vmatpush1.msra.mxu0 0.0
        %1477 = vmatprep.subr.mxu0 0.0
        %1478 = vmatpush1.msra.mxu0 0.0
        %1479 = vmatprep.subr.mxu0 0.0
        %1480 = vmatpush1.msra.mxu0 0.0
        %1481 = vmatprep.subr.mxu0 0.0
        %1482 = vmatpush1.msra.mxu0 0.0
        %1483 = vmatprep.subr.mxu0 0.0
        %1484 = vmatpush1.msra.mxu0 0.0
        %1485 = vmatprep.subr.mxu0 0.0
        %1486 = vmatpush1.msra.mxu0 0.0
        %1487 = vmatprep.subr.mxu0 0.0
        %1488 = vmatpush1.msra.mxu0 0.0
        %1489 = vmatprep.subr.mxu0 0.0
        %1490 = vmatpush1.msra.mxu0 0.0
        %1491 = vmatprep.subr.mxu0 0.0
        %1492 = vmatpush1.msra.mxu0 0.0
        %1493 = vmatprep.subr.mxu0 0.0
        %1494 = vmatpush1.msra.mxu0 0.0
        %1495 = vmatprep.subr.mxu0 0.0
        %1496 = vmatpush1.msra.mxu0 0.0
        %1497 = vmatprep.mubr.f32.mxu0 0.0
        %1498 = vmatmul.mubr.f32.gmra.mrb[0].mxu0 %v1349
        %v1499 = vpop.f32.mrb[0].mxu0
        %v1500 = vadd.f32 0.0, %v1499
        %v1501 = vpop.f32.mrb[0].mxu0
        %v1502 = vadd.f32 0.0, %v1501
        %1503 = vdwg.mxu0
        %1504 = vmatprep.subr.mxu0 %v609
        %1505 = vmatpush1.msra.mxu0 %v608
        %1506 = vmatprep.subr.mxu0 %v613
        %1507 = vmatpush1.msra.mxu0 %v612
        %1508 = vmatprep.subr.mxu0 %v617
        %1509 = vmatpush1.msra.mxu0 %v616
        %1510 = vmatprep.subr.mxu0 %v621
        %1511 = vmatpush1.msra.mxu0 %v620
        %1512 = vmatprep.subr.mxu0 %v625
        %1513 = vmatpush1.msra.mxu0 %v624
        %1514 = vmatprep.subr.mxu0 %v629
        %1515 = vmatpush1.msra.mxu0 %v628
        %1516 = vmatprep.subr.mxu0 %v633
        %1517 = vmatpush1.msra.mxu0 %v632
        %1518 = vmatprep.subr.mxu0 %v637
        %1519 = vmatpush1.msra.mxu0 %v636
        %1520 = vmatprep.subr.mxu0 %v641
        %1521 = vmatpush1.msra.mxu0 %v640
        %1522 = vmatprep.subr.mxu0 %v645
        %1523 = vmatpush1.msra.mxu0 %v644
        %1524 = vmatprep.subr.mxu0 %v649
        %1525 = vmatpush1.msra.mxu0 %v648
        %1526 = vmatprep.subr.mxu0 %v653
        %1527 = vmatpush1.msra.mxu0 %v652
        %1528 = vmatprep.subr.mxu0 %v657
        %1529 = vmatpush1.msra.mxu0 %v656
        %1530 = vmatprep.subr.mxu0 %v661
        %1531 = vmatpush1.msra.mxu0 %v660
        %1532 = vmatprep.subr.mxu0 %v665
        %1533 = vmatpush1.msra.mxu0 %v664
        %1534 = vmatprep.subr.mxu0 %v669
        %1535 = vmatpush1.msra.mxu0 %v668
        %1536 = vmatprep.subr.mxu0 0.0
        %1537 = vmatpush1.msra.mxu0 0.0
        %1538 = vmatprep.subr.mxu0 0.0
        %1539 = vmatpush1.msra.mxu0 0.0
        %1540 = vmatprep.subr.mxu0 0.0
        %1541 = vmatpush1.msra.mxu0 0.0
        %1542 = vmatprep.subr.mxu0 0.0
        %1543 = vmatpush1.msra.mxu0 0.0
        %1544 = vmatprep.subr.mxu0 0.0
        %1545 = vmatpush1.msra.mxu0 0.0
        %1546 = vmatprep.subr.mxu0 0.0
        %1547 = vmatpush1.msra.mxu0 0.0
        %1548 = vmatprep.subr.mxu0 0.0
        %1549 = vmatpush1.msra.mxu0 0.0
        %1550 = vmatprep.subr.mxu0 0.0
        %1551 = vmatpush1.msra.mxu0 0.0
        %1552 = vmatprep.subr.mxu0 0.0
        %1553 = vmatpush1.msra.mxu0 0.0
        %1554 = vmatprep.subr.mxu0 0.0
        %1555 = vmatpush1.msra.mxu0 0.0
        %1556 = vmatprep.subr.mxu0 0.0
        %1557 = vmatpush1.msra.mxu0 0.0
        %1558 = vmatprep.subr.mxu0 0.0
        %1559 = vmatpush1.msra.mxu0 0.0
        %1560 = vmatprep.subr.mxu0 0.0
        %1561 = vmatpush1.msra.mxu0 0.0
        %1562 = vmatprep.subr.mxu0 0.0
        %1563 = vmatpush1.msra.mxu0 0.0
        %1564 = vmatprep.subr.mxu0 0.0
        %1565 = vmatpush1.msra.mxu0 0.0
        %1566 = vmatprep.subr.mxu0 0.0
        %1567 = vmatpush1.msra.mxu0 0.0
        %1568 = vmatprep.mubr.f32.mxu0 0.0
        %1569 = vmatmul.mubr.f32.gmra.mrb[0].mxu0 %v1349
        %v1570 = vpop.f32.mrb[0].mxu0
        %v1571 = vadd.f32 0.0, %v1570
        %v1572 = vpop.f32.mrb[0].mxu0
        %v1573 = vadd.f32 0.0, %v1572
        %1574 = vdwg.mxu0
        %v1579 = vcombine.low %v1500, %v1502
        %v1580 = vcombine.high %v1500, %v1502
        %v1581 = vcombine.low %v1571, %v1573
        %v1582 = vcombine.high %v1571, %v1573
        %v1584 = vunpack.c.l.s4 1966171168
        %v1585 = vunpack.c.0.s8 %v1584
        %v1586 = vlaneseq
        %v1587 = vshrl.u32 %v1586, 7
        %v1588 = vsub.s32 %v1585, %v1587
        %v1589 = vrot.slane %v1579, %v1588
        %v1591 = vunpack.c.l.s4 1966171168
        %v1592 = vunpack.c.0.s8 %v1591
        %v1593 = vlaneseq
        %v1594 = vshrl.u32 %v1593, 7
        %v1595 = vsub.s32 %v1592, %v1594
        %v1596 = vrot.slane %v1580, %v1595
        %v1598 = vunpack.c.l.s4 1966171168
        %v1599 = vunpack.c.0.s8 %v1598
        %v1600 = vlaneseq
        %v1601 = vshrl.u32 %v1600, 7
        %v1602 = vsub.s32 %v1599, %v1601
        %v1603 = vrot.slane %v1581, %v1602
        %v1605 = vunpack.c.l.s4 1966171168
        %v1606 = vunpack.c.0.s8 %v1605
        %v1607 = vlaneseq
        %v1608 = vshrl.u32 %v1607, 7
        %v1609 = vsub.s32 %v1606, %v1608
        %v1610 = vrot.slane %v1582, %v1609
        %v1611 = vcombine.low %v1589, %v1603
        %v1612 = vcombine.high %v1589, %v1603
        %v1613 = vcombine.low %v1596, %v1610
        %v1614 = vcombine.high %v1596, %v1610
        %v1616 = vunpack.c.l.s4 1966171168
        %v1617 = vunpack.c.0.s8 %v1616
        %v1618 = vlaneseq
        %v1619 = vshrl.u32 %v1618, 7
        %v1620 = vsub.s32 %v1617, %v1619
        %v1621 = vrot.slane %v1611, %v1620
        %v1623 = vunpack.c.l.s4 1966171168
        %v1624 = vunpack.c.0.s8 %v1623
        %v1625 = vlaneseq
        %v1626 = vshrl.u32 %v1625, 7
        %v1627 = vsub.s32 %v1624, %v1626
        %v1628 = vrot.slane %v1613, %v1627
        %v1630 = vunpack.c.l.s4 1966171168
        %v1631 = vunpack.c.0.s8 %v1630
        %v1632 = vlaneseq
        %v1633 = vshrl.u32 %v1632, 7
        %v1634 = vsub.s32 %v1631, %v1633
        %v1635 = vrot.slane %v1612, %v1634
        %v1637 = vunpack.c.l.s4 1966171168
        %v1638 = vunpack.c.0.s8 %v1637
        %v1639 = vlaneseq
        %v1640 = vshrl.u32 %v1639, 7
        %v1641 = vsub.s32 %v1638, %v1640
        %v1642 = vrot.slane %v1614, %v1641
        %v1643 = vcombine.high %v1621, %v1621
        %v1644 = vcombine.high %v1628, %v1628
        %v1645 = vcombine.high %v1635, %v1635
        %v1646 = vcombine.high %v1642, %v1642
        %v1655 = vadd.f32 %v1418, %v1621
        %v1656 = vadd.f32 %v1420, %v1635
        %v1657 = vadd.f32 %v1422, %v1643
        %v1658 = vadd.f32 %v1424, %v1645
        %v1659 = vadd.f32 %v1426, %v1628
        %v1660 = vadd.f32 %v1428, %v1642
        %v1661 = vadd.f32 %v1430, %v1644
        %v1662 = vadd.f32 %v1432, %v1646
        %v1663 = vxor.u32 %v1655, 2147483648
        %v1664 = vxor.u32 %v1656, 2147483648
        %v1665 = vxor.u32 %v1657, 2147483648
        %v1666 = vxor.u32 %v1658, 2147483648
        %v1667 = vxor.u32 %v1659, 2147483648
        %v1668 = vxor.u32 %v1660, 2147483648
        %v1669 = vxor.u32 %v1661, 2147483648
        %v1670 = vxor.u32 %v1662, 2147483648
        %v1671 = vmul.f32 %v1663, 1.442695
        %v1672 = vpow.pop %v1671
        %v1673 = vmul.f32 %v1664, 1.442695
        %v1674 = vpow.pop %v1673
        %v1675 = vmul.f32 %v1665, 1.442695
        %v1676 = vpow.pop %v1675
        %v1677 = vmul.f32 %v1666, 1.442695
        %v1678 = vpow.pop %v1677
        %v1679 = vmul.f32 %v1667, 1.442695
        %v1680 = vpow.pop %v1679
        %v1681 = vmul.f32 %v1668, 1.442695
        %v1682 = vpow.pop %v1681
        %v1683 = vmul.f32 %v1669, 1.442695
        %v1684 = vpow.pop %v1683
        %v1685 = vmul.f32 %v1670, 1.442695
        %v1686 = vpow.pop %v1685
        %v1687 = vadd.f32 %v1672, 1.0
        %v1688 = vadd.f32 %v1674, 1.0
        %v1689 = vadd.f32 %v1676, 1.0
        %v1690 = vadd.f32 %v1678, 1.0
        %v1691 = vadd.f32 %v1680, 1.0
        %v1692 = vadd.f32 %v1682, 1.0
        %v1693 = vadd.f32 %v1684, 1.0
        %v1694 = vadd.f32 %v1686, 1.0
        %v1695 = vrcp.pop %v1687
        %v1696 = vmul.f32 1.0, %v1695
        %v1697 = vrcp.pop %v1688
        %v1698 = vmul.f32 1.0, %v1697
        %v1699 = vrcp.pop %v1689
        %v1700 = vmul.f32 1.0, %v1699
        %v1701 = vrcp.pop %v1690
        %v1702 = vmul.f32 1.0, %v1701
        %v1703 = vrcp.pop %v1691
        %v1704 = vmul.f32 1.0, %v1703
        %v1705 = vrcp.pop %v1692
        %v1706 = vmul.f32 1.0, %v1705
        %v1707 = vrcp.pop %v1693
        %v1708 = vmul.f32 1.0, %v1707
        %v1709 = vrcp.pop %v1694
        %v1710 = vmul.f32 1.0, %v1709
        %v1719 = vrot.slane %v1655, 1
        %v1720 = vrot.slane %v1656, 1
        %v1721 = vrot.slane %v1657, 1
        %v1722 = vrot.slane %v1658, 1
        %v1723 = vrot.slane %v1659, 1
        %v1724 = vrot.slane %v1660, 1
        %v1725 = vrot.slane %v1661, 1
        %v1726 = vrot.slane %v1662, 1
        %v1735 = vxor.u32 %v1719, 2147483648
        %v1736 = vxor.u32 %v1720, 2147483648
        %v1737 = vxor.u32 %v1721, 2147483648
        %v1738 = vxor.u32 %v1722, 2147483648
        %v1739 = vxor.u32 %v1723, 2147483648
        %v1740 = vxor.u32 %v1724, 2147483648
        %v1741 = vxor.u32 %v1725, 2147483648
        %v1742 = vxor.u32 %v1726, 2147483648
        %v1743 = vmul.f32 %v1735, 1.442695
        %v1744 = vpow.pop %v1743
        %v1745 = vmul.f32 %v1736, 1.442695
        %v1746 = vpow.pop %v1745
        %v1747 = vmul.f32 %v1737, 1.442695
        %v1748 = vpow.pop %v1747
        %v1749 = vmul.f32 %v1738, 1.442695
        %v1750 = vpow.pop %v1749
        %v1751 = vmul.f32 %v1739, 1.442695
        %v1752 = vpow.pop %v1751
        %v1753 = vmul.f32 %v1740, 1.442695
        %v1754 = vpow.pop %v1753
        %v1755 = vmul.f32 %v1741, 1.442695
        %v1756 = vpow.pop %v1755
        %v1757 = vmul.f32 %v1742, 1.442695
        %v1758 = vpow.pop %v1757
        %v1759 = vadd.f32 %v1744, 1.0
        %v1760 = vadd.f32 %v1746, 1.0
        %v1761 = vadd.f32 %v1748, 1.0
        %v1762 = vadd.f32 %v1750, 1.0
        %v1763 = vadd.f32 %v1752, 1.0
        %v1764 = vadd.f32 %v1754, 1.0
        %v1765 = vadd.f32 %v1756, 1.0
        %v1766 = vadd.f32 %v1758, 1.0
        %v1767 = vrcp.pop %v1759
        %v1768 = vmul.f32 1.0, %v1767
        %v1769 = vrcp.pop %v1760
        %v1770 = vmul.f32 1.0, %v1769
        %v1771 = vrcp.pop %v1761
        %v1772 = vmul.f32 1.0, %v1771
        %v1773 = vrcp.pop %v1762
        %v1774 = vmul.f32 1.0, %v1773
        %v1775 = vrcp.pop %v1763
        %v1776 = vmul.f32 1.0, %v1775
        %v1777 = vrcp.pop %v1764
        %v1778 = vmul.f32 1.0, %v1777
        %v1779 = vrcp.pop %v1765
        %v1780 = vmul.f32 1.0, %v1779
        %v1781 = vrcp.pop %v1766
        %v1782 = vmul.f32 1.0, %v1781
        %v1783 = vrot.slane %v1655, 2
        %v1784 = vrot.slane %v1656, 2
        %v1785 = vrot.slane %v1657, 2
        %v1786 = vrot.slane %v1658, 2
        %v1787 = vrot.slane %v1659, 2
        %v1788 = vrot.slane %v1660, 2
        %v1789 = vrot.slane %v1661, 2
        %v1790 = vrot.slane %v1662, 2
        %v1799 = vtanh.pop %v1783
        %v1800 = vtanh.pop %v1784
        %v1801 = vtanh.pop %v1785
        %v1802 = vtanh.pop %v1786
        %v1803 = vtanh.pop %v1787
        %v1804 = vtanh.pop %v1788
        %v1805 = vtanh.pop %v1789
        %v1806 = vtanh.pop %v1790
        %v1807 = vrot.slane %v1655, 3
        %v1808 = vrot.slane %v1656, 3
        %v1809 = vrot.slane %v1657, 3
        %v1810 = vrot.slane %v1658, 3
        %v1811 = vrot.slane %v1659, 3
        %v1812 = vrot.slane %v1660, 3
        %v1813 = vrot.slane %v1661, 3
        %v1814 = vrot.slane %v1662, 3
        %v1823 = vxor.u32 %v1807, 2147483648
        %v1824 = vxor.u32 %v1808, 2147483648
        %v1825 = vxor.u32 %v1809, 2147483648
        %v1826 = vxor.u32 %v1810, 2147483648
        %v1827 = vxor.u32 %v1811, 2147483648
        %v1828 = vxor.u32 %v1812, 2147483648
        %v1829 = vxor.u32 %v1813, 2147483648
        %v1830 = vxor.u32 %v1814, 2147483648
        %v1831 = vmul.f32 %v1823, 1.442695
        %v1832 = vpow.pop %v1831
        %v1833 = vmul.f32 %v1824, 1.442695
        %v1834 = vpow.pop %v1833
        %v1835 = vmul.f32 %v1825, 1.442695
        %v1836 = vpow.pop %v1835
        %v1837 = vmul.f32 %v1826, 1.442695
        %v1838 = vpow.pop %v1837
        %v1839 = vmul.f32 %v1827, 1.442695
        %v1840 = vpow.pop %v1839
        %v1841 = vmul.f32 %v1828, 1.442695
        %v1842 = vpow.pop %v1841
        %v1843 = vmul.f32 %v1829, 1.442695
        %v1844 = vpow.pop %v1843
        %v1845 = vmul.f32 %v1830, 1.442695
        %v1846 = vpow.pop %v1845
        %v1847 = vadd.f32 %v1832, 1.0
        %v1848 = vadd.f32 %v1834, 1.0
        %v1849 = vadd.f32 %v1836, 1.0
        %v1850 = vadd.f32 %v1838, 1.0
        %v1851 = vadd.f32 %v1840, 1.0
        %v1852 = vadd.f32 %v1842, 1.0
        %v1853 = vadd.f32 %v1844, 1.0
        %v1854 = vadd.f32 %v1846, 1.0
        %v1855 = vrcp.pop %v1847
        %v1856 = vmul.f32 1.0, %v1855
        %v1857 = vrcp.pop %v1848
        %v1858 = vmul.f32 1.0, %v1857
        %v1859 = vrcp.pop %v1849
        %v1860 = vmul.f32 1.0, %v1859
        %v1861 = vrcp.pop %v1850
        %v1862 = vmul.f32 1.0, %v1861
        %v1863 = vrcp.pop %v1851
        %v1864 = vmul.f32 1.0, %v1863
        %v1865 = vrcp.pop %v1852
        %v1866 = vmul.f32 1.0, %v1865
        %v1867 = vrcp.pop %v1853
        %v1868 = vmul.f32 1.0, %v1867
        %v1869 = vrcp.pop %v1854
        %v1870 = vmul.f32 1.0, %v1869
        %v1872 = vcombine.high %v1290, %v1290
        %v1874 = vunpack.c.l.s4 1966171168
        %v1875 = vunpack.c.0.s8 %v1874
        %v1876 = vlaneseq
        %v1877 = vshrl.u32 %v1876, 7
        %v1878 = vsub.s32 %v1875, %v1877
        %v1879 = vrot.slane %v1290, %v1878
        %v1881 = vunpack.c.l.s4 1966171168
        %v1882 = vunpack.c.0.s8 %v1881
        %v1883 = vlaneseq
        %v1884 = vshrl.u32 %v1883, 7
        %v1885 = vsub.s32 %v1882, %v1884
        %v1886 = vrot.slane %v1872, %v1885
        %v1887 = vcombine.high %v1879, %v1879
        %v1888 = vcombine.high %v1886, %v1886
        %v1890 = vunpack.c.l.s4 1966171168
        %v1891 = vunpack.c.0.s8 %v1890
        %v1892 = vlaneseq
        %v1893 = vshrl.u32 %v1892, 7
        %v1894 = vsub.s32 %v1891, %v1893
        %v1895 = vrot.slane %v1879, %v1894
        %v1897 = vunpack.c.l.s4 1966171168
        %v1898 = vunpack.c.0.s8 %v1897
        %v1899 = vlaneseq
        %v1900 = vshrl.u32 %v1899, 7
        %v1901 = vsub.s32 %v1898, %v1900
        %v1902 = vrot.slane %v1886, %v1901
        %v1904 = vunpack.c.l.s4 1966171168
        %v1905 = vunpack.c.0.s8 %v1904
        %v1906 = vlaneseq
        %v1907 = vshrl.u32 %v1906, 7
        %v1908 = vsub.s32 %v1905, %v1907
        %v1909 = vrot.slane %v1887, %v1908
        %v1911 = vunpack.c.l.s4 1966171168
        %v1912 = vunpack.c.0.s8 %v1911
        %v1913 = vlaneseq
        %v1914 = vshrl.u32 %v1913, 7
        %v1915 = vsub.s32 %v1912, %v1914
        %v1916 = vrot.slane %v1888, %v1915
        %v1917 = vcombine.high %v1895, %v1895
        %v1918 = vcombine.high %v1902, %v1902
        %v1919 = vcombine.high %v1909, %v1909
        %v1920 = vcombine.high %v1916, %v1916
        %v1929 = vmul.f32 %v1768, %v1895
        %v1930 = vmul.f32 %v1770, %v1909
        %v1931 = vmul.f32 %v1772, %v1917
        %v1932 = vmul.f32 %v1774, %v1919
        %v1933 = vmul.f32 %v1776, %v1902
        %v1934 = vmul.f32 %v1778, %v1916
        %v1935 = vmul.f32 %v1780, %v1918
        %v1936 = vmul.f32 %v1782, %v1920
        %v1937 = vmul.f32 %v1696, %v1799
        %v1938 = vmul.f32 %v1698, %v1800
        %v1939 = vmul.f32 %v1700, %v1801
        %v1940 = vmul.f32 %v1702, %v1802
        %v1941 = vmul.f32 %v1704, %v1803
        %v1942 = vmul.f32 %v1706, %v1804
        %v1943 = vmul.f32 %v1708, %v1805
        %v1944 = vmul.f32 %v1710, %v1806
        %v1945 = vadd.f32 %v1929, %v1937
        %v1946 = vadd.f32 %v1930, %v1938
        %v1947 = vadd.f32 %v1931, %v1939
        %v1948 = vadd.f32 %v1932, %v1940
        %v1949 = vadd.f32 %v1933, %v1941
        %v1950 = vadd.f32 %v1934, %v1942
        %v1951 = vadd.f32 %v1935, %v1943
        %v1952 = vadd.f32 %v1936, %v1944
        %v1953 = vtanh.pop %v1945
        %v1954 = vtanh.pop %v1946
        %v1955 = vtanh.pop %v1947
        %v1956 = vtanh.pop %v1948
        %v1957 = vtanh.pop %v1949
        %v1958 = vtanh.pop %v1950
        %v1959 = vtanh.pop %v1951
        %v1960 = vtanh.pop %v1952
        %v1961 = vmul.f32 %v1856, %v1953
        %v1962 = vmul.f32 %v1858, %v1954
        %v1963 = vmul.f32 %v1860, %v1955
        %v1964 = vmul.f32 %v1862, %v1956
        %v1965 = vmul.f32 %v1864, %v1957
        %v1966 = vmul.f32 %v1866, %v1958
        %v1967 = vmul.f32 %v1868, %v1959
        %v1968 = vmul.f32 %v1870, %v1960
        %s1969 = sadd.s32 %s671, 1
        %v1970 = vstv %s1969
        %vm1971 = vcmp.gt.s32.totalorder %v670, %v1970
        %v1972 = vsel %vm1971, 1, 0
        %1973 = vset.pattern.permute.xlu0 0
        %1974 = vperm.xlu0 %1973, %v1972
        %v1975 = vpop.permute.xlu0 %1974
        %vm1976 = vcmp.eq.s32.totalorder %v1975, 1
        %v1985 = vcombine.low %v1945, %v1946
        %v1986 = vcombine.low %v1947, %v1948
        %v1987 = vcombine.low %v1949, %v1950
        %v1988 = vcombine.low %v1951, %v1952
        %v1990 = vunpack.c.l.s4 1966171168
        %v1991 = vunpack.c.0.s8 %v1990
        %v1992 = vlaneseq
        %v1993 = vshrl.u32 %v1992, 7
        %v1994 = vsub.s32 %v1991, %v1993
        %v1995 = vrot.slane %v1985, %v1994
        %v1997 = vunpack.c.l.s4 1966171168
        %v1998 = vunpack.c.0.s8 %v1997
        %v1999 = vlaneseq
        %v2000 = vshrl.u32 %v1999, 7
        %v2001 = vsub.s32 %v1998, %v2000
        %v2002 = vrot.slane %v1986, %v2001
        %v2004 = vunpack.c.l.s4 1966171168
        %v2005 = vunpack.c.0.s8 %v2004
        %v2006 = vlaneseq
        %v2007 = vshrl.u32 %v2006, 7
        %v2008 = vsub.s32 %v2005, %v2007
        %v2009 = vrot.slane %v1987, %v2008
        %v2011 = vunpack.c.l.s4 1966171168
        %v2012 = vunpack.c.0.s8 %v2011
        %v2013 = vlaneseq
        %v2014 = vshrl.u32 %v2013, 7
        %v2015 = vsub.s32 %v2012, %v2014
        %v2016 = vrot.slane %v1988, %v2015
        %v2017 = vcombine.low %v1995, %v2002
        %v2018 = vcombine.low %v2009, %v2016
        %v2020 = vunpack.c.l.s4 1966171168
        %v2021 = vunpack.c.0.s8 %v2020
        %v2022 = vlaneseq
        %v2023 = vshrl.u32 %v2022, 7
        %v2024 = vsub.s32 %v2021, %v2023
        %v2025 = vrot.slane %v2017, %v2024
        %v2027 = vunpack.c.l.s4 1966171168
        %v2028 = vunpack.c.0.s8 %v2027
        %v2029 = vlaneseq
        %v2030 = vshrl.u32 %v2029, 7
        %v2031 = vsub.s32 %v2028, %v2030
        %v2032 = vrot.slane %v2018, %v2031
        %v2033 = vcombine.low %v2025, %v2032
        %v2035 = vsel %vm1976, %v2033, %v1290
        %v2044 = vcombine.low %v1961, %v1962
        %v2045 = vcombine.low %v1963, %v1964
        %v2046 = vcombine.low %v1965, %v1966
        %v2047 = vcombine.low %v1967, %v1968
        %v2049 = vunpack.c.l.s4 1966171168
        %v2050 = vunpack.c.0.s8 %v2049
        %v2051 = vlaneseq
        %v2052 = vshrl.u32 %v2051, 7
        %v2053 = vsub.s32 %v2050, %v2052
        %v2054 = vrot.slane %v2044, %v2053
        %v2056 = vunpack.c.l.s4 1966171168
        %v2057 = vunpack.c.0.s8 %v2056
        %v2058 = vlaneseq
        %v2059 = vshrl.u32 %v2058, 7
        %v2060 = vsub.s32 %v2057, %v2059
        %v2061 = vrot.slane %v2045, %v2060
        %v2063 = vunpack.c.l.s4 1966171168
        %v2064 = vunpack.c.0.s8 %v2063
        %v2065 = vlaneseq
        %v2066 = vshrl.u32 %v2065, 7
        %v2067 = vsub.s32 %v2064, %v2066
        %v2068 = vrot.slane %v2046, %v2067
        %v2070 = vunpack.c.l.s4 1966171168
        %v2071 = vunpack.c.0.s8 %v2070
        %v2072 = vlaneseq
        %v2073 = vshrl.u32 %v2072, 7
        %v2074 = vsub.s32 %v2071, %v2073
        %v2075 = vrot.slane %v2047, %v2074
        %v2076 = vcombine.low %v2054, %v2061
        %v2077 = vcombine.low %v2068, %v2075
        %v2079 = vunpack.c.l.s4 1966171168
        %v2080 = vunpack.c.0.s8 %v2079
        %v2081 = vlaneseq
        %v2082 = vshrl.u32 %v2081, 7
        %v2083 = vsub.s32 %v2080, %v2082
        %v2084 = vrot.slane %v2076, %v2083
        %v2086 = vunpack.c.l.s4 1966171168
        %v2087 = vunpack.c.0.s8 %v2086
        %v2088 = vlaneseq
        %v2089 = vshrl.u32 %v2088, 7
        %v2090 = vsub.s32 %v2087, %v2089
        %v2091 = vrot.slane %v2077, %v2090
        %v2092 = vcombine.low %v2084, %v2091
        %v2094 = vsel %vm1976, %v2092, %v1349
        %v2095 = vsel %vm1976, %v2092, 0.0
        %v2097 = vcombine.high %v2095, %v2095
        %v2099 = vunpack.c.l.s4 1966171168
        %v2100 = vunpack.c.0.s8 %v2099
        %v2101 = vlaneseq
        %v2102 = vshrl.u32 %v2101, 7
        %v2103 = vsub.s32 %v2100, %v2102
        %v2104 = vrot.slane %v2095, %v2103
        %v2106 = vunpack.c.l.s4 1966171168
        %v2107 = vunpack.c.0.s8 %v2106
        %v2108 = vlaneseq
        %v2109 = vshrl.u32 %v2108, 7
        %v2110 = vsub.s32 %v2107, %v2109
        %v2111 = vrot.slane %v2097, %v2110
        %v2112 = vcombine.high %v2104, %v2104
        %v2113 = vcombine.high %v2111, %v2111
        %v2115 = vunpack.c.l.s4 1966171168
        %v2116 = vunpack.c.0.s8 %v2115
        %v2117 = vlaneseq
        %v2118 = vshrl.u32 %v2117, 7
        %v2119 = vsub.s32 %v2116, %v2118
        %v2120 = vrot.slane %v2104, %v2119
        %v2122 = vunpack.c.l.s4 1966171168
        %v2123 = vunpack.c.0.s8 %v2122
        %v2124 = vlaneseq
        %v2125 = vshrl.u32 %v2124, 7
        %v2126 = vsub.s32 %v2123, %v2125
        %v2127 = vrot.slane %v2111, %v2126
        %v2129 = vunpack.c.l.s4 1966171168
        %v2130 = vunpack.c.0.s8 %v2129
        %v2131 = vlaneseq
        %v2132 = vshrl.u32 %v2131, 7
        %v2133 = vsub.s32 %v2130, %v2132
        %v2134 = vrot.slane %v2112, %v2133
        %v2136 = vunpack.c.l.s4 1966171168
        %v2137 = vunpack.c.0.s8 %v2136
        %v2138 = vlaneseq
        %v2139 = vshrl.u32 %v2138, 7
        %v2140 = vsub.s32 %v2137, %v2139
        %v2141 = vrot.slane %v2113, %v2140
        %v2142 = vcombine.high %v2120, %v2120
        %v2143 = vcombine.high %v2127, %v2127
        %v2144 = vcombine.high %v2134, %v2134
        %v2145 = vcombine.high %v2141, %v2141
        %2154 = vst [vmem:[%s270 + $0x1] sm:$0x1] %v2120
        %2155 = vst [vmem:[%s270 + $0x9] sm:$0x1] %v2134
        %2156 = vst [vmem:[%s270 + $0x11] sm:$0x1] %v2142
        %2157 = vst [vmem:[%s270 + $0x19] sm:$0x1] %v2144
        %2158 = vst [vmem:[%s270 + $0x21] sm:$0x1] %v2127
        %2159 = vst [vmem:[%s270 + $0x29] sm:$0x1] %v2141
        %2160 = vst [vmem:[%s270 + $0x31] sm:$0x1] %v2143
        %2161 = vst [vmem:[%s270 + $0x39] sm:$0x1] %v2145
        %s2162 = scalar_lea.vmem [#allocation4], 2
        %v2163 = vld [vmem:[%s2162] ss:$8 sm:$0xf]
        %s2164 = scalar_lea.vmem [#allocation4], 34
        %v2165 = vld [vmem:[%s2164] ss:$8 sm:$0xf]
        %s2166 = scalar_lea.vmem [#allocation4], 66
        %v2167 = vld [vmem:[%s2166] ss:$8 sm:$0xf]
        %s2168 = scalar_lea.vmem [#allocation4], 98
        %v2169 = vld [vmem:[%s2168] ss:$8 sm:$0xf]
        %s2170 = scalar_lea.vmem [#allocation4], 130
        %v2171 = vld [vmem:[%s2170] ss:$8 sm:$0xf]
        %s2172 = scalar_lea.vmem [#allocation4], 162
        %v2173 = vld [vmem:[%s2172] ss:$8 sm:$0xf]
        %s2174 = scalar_lea.vmem [#allocation4], 194
        %v2175 = vld [vmem:[%s2174] ss:$8 sm:$0xf]
        %s2176 = scalar_lea.vmem [#allocation4], 226
        %v2177 = vld [vmem:[%s2176] ss:$8 sm:$0xf]
        %2178 = vmatprep.subr.mxu0 %v607
        %2179 = vmatpush1.msra.mxu0 %v606
        %2180 = vmatprep.subr.mxu0 %v611
        %2181 = vmatpush1.msra.mxu0 %v610
        %2182 = vmatprep.subr.mxu0 %v615
        %2183 = vmatpush1.msra.mxu0 %v614
        %2184 = vmatprep.subr.mxu0 %v619
        %2185 = vmatpush1.msra.mxu0 %v618
        %2186 = vmatprep.subr.mxu0 %v623
        %2187 = vmatpush1.msra.mxu0 %v622
        %2188 = vmatprep.subr.mxu0 %v627
        %2189 = vmatpush1.msra.mxu0 %v626
        %2190 = vmatprep.subr.mxu0 %v631
        %2191 = vmatpush1.msra.mxu0 %v630
        %2192 = vmatprep.subr.mxu0 %v635
        %2193 = vmatpush1.msra.mxu0 %v634
        %2194 = vmatprep.subr.mxu0 %v639
        %2195 = vmatpush1.msra.mxu0 %v638
        %2196 = vmatprep.subr.mxu0 %v643
        %2197 = vmatpush1.msra.mxu0 %v642
        %2198 = vmatprep.subr.mxu0 %v647
        %2199 = vmatpush1.msra.mxu0 %v646
        %2200 = vmatprep.subr.mxu0 %v651
        %2201 = vmatpush1.msra.mxu0 %v650
        %2202 = vmatprep.subr.mxu0 %v655
        %2203 = vmatpush1.msra.mxu0 %v654
        %2204 = vmatprep.subr.mxu0 %v659
        %2205 = vmatpush1.msra.mxu0 %v658
        %2206 = vmatprep.subr.mxu0 %v663
        %2207 = vmatpush1.msra.mxu0 %v662
        %2208 = vmatprep.subr.mxu0 %v667
        %2209 = vmatpush1.msra.mxu0 %v666
        %2210 = vmatprep.subr.mxu0 0.0
        %2211 = vmatpush1.msra.mxu0 0.0
        %2212 = vmatprep.subr.mxu0 0.0
        %2213 = vmatpush1.msra.mxu0 0.0
        %2214 = vmatprep.subr.mxu0 0.0
        %2215 = vmatpush1.msra.mxu0 0.0
        %2216 = vmatprep.subr.mxu0 0.0
        %2217 = vmatpush1.msra.mxu0 0.0
        %2218 = vmatprep.subr.mxu0 0.0
        %2219 = vmatpush1.msra.mxu0 0.0
        %2220 = vmatprep.subr.mxu0 0.0
        %2221 = vmatpush1.msra.mxu0 0.0
        %2222 = vmatprep.subr.mxu0 0.0
        %2223 = vmatpush1.msra.mxu0 0.0
        %2224 = vmatprep.subr.mxu0 0.0
        %2225 = vmatpush1.msra.mxu0 0.0
        %2226 = vmatprep.subr.mxu0 0.0
        %2227 = vmatpush1.msra.mxu0 0.0
        %2228 = vmatprep.subr.mxu0 0.0
        %2229 = vmatpush1.msra.mxu0 0.0
        %2230 = vmatprep.subr.mxu0 0.0
        %2231 = vmatpush1.msra.mxu0 0.0
        %2232 = vmatprep.subr.mxu0 0.0
        %2233 = vmatpush1.msra.mxu0 0.0
        %2234 = vmatprep.subr.mxu0 0.0
        %2235 = vmatpush1.msra.mxu0 0.0
        %2236 = vmatprep.subr.mxu0 0.0
        %2237 = vmatpush1.msra.mxu0 0.0
        %2238 = vmatprep.subr.mxu0 0.0
        %2239 = vmatpush1.msra.mxu0 0.0
        %2240 = vmatprep.subr.mxu0 0.0
        %2241 = vmatpush1.msra.mxu0 0.0
        %2242 = vmatprep.mubr.f32.mxu0 0.0
        %2243 = vmatmul.mubr.f32.gmra.mrb[0].mxu0 %v2094
        %v2244 = vpop.f32.mrb[0].mxu0
        %v2245 = vadd.f32 0.0, %v2244
        %v2246 = vpop.f32.mrb[0].mxu0
        %v2247 = vadd.f32 0.0, %v2246
        %2248 = vdwg.mxu0
        %2249 = vmatprep.subr.mxu0 %v609
        %2250 = vmatpush1.msra.mxu0 %v608
        %2251 = vmatprep.subr.mxu0 %v613
        %2252 = vmatpush1.msra.mxu0 %v612
        %2253 = vmatprep.subr.mxu0 %v617
        %2254 = vmatpush1.msra.mxu0 %v616
        %2255 = vmatprep.subr.mxu0 %v621
        %2256 = vmatpush1.msra.mxu0 %v620
        %2257 = vmatprep.subr.mxu0 %v625
        %2258 = vmatpush1.msra.mxu0 %v624
        %2259 = vmatprep.subr.mxu0 %v629
        %2260 = vmatpush1.msra.mxu0 %v628
        %2261 = vmatprep.subr.mxu0 %v633
        %2262 = vmatpush1.msra.mxu0 %v632
        %2263 = vmatprep.subr.mxu0 %v637
        %2264 = vmatpush1.msra.mxu0 %v636
        %2265 = vmatprep.subr.mxu0 %v641
        %2266 = vmatpush1.msra.mxu0 %v640
        %2267 = vmatprep.subr.mxu0 %v645
        %2268 = vmatpush1.msra.mxu0 %v644
        %2269 = vmatprep.subr.mxu0 %v649
        %2270 = vmatpush1.msra.mxu0 %v648
        %2271 = vmatprep.subr.mxu0 %v653
        %2272 = vmatpush1.msra.mxu0 %v652
        %2273 = vmatprep.subr.mxu0 %v657
        %2274 = vmatpush1.msra.mxu0 %v656
        %2275 = vmatprep.subr.mxu0 %v661
        %2276 = vmatpush1.msra.mxu0 %v660
        %2277 = vmatprep.subr.mxu0 %v665
        %2278 = vmatpush1.msra.mxu0 %v664
        %2279 = vmatprep.subr.mxu0 %v669
        %2280 = vmatpush1.msra.mxu0 %v668
        %2281 = vmatprep.subr.mxu0 0.0
        %2282 = vmatpush1.msra.mxu0 0.0
        %2283 = vmatprep.subr.mxu0 0.0
        %2284 = vmatpush1.msra.mxu0 0.0
        %2285 = vmatprep.subr.mxu0 0.0
        %2286 = vmatpush1.msra.mxu0 0.0
        %2287 = vmatprep.subr.mxu0 0.0
        %2288 = vmatpush1.msra.mxu0 0.0
        %2289 = vmatprep.subr.mxu0 0.0
        %2290 = vmatpush1.msra.mxu0 0.0
        %2291 = vmatprep.subr.mxu0 0.0
        %2292 = vmatpush1.msra.mxu0 0.0
        %2293 = vmatprep.subr.mxu0 0.0
        %2294 = vmatpush1.msra.mxu0 0.0
        %2295 = vmatprep.subr.mxu0 0.0
        %2296 = vmatpush1.msra.mxu0 0.0
        %2297 = vmatprep.subr.mxu0 0.0
        %2298 = vmatpush1.msra.mxu0 0.0
        %2299 = vmatprep.subr.mxu0 0.0
        %2300 = vmatpush1.msra.mxu0 0.0
        %2301 = vmatprep.subr.mxu0 0.0
        %2302 = vmatpush1.msra.mxu0 0.0
        %2303 = vmatprep.subr.mxu0 0.0
        %2304 = vmatpush1.msra.mxu0 0.0
        %2305 = vmatprep.subr.mxu0 0.0
        %2306 = vmatpush1.msra.mxu0 0.0
        %2307 = vmatprep.subr.mxu0 0.0
        %2308 = vmatpush1.msra.mxu0 0.0
        %2309 = vmatprep.subr.mxu0 0.0
        %2310 = vmatpush1.msra.mxu0 0.0
        %2311 = vmatprep.subr.mxu0 0.0
        %2312 = vmatpush1.msra.mxu0 0.0
        %2313 = vmatprep.mubr.f32.mxu0 0.0
        %2314 = vmatmul.mubr.f32.gmra.mrb[0].mxu0 %v2094
        %v2315 = vpop.f32.mrb[0].mxu0
        %v2316 = vadd.f32 0.0, %v2315
        %v2317 = vpop.f32.mrb[0].mxu0
        %v2318 = vadd.f32 0.0, %v2317
        %2319 = vdwg.mxu0
        %v2324 = vcombine.low %v2245, %v2247
        %v2325 = vcombine.high %v2245, %v2247
        %v2326 = vcombine.low %v2316, %v2318
        %v2327 = vcombine.high %v2316, %v2318
        %v2329 = vunpack.c.l.s4 1966171168
        %v2330 = vunpack.c.0.s8 %v2329
        %v2331 = vlaneseq
        %v2332 = vshrl.u32 %v2331, 7
        %v2333 = vsub.s32 %v2330, %v2332
        %v2334 = vrot.slane %v2324, %v2333
        %v2336 = vunpack.c.l.s4 1966171168
        %v2337 = vunpack.c.0.s8 %v2336
        %v2338 = vlaneseq
        %v2339 = vshrl.u32 %v2338, 7
        %v2340 = vsub.s32 %v2337, %v2339
        %v2341 = vrot.slane %v2325, %v2340
        %v2343 = vunpack.c.l.s4 1966171168
        %v2344 = vunpack.c.0.s8 %v2343
        %v2345 = vlaneseq
        %v2346 = vshrl.u32 %v2345, 7
        %v2347 = vsub.s32 %v2344, %v2346
        %v2348 = vrot.slane %v2326, %v2347
        %v2350 = vunpack.c.l.s4 1966171168
        %v2351 = vunpack.c.0.s8 %v2350
        %v2352 = vlaneseq
        %v2353 = vshrl.u32 %v2352, 7
        %v2354 = vsub.s32 %v2351, %v2353
        %v2355 = vrot.slane %v2327, %v2354
        %v2356 = vcombine.low %v2334, %v2348
        %v2357 = vcombine.high %v2334, %v2348
        %v2358 = vcombine.low %v2341, %v2355
        %v2359 = vcombine.high %v2341, %v2355
        %v2361 = vunpack.c.l.s4 1966171168
        %v2362 = vunpack.c.0.s8 %v2361
        %v2363 = vlaneseq
        %v2364 = vshrl.u32 %v2363, 7
        %v2365 = vsub.s32 %v2362, %v2364
        %v2366 = vrot.slane %v2356, %v2365
        %v2368 = vunpack.c.l.s4 1966171168
        %v2369 = vunpack.c.0.s8 %v2368
        %v2370 = vlaneseq
        %v2371 = vshrl.u32 %v2370, 7
        %v2372 = vsub.s32 %v2369, %v2371
        %v2373 = vrot.slane %v2358, %v2372
        %v2375 = vunpack.c.l.s4 1966171168
        %v2376 = vunpack.c.0.s8 %v2375
        %v2377 = vlaneseq
        %v2378 = vshrl.u32 %v2377, 7
        %v2379 = vsub.s32 %v2376, %v2378
        %v2380 = vrot.slane %v2357, %v2379
        %v2382 = vunpack.c.l.s4 1966171168
        %v2383 = vunpack.c.0.s8 %v2382
        %v2384 = vlaneseq
        %v2385 = vshrl.u32 %v2384, 7
        %v2386 = vsub.s32 %v2383, %v2385
        %v2387 = vrot.slane %v2359, %v2386
        %v2388 = vcombine.high %v2366, %v2366
        %v2389 = vcombine.high %v2373, %v2373
        %v2390 = vcombine.high %v2380, %v2380
        %v2391 = vcombine.high %v2387, %v2387
        %v2400 = vadd.f32 %v2163, %v2366
        %v2401 = vadd.f32 %v2165, %v2380
        %v2402 = vadd.f32 %v2167, %v2388
        %v2403 = vadd.f32 %v2169, %v2390
        %v2404 = vadd.f32 %v2171, %v2373
        %v2405 = vadd.f32 %v2173, %v2387
        %v2406 = vadd.f32 %v2175, %v2389
        %v2407 = vadd.f32 %v2177, %v2391
        %v2408 = vxor.u32 %v2400, 2147483648
        %v2409 = vxor.u32 %v2401, 2147483648
        %v2410 = vxor.u32 %v2402, 2147483648
        %v2411 = vxor.u32 %v2403, 2147483648
        %v2412 = vxor.u32 %v2404, 2147483648
        %v2413 = vxor.u32 %v2405, 2147483648
        %v2414 = vxor.u32 %v2406, 2147483648
        %v2415 = vxor.u32 %v2407, 2147483648
        %v2416 = vmul.f32 %v2408, 1.442695
        %v2417 = vpow.pop %v2416
        %v2418 = vmul.f32 %v2409, 1.442695
        %v2419 = vpow.pop %v2418
        %v2420 = vmul.f32 %v2410, 1.442695
        %v2421 = vpow.pop %v2420
        %v2422 = vmul.f32 %v2411, 1.442695
        %v2423 = vpow.pop %v2422
        %v2424 = vmul.f32 %v2412, 1.442695
        %v2425 = vpow.pop %v2424
        %v2426 = vmul.f32 %v2413, 1.442695
        %v2427 = vpow.pop %v2426
        %v2428 = vmul.f32 %v2414, 1.442695
        %v2429 = vpow.pop %v2428
        %v2430 = vmul.f32 %v2415, 1.442695
        %v2431 = vpow.pop %v2430
        %v2432 = vadd.f32 %v2417, 1.0
        %v2433 = vadd.f32 %v2419, 1.0
        %v2434 = vadd.f32 %v2421, 1.0
        %v2435 = vadd.f32 %v2423, 1.0
        %v2436 = vadd.f32 %v2425, 1.0
        %v2437 = vadd.f32 %v2427, 1.0
        %v2438 = vadd.f32 %v2429, 1.0
        %v2439 = vadd.f32 %v2431, 1.0
        %v2440 = vrcp.pop %v2432
        %v2441 = vmul.f32 1.0, %v2440
        %v2442 = vrcp.pop %v2433
        %v2443 = vmul.f32 1.0, %v2442
        %v2444 = vrcp.pop %v2434
        %v2445 = vmul.f32 1.0, %v2444
        %v2446 = vrcp.pop %v2435
        %v2447 = vmul.f32 1.0, %v2446
        %v2448 = vrcp.pop %v2436
        %v2449 = vmul.f32 1.0, %v2448
        %v2450 = vrcp.pop %v2437
        %v2451 = vmul.f32 1.0, %v2450
        %v2452 = vrcp.pop %v2438
        %v2453 = vmul.f32 1.0, %v2452
        %v2454 = vrcp.pop %v2439
        %v2455 = vmul.f32 1.0, %v2454
        %v2464 = vrot.slane %v2400, 1
        %v2465 = vrot.slane %v2401, 1
        %v2466 = vrot.slane %v2402, 1
        %v2467 = vrot.slane %v2403, 1
        %v2468 = vrot.slane %v2404, 1
        %v2469 = vrot.slane %v2405, 1
        %v2470 = vrot.slane %v2406, 1
        %v2471 = vrot.slane %v2407, 1
        %v2480 = vxor.u32 %v2464, 2147483648
        %v2481 = vxor.u32 %v2465, 2147483648
        %v2482 = vxor.u32 %v2466, 2147483648
        %v2483 = vxor.u32 %v2467, 2147483648
        %v2484 = vxor.u32 %v2468, 2147483648
        %v2485 = vxor.u32 %v2469, 2147483648
        %v2486 = vxor.u32 %v2470, 2147483648
        %v2487 = vxor.u32 %v2471, 2147483648
        %v2488 = vmul.f32 %v2480, 1.442695
        %v2489 = vpow.pop %v2488
        %v2490 = vmul.f32 %v2481, 1.442695
        %v2491 = vpow.pop %v2490
        %v2492 = vmul.f32 %v2482, 1.442695
        %v2493 = vpow.pop %v2492
        %v2494 = vmul.f32 %v2483, 1.442695
        %v2495 = vpow.pop %v2494
        %v2496 = vmul.f32 %v2484, 1.442695
        %v2497 = vpow.pop %v2496
        %v2498 = vmul.f32 %v2485, 1.442695
        %v2499 = vpow.pop %v2498
        %v2500 = vmul.f32 %v2486, 1.442695
        %v2501 = vpow.pop %v2500
        %v2502 = vmul.f32 %v2487, 1.442695
        %v2503 = vpow.pop %v2502
        %v2504 = vadd.f32 %v2489, 1.0
        %v2505 = vadd.f32 %v2491, 1.0
        %v2506 = vadd.f32 %v2493, 1.0
        %v2507 = vadd.f32 %v2495, 1.0
        %v2508 = vadd.f32 %v2497, 1.0
        %v2509 = vadd.f32 %v2499, 1.0
        %v2510 = vadd.f32 %v2501, 1.0
        %v2511 = vadd.f32 %v2503, 1.0
        %v2512 = vrcp.pop %v2504
        %v2513 = vmul.f32 1.0, %v2512
        %v2514 = vrcp.pop %v2505
        %v2515 = vmul.f32 1.0, %v2514
        %v2516 = vrcp.pop %v2506
        %v2517 = vmul.f32 1.0, %v2516
        %v2518 = vrcp.pop %v2507
        %v2519 = vmul.f32 1.0, %v2518
        %v2520 = vrcp.pop %v2508
        %v2521 = vmul.f32 1.0, %v2520
        %v2522 = vrcp.pop %v2509
        %v2523 = vmul.f32 1.0, %v2522
        %v2524 = vrcp.pop %v2510
        %v2525 = vmul.f32 1.0, %v2524
        %v2526 = vrcp.pop %v2511
        %v2527 = vmul.f32 1.0, %v2526
        %v2528 = vrot.slane %v2400, 2
        %v2529 = vrot.slane %v2401, 2
        %v2530 = vrot.slane %v2402, 2
        %v2531 = vrot.slane %v2403, 2
        %v2532 = vrot.slane %v2404, 2
        %v2533 = vrot.slane %v2405, 2
        %v2534 = vrot.slane %v2406, 2
        %v2535 = vrot.slane %v2407, 2
        %v2544 = vtanh.pop %v2528
        %v2545 = vtanh.pop %v2529
        %v2546 = vtanh.pop %v2530
        %v2547 = vtanh.pop %v2531
        %v2548 = vtanh.pop %v2532
        %v2549 = vtanh.pop %v2533
        %v2550 = vtanh.pop %v2534
        %v2551 = vtanh.pop %v2535
        %v2552 = vrot.slane %v2400, 3
        %v2553 = vrot.slane %v2401, 3
        %v2554 = vrot.slane %v2402, 3
        %v2555 = vrot.slane %v2403, 3
        %v2556 = vrot.slane %v2404, 3
        %v2557 = vrot.slane %v2405, 3
        %v2558 = vrot.slane %v2406, 3
        %v2559 = vrot.slane %v2407, 3
        %v2568 = vxor.u32 %v2552, 2147483648
        %v2569 = vxor.u32 %v2553, 2147483648
        %v2570 = vxor.u32 %v2554, 2147483648
        %v2571 = vxor.u32 %v2555, 2147483648
        %v2572 = vxor.u32 %v2556, 2147483648
        %v2573 = vxor.u32 %v2557, 2147483648
        %v2574 = vxor.u32 %v2558, 2147483648
        %v2575 = vxor.u32 %v2559, 2147483648
        %v2576 = vmul.f32 %v2568, 1.442695
        %v2577 = vpow.pop %v2576
        %v2578 = vmul.f32 %v2569, 1.442695
        %v2579 = vpow.pop %v2578
        %v2580 = vmul.f32 %v2570, 1.442695
        %v2581 = vpow.pop %v2580
        %v2582 = vmul.f32 %v2571, 1.442695
        %v2583 = vpow.pop %v2582
        %v2584 = vmul.f32 %v2572, 1.442695
        %v2585 = vpow.pop %v2584
        %v2586 = vmul.f32 %v2573, 1.442695
        %v2587 = vpow.pop %v2586
        %v2588 = vmul.f32 %v2574, 1.442695
        %v2589 = vpow.pop %v2588
        %v2590 = vmul.f32 %v2575, 1.442695
        %v2591 = vpow.pop %v2590
        %v2592 = vadd.f32 %v2577, 1.0
        %v2593 = vadd.f32 %v2579, 1.0
        %v2594 = vadd.f32 %v2581, 1.0
        %v2595 = vadd.f32 %v2583, 1.0
        %v2596 = vadd.f32 %v2585, 1.0
        %v2597 = vadd.f32 %v2587, 1.0
        %v2598 = vadd.f32 %v2589, 1.0
        %v2599 = vadd.f32 %v2591, 1.0
        %v2600 = vrcp.pop %v2592
        %v2601 = vmul.f32 1.0, %v2600
        %v2602 = vrcp.pop %v2593
        %v2603 = vmul.f32 1.0, %v2602
        %v2604 = vrcp.pop %v2594
        %v2605 = vmul.f32 1.0, %v2604
        %v2606 = vrcp.pop %v2595
        %v2607 = vmul.f32 1.0, %v2606
        %v2608 = vrcp.pop %v2596
        %v2609 = vmul.f32 1.0, %v2608
        %v2610 = vrcp.pop %v2597
        %v2611 = vmul.f32 1.0, %v2610
        %v2612 = vrcp.pop %v2598
        %v2613 = vmul.f32 1.0, %v2612
        %v2614 = vrcp.pop %v2599
        %v2615 = vmul.f32 1.0, %v2614
        %v2617 = vcombine.high %v2035, %v2035
        %v2619 = vunpack.c.l.s4 1966171168
        %v2620 = vunpack.c.0.s8 %v2619
        %v2621 = vlaneseq
        %v2622 = vshrl.u32 %v2621, 7
        %v2623 = vsub.s32 %v2620, %v2622
        %v2624 = vrot.slane %v2035, %v2623
        %v2626 = vunpack.c.l.s4 1966171168
        %v2627 = vunpack.c.0.s8 %v2626
        %v2628 = vlaneseq
        %v2629 = vshrl.u32 %v2628, 7
        %v2630 = vsub.s32 %v2627, %v2629
        %v2631 = vrot.slane %v2617, %v2630
        %v2632 = vcombine.high %v2624, %v2624
        %v2633 = vcombine.high %v2631, %v2631
        %v2635 = vunpack.c.l.s4 1966171168
        %v2636 = vunpack.c.0.s8 %v2635
        %v2637 = vlaneseq
        %v2638 = vshrl.u32 %v2637, 7
        %v2639 = vsub.s32 %v2636, %v2638
        %v2640 = vrot.slane %v2624, %v2639
        %v2642 = vunpack.c.l.s4 1966171168
        %v2643 = vunpack.c.0.s8 %v2642
        %v2644 = vlaneseq
        %v2645 = vshrl.u32 %v2644, 7
        %v2646 = vsub.s32 %v2643, %v2645
        %v2647 = vrot.slane %v2631, %v2646
        %v2649 = vunpack.c.l.s4 1966171168
        %v2650 = vunpack.c.0.s8 %v2649
        %v2651 = vlaneseq
        %v2652 = vshrl.u32 %v2651, 7
        %v2653 = vsub.s32 %v2650, %v2652
        %v2654 = vrot.slane %v2632, %v2653
        %v2656 = vunpack.c.l.s4 1966171168
        %v2657 = vunpack.c.0.s8 %v2656
        %v2658 = vlaneseq
        %v2659 = vshrl.u32 %v2658, 7
        %v2660 = vsub.s32 %v2657, %v2659
        %v2661 = vrot.slane %v2633, %v2660
        %v2662 = vcombine.high %v2640, %v2640
        %v2663 = vcombine.high %v2647, %v2647
        %v2664 = vcombine.high %v2654, %v2654
        %v2665 = vcombine.high %v2661, %v2661
        %v2674 = vmul.f32 %v2513, %v2640
        %v2675 = vmul.f32 %v2515, %v2654
        %v2676 = vmul.f32 %v2517, %v2662
        %v2677 = vmul.f32 %v2519, %v2664
        %v2678 = vmul.f32 %v2521, %v2647
        %v2679 = vmul.f32 %v2523, %v2661
        %v2680 = vmul.f32 %v2525, %v2663
        %v2681 = vmul.f32 %v2527, %v2665
        %v2682 = vmul.f32 %v2441, %v2544
        %v2683 = vmul.f32 %v2443, %v2545
        %v2684 = vmul.f32 %v2445, %v2546
        %v2685 = vmul.f32 %v2447, %v2547
        %v2686 = vmul.f32 %v2449, %v2548
        %v2687 = vmul.f32 %v2451, %v2549
        %v2688 = vmul.f32 %v2453, %v2550
        %v2689 = vmul.f32 %v2455, %v2551
        %v2690 = vadd.f32 %v2674, %v2682
        %v2691 = vadd.f32 %v2675, %v2683
        %v2692 = vadd.f32 %v2676, %v2684
        %v2693 = vadd.f32 %v2677, %v2685
        %v2694 = vadd.f32 %v2678, %v2686
        %v2695 = vadd.f32 %v2679, %v2687
        %v2696 = vadd.f32 %v2680, %v2688
        %v2697 = vadd.f32 %v2681, %v2689
        %v2698 = vtanh.pop %v2690
        %v2699 = vtanh.pop %v2691
        %v2700 = vtanh.pop %v2692
        %v2701 = vtanh.pop %v2693
        %v2702 = vtanh.pop %v2694
        %v2703 = vtanh.pop %v2695
        %v2704 = vtanh.pop %v2696
        %v2705 = vtanh.pop %v2697
        %v2706 = vmul.f32 %v2601, %v2698
        %v2707 = vmul.f32 %v2603, %v2699
        %v2708 = vmul.f32 %v2605, %v2700
        %v2709 = vmul.f32 %v2607, %v2701
        %v2710 = vmul.f32 %v2609, %v2702
        %v2711 = vmul.f32 %v2611, %v2703
        %v2712 = vmul.f32 %v2613, %v2704
        %v2713 = vmul.f32 %v2615, %v2705
        %s2714 = sadd.s32 %s671, 2
        %v2715 = vstv %s2714
        %vm2716 = vcmp.gt.s32.totalorder %v670, %v2715
        %v2717 = vsel %vm2716, 1, 0
        %2718 = vset.pattern.permute.xlu0 0
        %2719 = vperm.xlu0 %2718, %v2717
        %v2720 = vpop.permute.xlu0 %2719
        %vm2721 = vcmp.eq.s32.totalorder %v2720, 1
        %v2730 = vcombine.low %v2690, %v2691
        %v2731 = vcombine.low %v2692, %v2693
        %v2732 = vcombine.low %v2694, %v2695
        %v2733 = vcombine.low %v2696, %v2697
        %v2735 = vunpack.c.l.s4 1966171168
        %v2736 = vunpack.c.0.s8 %v2735
        %v2737 = vlaneseq
        %v2738 = vshrl.u32 %v2737, 7
        %v2739 = vsub.s32 %v2736, %v2738
        %v2740 = vrot.slane %v2730, %v2739
        %v2742 = vunpack.c.l.s4 1966171168
        %v2743 = vunpack.c.0.s8 %v2742
        %v2744 = vlaneseq
        %v2745 = vshrl.u32 %v2744, 7
        %v2746 = vsub.s32 %v2743, %v2745
        %v2747 = vrot.slane %v2731, %v2746
        %v2749 = vunpack.c.l.s4 1966171168
        %v2750 = vunpack.c.0.s8 %v2749
        %v2751 = vlaneseq
        %v2752 = vshrl.u32 %v2751, 7
        %v2753 = vsub.s32 %v2750, %v2752
        %v2754 = vrot.slane %v2732, %v2753
        %v2756 = vunpack.c.l.s4 1966171168
        %v2757 = vunpack.c.0.s8 %v2756
        %v2758 = vlaneseq
        %v2759 = vshrl.u32 %v2758, 7
        %v2760 = vsub.s32 %v2757, %v2759
        %v2761 = vrot.slane %v2733, %v2760
        %v2762 = vcombine.low %v2740, %v2747
        %v2763 = vcombine.low %v2754, %v2761
        %v2765 = vunpack.c.l.s4 1966171168
        %v2766 = vunpack.c.0.s8 %v2765
        %v2767 = vlaneseq
        %v2768 = vshrl.u32 %v2767, 7
        %v2769 = vsub.s32 %v2766, %v2768
        %v2770 = vrot.slane %v2762, %v2769
        %v2772 = vunpack.c.l.s4 1966171168
        %v2773 = vunpack.c.0.s8 %v2772
        %v2774 = vlaneseq
        %v2775 = vshrl.u32 %v2774, 7
        %v2776 = vsub.s32 %v2773, %v2775
        %v2777 = vrot.slane %v2763, %v2776
        %v2778 = vcombine.low %v2770, %v2777
        %v2780 = vsel %vm2721, %v2778, %v2035
        %v2789 = vcombine.low %v2706, %v2707
        %v2790 = vcombine.low %v2708, %v2709
        %v2791 = vcombine.low %v2710, %v2711
        %v2792 = vcombine.low %v2712, %v2713
        %v2794 = vunpack.c.l.s4 1966171168
        %v2795 = vunpack.c.0.s8 %v2794
        %v2796 = vlaneseq
        %v2797 = vshrl.u32 %v2796, 7
        %v2798 = vsub.s32 %v2795, %v2797
        %v2799 = vrot.slane %v2789, %v2798
        %v2801 = vunpack.c.l.s4 1966171168
        %v2802 = vunpack.c.0.s8 %v2801
        %v2803 = vlaneseq
        %v2804 = vshrl.u32 %v2803, 7
        %v2805 = vsub.s32 %v2802, %v2804
        %v2806 = vrot.slane %v2790, %v2805
        %v2808 = vunpack.c.l.s4 1966171168
        %v2809 = vunpack.c.0.s8 %v2808
        %v2810 = vlaneseq
        %v2811 = vshrl.u32 %v2810, 7
        %v2812 = vsub.s32 %v2809, %v2811
        %v2813 = vrot.slane %v2791, %v2812
        %v2815 = vunpack.c.l.s4 1966171168
        %v2816 = vunpack.c.0.s8 %v2815
        %v2817 = vlaneseq
        %v2818 = vshrl.u32 %v2817, 7
        %v2819 = vsub.s32 %v2816, %v2818
        %v2820 = vrot.slane %v2792, %v2819
        %v2821 = vcombine.low %v2799, %v2806
        %v2822 = vcombine.low %v2813, %v2820
        %v2824 = vunpack.c.l.s4 1966171168
        %v2825 = vunpack.c.0.s8 %v2824
        %v2826 = vlaneseq
        %v2827 = vshrl.u32 %v2826, 7
        %v2828 = vsub.s32 %v2825, %v2827
        %v2829 = vrot.slane %v2821, %v2828
        %v2831 = vunpack.c.l.s4 1966171168
        %v2832 = vunpack.c.0.s8 %v2831
        %v2833 = vlaneseq
        %v2834 = vshrl.u32 %v2833, 7
        %v2835 = vsub.s32 %v2832, %v2834
        %v2836 = vrot.slane %v2822, %v2835
        %v2837 = vcombine.low %v2829, %v2836
        %v2839 = vsel %vm2721, %v2837, %v2094
        %v2840 = vsel %vm2721, %v2837, 0.0
        %v2842 = vcombine.high %v2840, %v2840
        %v2844 = vunpack.c.l.s4 1966171168
        %v2845 = vunpack.c.0.s8 %v2844
        %v2846 = vlaneseq
        %v2847 = vshrl.u32 %v2846, 7
        %v2848 = vsub.s32 %v2845, %v2847
        %v2849 = vrot.slane %v2840, %v2848
        %v2851 = vunpack.c.l.s4 1966171168
        %v2852 = vunpack.c.0.s8 %v2851
        %v2853 = vlaneseq
        %v2854 = vshrl.u32 %v2853, 7
        %v2855 = vsub.s32 %v2852, %v2854
        %v2856 = vrot.slane %v2842, %v2855
        %v2857 = vcombine.high %v2849, %v2849
        %v2858 = vcombine.high %v2856, %v2856
        %v2860 = vunpack.c.l.s4 1966171168
        %v2861 = vunpack.c.0.s8 %v2860
        %v2862 = vlaneseq
        %v2863 = vshrl.u32 %v2862, 7
        %v2864 = vsub.s32 %v2861, %v2863
        %v2865 = vrot.slane %v2849, %v2864
        %v2867 = vunpack.c.l.s4 1966171168
        %v2868 = vunpack.c.0.s8 %v2867
        %v2869 = vlaneseq
        %v2870 = vshrl.u32 %v2869, 7
        %v2871 = vsub.s32 %v2868, %v2870
        %v2872 = vrot.slane %v2856, %v2871
        %v2874 = vunpack.c.l.s4 1966171168
        %v2875 = vunpack.c.0.s8 %v2874
        %v2876 = vlaneseq
        %v2877 = vshrl.u32 %v2876, 7
        %v2878 = vsub.s32 %v2875, %v2877
        %v2879 = vrot.slane %v2857, %v2878
        %v2881 = vunpack.c.l.s4 1966171168
        %v2882 = vunpack.c.0.s8 %v2881
        %v2883 = vlaneseq
        %v2884 = vshrl.u32 %v2883, 7
        %v2885 = vsub.s32 %v2882, %v2884
        %v2886 = vrot.slane %v2858, %v2885
        %v2887 = vcombine.high %v2865, %v2865
        %v2888 = vcombine.high %v2872, %v2872
        %v2889 = vcombine.high %v2879, %v2879
        %v2890 = vcombine.high %v2886, %v2886
        %2899 = vst [vmem:[%s270 + $0x2] sm:$0x1] %v2865
        %2900 = vst [vmem:[%s270 + $0xa] sm:$0x1] %v2879
        %2901 = vst [vmem:[%s270 + $0x12] sm:$0x1] %v2887
        %2902 = vst [vmem:[%s270 + $0x1a] sm:$0x1] %v2889
        %2903 = vst [vmem:[%s270 + $0x22] sm:$0x1] %v2872
        %2904 = vst [vmem:[%s270 + $0x2a] sm:$0x1] %v2886
        %2905 = vst [vmem:[%s270 + $0x32] sm:$0x1] %v2888
        %2906 = vst [vmem:[%s270 + $0x3a] sm:$0x1] %v2890
        %s2907 = scalar_lea.vmem [#allocation4], 3
        %v2908 = vld [vmem:[%s2907] ss:$8 sm:$0xf]
        %s2909 = scalar_lea.vmem [#allocation4], 35
        %v2910 = vld [vmem:[%s2909] ss:$8 sm:$0xf]
        %s2911 = scalar_lea.vmem [#allocation4], 67
        %v2912 = vld [vmem:[%s2911] ss:$8 sm:$0xf]
        %s2913 = scalar_lea.vmem [#allocation4], 99
        %v2914 = vld [vmem:[%s2913] ss:$8 sm:$0xf]
        %s2915 = scalar_lea.vmem [#allocation4], 131
        %v2916 = vld [vmem:[%s2915] ss:$8 sm:$0xf]
        %s2917 = scalar_lea.vmem [#allocation4], 163
        %v2918 = vld [vmem:[%s2917] ss:$8 sm:$0xf]
        %s2919 = scalar_lea.vmem [#allocation4], 195
        %v2920 = vld [vmem:[%s2919] ss:$8 sm:$0xf]
        %s2921 = scalar_lea.vmem [#allocation4], 227
        %v2922 = vld [vmem:[%s2921] ss:$8 sm:$0xf]
        %2923 = vmatprep.subr.mxu0 %v607
        %2924 = vmatpush1.msra.mxu0 %v606
        %2925 = vmatprep.subr.mxu0 %v611
        %2926 = vmatpush1.msra.mxu0 %v610
        %2927 = vmatprep.subr.mxu0 %v615
        %2928 = vmatpush1.msra.mxu0 %v614
        %2929 = vmatprep.subr.mxu0 %v619
        %2930 = vmatpush1.msra.mxu0 %v618
        %2931 = vmatprep.subr.mxu0 %v623
        %2932 = vmatpush1.msra.mxu0 %v622
        %2933 = vmatprep.subr.mxu0 %v627
        %2934 = vmatpush1.msra.mxu0 %v626
        %2935 = vmatprep.subr.mxu0 %v631
        %2936 = vmatpush1.msra.mxu0 %v630
        %2937 = vmatprep.subr.mxu0 %v635
        %2938 = vmatpush1.msra.mxu0 %v634
        %2939 = vmatprep.subr.mxu0 %v639
        %2940 = vmatpush1.msra.mxu0 %v638
        %2941 = vmatprep.subr.mxu0 %v643
        %2942 = vmatpush1.msra.mxu0 %v642
        %2943 = vmatprep.subr.mxu0 %v647
        %2944 = vmatpush1.msra.mxu0 %v646
        %2945 = vmatprep.subr.mxu0 %v651
        %2946 = vmatpush1.msra.mxu0 %v650
        %2947 = vmatprep.subr.mxu0 %v655
        %2948 = vmatpush1.msra.mxu0 %v654
        %2949 = vmatprep.subr.mxu0 %v659
        %2950 = vmatpush1.msra.mxu0 %v658
        %2951 = vmatprep.subr.mxu0 %v663
        %2952 = vmatpush1.msra.mxu0 %v662
        %2953 = vmatprep.subr.mxu0 %v667
        %2954 = vmatpush1.msra.mxu0 %v666
        %2955 = vmatprep.subr.mxu0 0.0
        %2956 = vmatpush1.msra.mxu0 0.0
        %2957 = vmatprep.subr.mxu0 0.0
        %2958 = vmatpush1.msra.mxu0 0.0
        %2959 = vmatprep.subr.mxu0 0.0
        %2960 = vmatpush1.msra.mxu0 0.0
        %2961 = vmatprep.subr.mxu0 0.0
        %2962 = vmatpush1.msra.mxu0 0.0
        %2963 = vmatprep.subr.mxu0 0.0
        %2964 = vmatpush1.msra.mxu0 0.0
        %2965 = vmatprep.subr.mxu0 0.0
        %2966 = vmatpush1.msra.mxu0 0.0
        %2967 = vmatprep.subr.mxu0 0.0
        %2968 = vmatpush1.msra.mxu0 0.0
        %2969 = vmatprep.subr.mxu0 0.0
        %2970 = vmatpush1.msra.mxu0 0.0
        %2971 = vmatprep.subr.mxu0 0.0
        %2972 = vmatpush1.msra.mxu0 0.0
        %2973 = vmatprep.subr.mxu0 0.0
        %2974 = vmatpush1.msra.mxu0 0.0
        %2975 = vmatprep.subr.mxu0 0.0
        %2976 = vmatpush1.msra.mxu0 0.0
        %2977 = vmatprep.subr.mxu0 0.0
        %2978 = vmatpush1.msra.mxu0 0.0
        %2979 = vmatprep.subr.mxu0 0.0
        %2980 = vmatpush1.msra.mxu0 0.0
        %2981 = vmatprep.subr.mxu0 0.0
        %2982 = vmatpush1.msra.mxu0 0.0
        %2983 = vmatprep.subr.mxu0 0.0
        %2984 = vmatpush1.msra.mxu0 0.0
        %2985 = vmatprep.subr.mxu0 0.0
        %2986 = vmatpush1.msra.mxu0 0.0
        %2987 = vmatprep.mubr.f32.mxu0 0.0
        %2988 = vmatmul.mubr.f32.gmra.mrb[0].mxu0 %v2839
        %v2989 = vpop.f32.mrb[0].mxu0
        %v2990 = vadd.f32 0.0, %v2989
        %v2991 = vpop.f32.mrb[0].mxu0
        %v2992 = vadd.f32 0.0, %v2991
        %2993 = vdwg.mxu0
        %2994 = vmatprep.subr.mxu0 %v609
        %2995 = vmatpush1.msra.mxu0 %v608
        %2996 = vmatprep.subr.mxu0 %v613
        %2997 = vmatpush1.msra.mxu0 %v612
        %2998 = vmatprep.subr.mxu0 %v617
        %2999 = vmatpush1.msra.mxu0 %v616
        %3000 = vmatprep.subr.mxu0 %v621
        %3001 = vmatpush1.msra.mxu0 %v620
        %3002 = vmatprep.subr.mxu0 %v625
        %3003 = vmatpush1.msra.mxu0 %v624
        %3004 = vmatprep.subr.mxu0 %v629
        %3005 = vmatpush1.msra.mxu0 %v628
        %3006 = vmatprep.subr.mxu0 %v633
        %3007 = vmatpush1.msra.mxu0 %v632
        %3008 = vmatprep.subr.mxu0 %v637
        %3009 = vmatpush1.msra.mxu0 %v636
        %3010 = vmatprep.subr.mxu0 %v641
        %3011 = vmatpush1.msra.mxu0 %v640
        %3012 = vmatprep.subr.mxu0 %v645
        %3013 = vmatpush1.msra.mxu0 %v644
        %3014 = vmatprep.subr.mxu0 %v649
        %3015 = vmatpush1.msra.mxu0 %v648
        %3016 = vmatprep.subr.mxu0 %v653
        %3017 = vmatpush1.msra.mxu0 %v652
        %3018 = vmatprep.subr.mxu0 %v657
        %3019 = vmatpush1.msra.mxu0 %v656
        %3020 = vmatprep.subr.mxu0 %v661
        %3021 = vmatpush1.msra.mxu0 %v660
        %3022 = vmatprep.subr.mxu0 %v665
        %3023 = vmatpush1.msra.mxu0 %v664
        %3024 = vmatprep.subr.mxu0 %v669
        %3025 = vmatpush1.msra.mxu0 %v668
        %3026 = vmatprep.subr.mxu0 0.0
        %3027 = vmatpush1.msra.mxu0 0.0
        %3028 = vmatprep.subr.mxu0 0.0
        %3029 = vmatpush1.msra.mxu0 0.0
        %3030 = vmatprep.subr.mxu0 0.0
        %3031 = vmatpush1.msra.mxu0 0.0
        %3032 = vmatprep.subr.mxu0 0.0
        %3033 = vmatpush1.msra.mxu0 0.0
        %3034 = vmatprep.subr.mxu0 0.0
        %3035 = vmatpush1.msra.mxu0 0.0
        %3036 = vmatprep.subr.mxu0 0.0
        %3037 = vmatpush1.msra.mxu0 0.0
        %3038 = vmatprep.subr.mxu0 0.0
        %3039 = vmatpush1.msra.mxu0 0.0
        %3040 = vmatprep.subr.mxu0 0.0
        %3041 = vmatpush1.msra.mxu0 0.0
        %3042 = vmatprep.subr.mxu0 0.0
        %3043 = vmatpush1.msra.mxu0 0.0
        %3044 = vmatprep.subr.mxu0 0.0
        %3045 = vmatpush1.msra.mxu0 0.0
        %3046 = vmatprep.subr.mxu0 0.0
        %3047 = vmatpush1.msra.mxu0 0.0
        %3048 = vmatprep.subr.mxu0 0.0
        %3049 = vmatpush1.msra.mxu0 0.0
        %3050 = vmatprep.subr.mxu0 0.0
        %3051 = vmatpush1.msra.mxu0 0.0
        %3052 = vmatprep.subr.mxu0 0.0
        %3053 = vmatpush1.msra.mxu0 0.0
        %3054 = vmatprep.subr.mxu0 0.0
        %3055 = vmatpush1.msra.mxu0 0.0
        %3056 = vmatprep.subr.mxu0 0.0
        %3057 = vmatpush1.msra.mxu0 0.0
        %3058 = vmatprep.mubr.f32.mxu0 0.0
        %3059 = vmatmul.mubr.f32.gmra.mrb[0].mxu0 %v2839
        %v3060 = vpop.f32.mrb[0].mxu0
        %v3061 = vadd.f32 0.0, %v3060
        %v3062 = vpop.f32.mrb[0].mxu0
        %v3063 = vadd.f32 0.0, %v3062
        %3064 = vdwg.mxu0
        %v3069 = vcombine.low %v2990, %v2992
        %v3070 = vcombine.high %v2990, %v2992
        %v3071 = vcombine.low %v3061, %v3063
        %v3072 = vcombine.high %v3061, %v3063
        %v3074 = vunpack.c.l.s4 1966171168
        %v3075 = vunpack.c.0.s8 %v3074
        %v3076 = vlaneseq
        %v3077 = vshrl.u32 %v3076, 7
        %v3078 = vsub.s32 %v3075, %v3077
        %v3079 = vrot.slane %v3069, %v3078
        %v3081 = vunpack.c.l.s4 1966171168
        %v3082 = vunpack.c.0.s8 %v3081
        %v3083 = vlaneseq
        %v3084 = vshrl.u32 %v3083, 7
        %v3085 = vsub.s32 %v3082, %v3084
        %v3086 = vrot.slane %v3070, %v3085
        %v3088 = vunpack.c.l.s4 1966171168
        %v3089 = vunpack.c.0.s8 %v3088
        %v3090 = vlaneseq
        %v3091 = vshrl.u32 %v3090, 7
        %v3092 = vsub.s32 %v3089, %v3091
        %v3093 = vrot.slane %v3071, %v3092
        %v3095 = vunpack.c.l.s4 1966171168
        %v3096 = vunpack.c.0.s8 %v3095
        %v3097 = vlaneseq
        %v3098 = vshrl.u32 %v3097, 7
        %v3099 = vsub.s32 %v3096, %v3098
        %v3100 = vrot.slane %v3072, %v3099
        %v3101 = vcombine.low %v3079, %v3093
        %v3102 = vcombine.high %v3079, %v3093
        %v3103 = vcombine.low %v3086, %v3100
        %v3104 = vcombine.high %v3086, %v3100
        %v3106 = vunpack.c.l.s4 1966171168
        %v3107 = vunpack.c.0.s8 %v3106
        %v3108 = vlaneseq
        %v3109 = vshrl.u32 %v3108, 7
        %v3110 = vsub.s32 %v3107, %v3109
        %v3111 = vrot.slane %v3101, %v3110
        %v3113 = vunpack.c.l.s4 1966171168
        %v3114 = vunpack.c.0.s8 %v3113
        %v3115 = vlaneseq
        %v3116 = vshrl.u32 %v3115, 7
        %v3117 = vsub.s32 %v3114, %v3116
        %v3118 = vrot.slane %v3103, %v3117
        %v3120 = vunpack.c.l.s4 1966171168
        %v3121 = vunpack.c.0.s8 %v3120
        %v3122 = vlaneseq
        %v3123 = vshrl.u32 %v3122, 7
        %v3124 = vsub.s32 %v3121, %v3123
        %v3125 = vrot.slane %v3102, %v3124
        %v3127 = vunpack.c.l.s4 1966171168
        %v3128 = vunpack.c.0.s8 %v3127
        %v3129 = vlaneseq
        %v3130 = vshrl.u32 %v3129, 7
        %v3131 = vsub.s32 %v3128, %v3130
        %v3132 = vrot.slane %v3104, %v3131
        %v3133 = vcombine.high %v3111, %v3111
        %v3134 = vcombine.high %v3118, %v3118
        %v3135 = vcombine.high %v3125, %v3125
        %v3136 = vcombine.high %v3132, %v3132
        %v3145 = vadd.f32 %v2908, %v3111
        %v3146 = vadd.f32 %v2910, %v3125
        %v3147 = vadd.f32 %v2912, %v3133
        %v3148 = vadd.f32 %v2914, %v3135
        %v3149 = vadd.f32 %v2916, %v3118
        %v3150 = vadd.f32 %v2918, %v3132
        %v3151 = vadd.f32 %v2920, %v3134
        %v3152 = vadd.f32 %v2922, %v3136
        %v3153 = vxor.u32 %v3145, 2147483648
        %v3154 = vxor.u32 %v3146, 2147483648
        %v3155 = vxor.u32 %v3147, 2147483648
        %v3156 = vxor.u32 %v3148, 2147483648
        %v3157 = vxor.u32 %v3149, 2147483648
        %v3158 = vxor.u32 %v3150, 2147483648
        %v3159 = vxor.u32 %v3151, 2147483648
        %v3160 = vxor.u32 %v3152, 2147483648
        %v3161 = vmul.f32 %v3153, 1.442695
        %v3162 = vpow.pop %v3161
        %v3163 = vmul.f32 %v3154, 1.442695
        %v3164 = vpow.pop %v3163
        %v3165 = vmul.f32 %v3155, 1.442695
        %v3166 = vpow.pop %v3165
        %v3167 = vmul.f32 %v3156, 1.442695
        %v3168 = vpow.pop %v3167
        %v3169 = vmul.f32 %v3157, 1.442695
        %v3170 = vpow.pop %v3169
        %v3171 = vmul.f32 %v3158, 1.442695
        %v3172 = vpow.pop %v3171
        %v3173 = vmul.f32 %v3159, 1.442695
        %v3174 = vpow.pop %v3173
        %v3175 = vmul.f32 %v3160, 1.442695
        %v3176 = vpow.pop %v3175
        %v3177 = vadd.f32 %v3162, 1.0
        %v3178 = vadd.f32 %v3164, 1.0
        %v3179 = vadd.f32 %v3166, 1.0
        %v3180 = vadd.f32 %v3168, 1.0
        %v3181 = vadd.f32 %v3170, 1.0
        %v3182 = vadd.f32 %v3172, 1.0
        %v3183 = vadd.f32 %v3174, 1.0
        %v3184 = vadd.f32 %v3176, 1.0
        %v3185 = vrcp.pop %v3177
        %v3186 = vmul.f32 1.0, %v3185
        %v3187 = vrcp.pop %v3178
        %v3188 = vmul.f32 1.0, %v3187
        %v3189 = vrcp.pop %v3179
        %v3190 = vmul.f32 1.0, %v3189
        %v3191 = vrcp.pop %v3180
        %v3192 = vmul.f32 1.0, %v3191
        %v3193 = vrcp.pop %v3181
        %v3194 = vmul.f32 1.0, %v3193
        %v3195 = vrcp.pop %v3182
        %v3196 = vmul.f32 1.0, %v3195
        %v3197 = vrcp.pop %v3183
        %v3198 = vmul.f32 1.0, %v3197
        %v3199 = vrcp.pop %v3184
        %v3200 = vmul.f32 1.0, %v3199
        %v3209 = vrot.slane %v3145, 1
        %v3210 = vrot.slane %v3146, 1
        %v3211 = vrot.slane %v3147, 1
        %v3212 = vrot.slane %v3148, 1
        %v3213 = vrot.slane %v3149, 1
        %v3214 = vrot.slane %v3150, 1
        %v3215 = vrot.slane %v3151, 1
        %v3216 = vrot.slane %v3152, 1
        %v3225 = vxor.u32 %v3209, 2147483648
        %v3226 = vxor.u32 %v3210, 2147483648
        %v3227 = vxor.u32 %v3211, 2147483648
        %v3228 = vxor.u32 %v3212, 2147483648
        %v3229 = vxor.u32 %v3213, 2147483648
        %v3230 = vxor.u32 %v3214, 2147483648
        %v3231 = vxor.u32 %v3215, 2147483648
        %v3232 = vxor.u32 %v3216, 2147483648
        %v3233 = vmul.f32 %v3225, 1.442695
        %v3234 = vpow.pop %v3233
        %v3235 = vmul.f32 %v3226, 1.442695
        %v3236 = vpow.pop %v3235
        %v3237 = vmul.f32 %v3227, 1.442695
        %v3238 = vpow.pop %v3237
        %v3239 = vmul.f32 %v3228, 1.442695
        %v3240 = vpow.pop %v3239
        %v3241 = vmul.f32 %v3229, 1.442695
        %v3242 = vpow.pop %v3241
        %v3243 = vmul.f32 %v3230, 1.442695
        %v3244 = vpow.pop %v3243
        %v3245 = vmul.f32 %v3231, 1.442695
        %v3246 = vpow.pop %v3245
        %v3247 = vmul.f32 %v3232, 1.442695
        %v3248 = vpow.pop %v3247
        %v3249 = vadd.f32 %v3234, 1.0
        %v3250 = vadd.f32 %v3236, 1.0
        %v3251 = vadd.f32 %v3238, 1.0
        %v3252 = vadd.f32 %v3240, 1.0
        %v3253 = vadd.f32 %v3242, 1.0
        %v3254 = vadd.f32 %v3244, 1.0
        %v3255 = vadd.f32 %v3246, 1.0
        %v3256 = vadd.f32 %v3248, 1.0
        %v3257 = vrcp.pop %v3249
        %v3258 = vmul.f32 1.0, %v3257
        %v3259 = vrcp.pop %v3250
        %v3260 = vmul.f32 1.0, %v3259
        %v3261 = vrcp.pop %v3251
        %v3262 = vmul.f32 1.0, %v3261
        %v3263 = vrcp.pop %v3252
        %v3264 = vmul.f32 1.0, %v3263
        %v3265 = vrcp.pop %v3253
        %v3266 = vmul.f32 1.0, %v3265
        %v3267 = vrcp.pop %v3254
        %v3268 = vmul.f32 1.0, %v3267
        %v3269 = vrcp.pop %v3255
        %v3270 = vmul.f32 1.0, %v3269
        %v3271 = vrcp.pop %v3256
        %v3272 = vmul.f32 1.0, %v3271
        %v3273 = vrot.slane %v3145, 2
        %v3274 = vrot.slane %v3146, 2
        %v3275 = vrot.slane %v3147, 2
        %v3276 = vrot.slane %v3148, 2
        %v3277 = vrot.slane %v3149, 2
        %v3278 = vrot.slane %v3150, 2
        %v3279 = vrot.slane %v3151, 2
        %v3280 = vrot.slane %v3152, 2
        %v3289 = vtanh.pop %v3273
        %v3290 = vtanh.pop %v3274
        %v3291 = vtanh.pop %v3275
        %v3292 = vtanh.pop %v3276
        %v3293 = vtanh.pop %v3277
        %v3294 = vtanh.pop %v3278
        %v3295 = vtanh.pop %v3279
        %v3296 = vtanh.pop %v3280
        %v3297 = vrot.slane %v3145, 3
        %v3298 = vrot.slane %v3146, 3
        %v3299 = vrot.slane %v3147, 3
        %v3300 = vrot.slane %v3148, 3
        %v3301 = vrot.slane %v3149, 3
        %v3302 = vrot.slane %v3150, 3
        %v3303 = vrot.slane %v3151, 3
        %v3304 = vrot.slane %v3152, 3
        %v3313 = vxor.u32 %v3297, 2147483648
        %v3314 = vxor.u32 %v3298, 2147483648
        %v3315 = vxor.u32 %v3299, 2147483648
        %v3316 = vxor.u32 %v3300, 2147483648
        %v3317 = vxor.u32 %v3301, 2147483648
        %v3318 = vxor.u32 %v3302, 2147483648
        %v3319 = vxor.u32 %v3303, 2147483648
        %v3320 = vxor.u32 %v3304, 2147483648
        %v3321 = vmul.f32 %v3313, 1.442695
        %v3322 = vpow.pop %v3321
        %v3323 = vmul.f32 %v3314, 1.442695
        %v3324 = vpow.pop %v3323
        %v3325 = vmul.f32 %v3315, 1.442695
        %v3326 = vpow.pop %v3325
        %v3327 = vmul.f32 %v3316, 1.442695
        %v3328 = vpow.pop %v3327
        %v3329 = vmul.f32 %v3317, 1.442695
        %v3330 = vpow.pop %v3329
        %v3331 = vmul.f32 %v3318, 1.442695
        %v3332 = vpow.pop %v3331
        %v3333 = vmul.f32 %v3319, 1.442695
        %v3334 = vpow.pop %v3333
        %v3335 = vmul.f32 %v3320, 1.442695
        %v3336 = vpow.pop %v3335
        %v3337 = vadd.f32 %v3322, 1.0
        %v3338 = vadd.f32 %v3324, 1.0
        %v3339 = vadd.f32 %v3326, 1.0
        %v3340 = vadd.f32 %v3328, 1.0
        %v3341 = vadd.f32 %v3330, 1.0
        %v3342 = vadd.f32 %v3332, 1.0
        %v3343 = vadd.f32 %v3334, 1.0
        %v3344 = vadd.f32 %v3336, 1.0
        %v3345 = vrcp.pop %v3337
        %v3346 = vmul.f32 1.0, %v3345
        %v3347 = vrcp.pop %v3338
        %v3348 = vmul.f32 1.0, %v3347
        %v3349 = vrcp.pop %v3339
        %v3350 = vmul.f32 1.0, %v3349
        %v3351 = vrcp.pop %v3340
        %v3352 = vmul.f32 1.0, %v3351
        %v3353 = vrcp.pop %v3341
        %v3354 = vmul.f32 1.0, %v3353
        %v3355 = vrcp.pop %v3342
        %v3356 = vmul.f32 1.0, %v3355
        %v3357 = vrcp.pop %v3343
        %v3358 = vmul.f32 1.0, %v3357
        %v3359 = vrcp.pop %v3344
        %v3360 = vmul.f32 1.0, %v3359
        %v3362 = vcombine.high %v2780, %v2780
        %v3364 = vunpack.c.l.s4 1966171168
        %v3365 = vunpack.c.0.s8 %v3364
        %v3366 = vlaneseq
        %v3367 = vshrl.u32 %v3366, 7
        %v3368 = vsub.s32 %v3365, %v3367
        %v3369 = vrot.slane %v2780, %v3368
        %v3371 = vunpack.c.l.s4 1966171168
        %v3372 = vunpack.c.0.s8 %v3371
        %v3373 = vlaneseq
        %v3374 = vshrl.u32 %v3373, 7
        %v3375 = vsub.s32 %v3372, %v3374
        %v3376 = vrot.slane %v3362, %v3375
        %v3377 = vcombine.high %v3369, %v3369
        %v3378 = vcombine.high %v3376, %v3376
        %v3380 = vunpack.c.l.s4 1966171168
        %v3381 = vunpack.c.0.s8 %v3380
        %v3382 = vlaneseq
        %v3383 = vshrl.u32 %v3382, 7
        %v3384 = vsub.s32 %v3381, %v3383
        %v3385 = vrot.slane %v3369, %v3384
        %v3387 = vunpack.c.l.s4 1966171168
        %v3388 = vunpack.c.0.s8 %v3387
        %v3389 = vlaneseq
        %v3390 = vshrl.u32 %v3389, 7
        %v3391 = vsub.s32 %v3388, %v3390
        %v3392 = vrot.slane %v3376, %v3391
        %v3394 = vunpack.c.l.s4 1966171168
        %v3395 = vunpack.c.0.s8 %v3394
        %v3396 = vlaneseq
        %v3397 = vshrl.u32 %v3396, 7
        %v3398 = vsub.s32 %v3395, %v3397
        %v3399 = vrot.slane %v3377, %v3398
        %v3401 = vunpack.c.l.s4 1966171168
        %v3402 = vunpack.c.0.s8 %v3401
        %v3403 = vlaneseq
        %v3404 = vshrl.u32 %v3403, 7
        %v3405 = vsub.s32 %v3402, %v3404
        %v3406 = vrot.slane %v3378, %v3405
        %v3407 = vcombine.high %v3385, %v3385
        %v3408 = vcombine.high %v3392, %v3392
        %v3409 = vcombine.high %v3399, %v3399
        %v3410 = vcombine.high %v3406, %v3406
        %v3419 = vmul.f32 %v3258, %v3385
        %v3420 = vmul.f32 %v3260, %v3399
        %v3421 = vmul.f32 %v3262, %v3407
        %v3422 = vmul.f32 %v3264, %v3409
        %v3423 = vmul.f32 %v3266, %v3392
        %v3424 = vmul.f32 %v3268, %v3406
        %v3425 = vmul.f32 %v3270, %v3408
        %v3426 = vmul.f32 %v3272, %v3410
        %v3427 = vmul.f32 %v3186, %v3289
        %v3428 = vmul.f32 %v3188, %v3290
        %v3429 = vmul.f32 %v3190, %v3291
        %v3430 = vmul.f32 %v3192, %v3292
        %v3431 = vmul.f32 %v3194, %v3293
        %v3432 = vmul.f32 %v3196, %v3294
        %v3433 = vmul.f32 %v3198, %v3295
        %v3434 = vmul.f32 %v3200, %v3296
        %v3435 = vadd.f32 %v3419, %v3427
        %v3436 = vadd.f32 %v3420, %v3428
        %v3437 = vadd.f32 %v3421, %v3429
        %v3438 = vadd.f32 %v3422, %v3430
        %v3439 = vadd.f32 %v3423, %v3431
        %v3440 = vadd.f32 %v3424, %v3432
        %v3441 = vadd.f32 %v3425, %v3433
        %v3442 = vadd.f32 %v3426, %v3434
        %v3443 = vtanh.pop %v3435
        %v3444 = vtanh.pop %v3436
        %v3445 = vtanh.pop %v3437
        %v3446 = vtanh.pop %v3438
        %v3447 = vtanh.pop %v3439
        %v3448 = vtanh.pop %v3440
        %v3449 = vtanh.pop %v3441
        %v3450 = vtanh.pop %v3442
        %v3451 = vmul.f32 %v3346, %v3443
        %v3452 = vmul.f32 %v3348, %v3444
        %v3453 = vmul.f32 %v3350, %v3445
        %v3454 = vmul.f32 %v3352, %v3446
        %v3455 = vmul.f32 %v3354, %v3447
        %v3456 = vmul.f32 %v3356, %v3448
        %v3457 = vmul.f32 %v3358, %v3449
        %v3458 = vmul.f32 %v3360, %v3450
        %s3459 = sadd.s32 %s671, 3
        %v3460 = vstv %s3459
        %vm3461 = vcmp.gt.s32.totalorder %v670, %v3460
        %v3462 = vsel %vm3461, 1, 0
        %3463 = vset.pattern.permute.xlu0 0
        %3464 = vperm.xlu0 %3463, %v3462
        %v3465 = vpop.permute.xlu0 %3464
        %vm3466 = vcmp.eq.s32.totalorder %v3465, 1
        %v3475 = vcombine.low %v3435, %v3436
        %v3476 = vcombine.low %v3437, %v3438
        %v3477 = vcombine.low %v3439, %v3440
        %v3478 = vcombine.low %v3441, %v3442
        %v3480 = vunpack.c.l.s4 1966171168
        %v3481 = vunpack.c.0.s8 %v3480
        %v3482 = vlaneseq
        %v3483 = vshrl.u32 %v3482, 7
        %v3484 = vsub.s32 %v3481, %v3483
        %v3485 = vrot.slane %v3475, %v3484
        %v3487 = vunpack.c.l.s4 1966171168
        %v3488 = vunpack.c.0.s8 %v3487
        %v3489 = vlaneseq
        %v3490 = vshrl.u32 %v3489, 7
        %v3491 = vsub.s32 %v3488, %v3490
        %v3492 = vrot.slane %v3476, %v3491
        %v3494 = vunpack.c.l.s4 1966171168
        %v3495 = vunpack.c.0.s8 %v3494
        %v3496 = vlaneseq
        %v3497 = vshrl.u32 %v3496, 7
        %v3498 = vsub.s32 %v3495, %v3497
        %v3499 = vrot.slane %v3477, %v3498
        %v3501 = vunpack.c.l.s4 1966171168
        %v3502 = vunpack.c.0.s8 %v3501
        %v3503 = vlaneseq
        %v3504 = vshrl.u32 %v3503, 7
        %v3505 = vsub.s32 %v3502, %v3504
        %v3506 = vrot.slane %v3478, %v3505
        %v3507 = vcombine.low %v3485, %v3492
        %v3508 = vcombine.low %v3499, %v3506
        %v3510 = vunpack.c.l.s4 1966171168
        %v3511 = vunpack.c.0.s8 %v3510
        %v3512 = vlaneseq
        %v3513 = vshrl.u32 %v3512, 7
        %v3514 = vsub.s32 %v3511, %v3513
        %v3515 = vrot.slane %v3507, %v3514
        %v3517 = vunpack.c.l.s4 1966171168
        %v3518 = vunpack.c.0.s8 %v3517
        %v3519 = vlaneseq
        %v3520 = vshrl.u32 %v3519, 7
        %v3521 = vsub.s32 %v3518, %v3520
        %v3522 = vrot.slane %v3508, %v3521
        %v3523 = vcombine.low %v3515, %v3522
        %v3525 = vsel %vm3466, %v3523, %v2780
        %v3534 = vcombine.low %v3451, %v3452
        %v3535 = vcombine.low %v3453, %v3454
        %v3536 = vcombine.low %v3455, %v3456
        %v3537 = vcombine.low %v3457, %v3458
        %v3539 = vunpack.c.l.s4 1966171168
        %v3540 = vunpack.c.0.s8 %v3539
        %v3541 = vlaneseq
        %v3542 = vshrl.u32 %v3541, 7
        %v3543 = vsub.s32 %v3540, %v3542
        %v3544 = vrot.slane %v3534, %v3543
        %v3546 = vunpack.c.l.s4 1966171168
        %v3547 = vunpack.c.0.s8 %v3546
        %v3548 = vlaneseq
        %v3549 = vshrl.u32 %v3548, 7
        %v3550 = vsub.s32 %v3547, %v3549
        %v3551 = vrot.slane %v3535, %v3550
        %v3553 = vunpack.c.l.s4 1966171168
        %v3554 = vunpack.c.0.s8 %v3553
        %v3555 = vlaneseq
        %v3556 = vshrl.u32 %v3555, 7
        %v3557 = vsub.s32 %v3554, %v3556
        %v3558 = vrot.slane %v3536, %v3557
        %v3560 = vunpack.c.l.s4 1966171168
        %v3561 = vunpack.c.0.s8 %v3560
        %v3562 = vlaneseq
        %v3563 = vshrl.u32 %v3562, 7
        %v3564 = vsub.s32 %v3561, %v3563
        %v3565 = vrot.slane %v3537, %v3564
        %v3566 = vcombine.low %v3544, %v3551
        %v3567 = vcombine.low %v3558, %v3565
        %v3569 = vunpack.c.l.s4 1966171168
        %v3570 = vunpack.c.0.s8 %v3569
        %v3571 = vlaneseq
        %v3572 = vshrl.u32 %v3571, 7
        %v3573 = vsub.s32 %v3570, %v3572
        %v3574 = vrot.slane %v3566, %v3573
        %v3576 = vunpack.c.l.s4 1966171168
        %v3577 = vunpack.c.0.s8 %v3576
        %v3578 = vlaneseq
        %v3579 = vshrl.u32 %v3578, 7
        %v3580 = vsub.s32 %v3577, %v3579
        %v3581 = vrot.slane %v3567, %v3580
        %v3582 = vcombine.low %v3574, %v3581
        %v3584 = vsel %vm3466, %v3582, %v2839
        %v3585 = vsel %vm3466, %v3582, 0.0
        %v3587 = vcombine.high %v3585, %v3585
        %v3589 = vunpack.c.l.s4 1966171168
        %v3590 = vunpack.c.0.s8 %v3589
        %v3591 = vlaneseq
        %v3592 = vshrl.u32 %v3591, 7
        %v3593 = vsub.s32 %v3590, %v3592
        %v3594 = vrot.slane %v3585, %v3593
        %v3596 = vunpack.c.l.s4 1966171168
        %v3597 = vunpack.c.0.s8 %v3596
        %v3598 = vlaneseq
        %v3599 = vshrl.u32 %v3598, 7
        %v3600 = vsub.s32 %v3597, %v3599
        %v3601 = vrot.slane %v3587, %v3600
        %v3602 = vcombine.high %v3594, %v3594
        %v3603 = vcombine.high %v3601, %v3601
        %v3605 = vunpack.c.l.s4 1966171168
        %v3606 = vunpack.c.0.s8 %v3605
        %v3607 = vlaneseq
        %v3608 = vshrl.u32 %v3607, 7
        %v3609 = vsub.s32 %v3606, %v3608
        %v3610 = vrot.slane %v3594, %v3609
        %v3612 = vunpack.c.l.s4 1966171168
        %v3613 = vunpack.c.0.s8 %v3612
        %v3614 = vlaneseq
        %v3615 = vshrl.u32 %v3614, 7
        %v3616 = vsub.s32 %v3613, %v3615
        %v3617 = vrot.slane %v3601, %v3616
        %v3619 = vunpack.c.l.s4 1966171168
        %v3620 = vunpack.c.0.s8 %v3619
        %v3621 = vlaneseq
        %v3622 = vshrl.u32 %v3621, 7
        %v3623 = vsub.s32 %v3620, %v3622
        %v3624 = vrot.slane %v3602, %v3623
        %v3626 = vunpack.c.l.s4 1966171168
        %v3627 = vunpack.c.0.s8 %v3626
        %v3628 = vlaneseq
        %v3629 = vshrl.u32 %v3628, 7
        %v3630 = vsub.s32 %v3627, %v3629
        %v3631 = vrot.slane %v3603, %v3630
        %v3632 = vcombine.high %v3610, %v3610
        %v3633 = vcombine.high %v3617, %v3617
        %v3634 = vcombine.high %v3624, %v3624
        %v3635 = vcombine.high %v3631, %v3631
        %3644 = vst [vmem:[%s270 + $0x3] sm:$0x1] %v3610
        %3645 = vst [vmem:[%s270 + $0xb] sm:$0x1] %v3624
        %3646 = vst [vmem:[%s270 + $0x13] sm:$0x1] %v3632
        %3647 = vst [vmem:[%s270 + $0x1b] sm:$0x1] %v3634
        %3648 = vst [vmem:[%s270 + $0x23] sm:$0x1] %v3617
        %3649 = vst [vmem:[%s270 + $0x2b] sm:$0x1] %v3631
        %3650 = vst [vmem:[%s270 + $0x33] sm:$0x1] %v3633
        %3651 = vst [vmem:[%s270 + $0x3b] sm:$0x1] %v3635
        %s3652 = scalar_lea.vmem [#allocation4], 4
        %v3653 = vld [vmem:[%s3652] ss:$8 sm:$0xf]
        %s3654 = scalar_lea.vmem [#allocation4], 36
        %v3655 = vld [vmem:[%s3654] ss:$8 sm:$0xf]
        %s3656 = scalar_lea.vmem [#allocation4], 68
        %v3657 = vld [vmem:[%s3656] ss:$8 sm:$0xf]
        %s3658 = scalar_lea.vmem [#allocation4], 100
        %v3659 = vld [vmem:[%s3658] ss:$8 sm:$0xf]
        %s3660 = scalar_lea.vmem [#allocation4], 132
        %v3661 = vld [vmem:[%s3660] ss:$8 sm:$0xf]
        %s3662 = scalar_lea.vmem [#allocation4], 164
        %v3663 = vld [vmem:[%s3662] ss:$8 sm:$0xf]
        %s3664 = scalar_lea.vmem [#allocation4], 196
        %v3665 = vld [vmem:[%s3664] ss:$8 sm:$0xf]
        %s3666 = scalar_lea.vmem [#allocation4], 228
        %v3667 = vld [vmem:[%s3666] ss:$8 sm:$0xf]
        %3668 = vmatprep.subr.mxu0 %v607
        %3669 = vmatpush1.msra.mxu0 %v606
        %3670 = vmatprep.subr.mxu0 %v611
        %3671 = vmatpush1.msra.mxu0 %v610
        %3672 = vmatprep.subr.mxu0 %v615
        %3673 = vmatpush1.msra.mxu0 %v614
        %3674 = vmatprep.subr.mxu0 %v619
        %3675 = vmatpush1.msra.mxu0 %v618
        %3676 = vmatprep.subr.mxu0 %v623
        %3677 = vmatpush1.msra.mxu0 %v622
        %3678 = vmatprep.subr.mxu0 %v627
        %3679 = vmatpush1.msra.mxu0 %v626
        %3680 = vmatprep.subr.mxu0 %v631
        %3681 = vmatpush1.msra.mxu0 %v630
        %3682 = vmatprep.subr.mxu0 %v635
        %3683 = vmatpush1.msra.mxu0 %v634
        %3684 = vmatprep.subr.mxu0 %v639
        %3685 = vmatpush1.msra.mxu0 %v638
        %3686 = vmatprep.subr.mxu0 %v643
        %3687 = vmatpush1.msra.mxu0 %v642
        %3688 = vmatprep.subr.mxu0 %v647
        %3689 = vmatpush1.msra.mxu0 %v646
        %3690 = vmatprep.subr.mxu0 %v651
        %3691 = vmatpush1.msra.mxu0 %v650
        %3692 = vmatprep.subr.mxu0 %v655
        %3693 = vmatpush1.msra.mxu0 %v654
        %3694 = vmatprep.subr.mxu0 %v659
        %3695 = vmatpush1.msra.mxu0 %v658
        %3696 = vmatprep.subr.mxu0 %v663
        %3697 = vmatpush1.msra.mxu0 %v662
        %3698 = vmatprep.subr.mxu0 %v667
        %3699 = vmatpush1.msra.mxu0 %v666
        %3700 = vmatprep.subr.mxu0 0.0
        %3701 = vmatpush1.msra.mxu0 0.0
        %3702 = vmatprep.subr.mxu0 0.0
        %3703 = vmatpush1.msra.mxu0 0.0
        %3704 = vmatprep.subr.mxu0 0.0
        %3705 = vmatpush1.msra.mxu0 0.0
        %3706 = vmatprep.subr.mxu0 0.0
        %3707 = vmatpush1.msra.mxu0 0.0
        %3708 = vmatprep.subr.mxu0 0.0
        %3709 = vmatpush1.msra.mxu0 0.0
        %3710 = vmatprep.subr.mxu0 0.0
        %3711 = vmatpush1.msra.mxu0 0.0
        %3712 = vmatprep.subr.mxu0 0.0
        %3713 = vmatpush1.msra.mxu0 0.0
        %3714 = vmatprep.subr.mxu0 0.0
        %3715 = vmatpush1.msra.mxu0 0.0
        %3716 = vmatprep.subr.mxu0 0.0
        %3717 = vmatpush1.msra.mxu0 0.0
        %3718 = vmatprep.subr.mxu0 0.0
        %3719 = vmatpush1.msra.mxu0 0.0
        %3720 = vmatprep.subr.mxu0 0.0
        %3721 = vmatpush1.msra.mxu0 0.0
        %3722 = vmatprep.subr.mxu0 0.0
        %3723 = vmatpush1.msra.mxu0 0.0
        %3724 = vmatprep.subr.mxu0 0.0
        %3725 = vmatpush1.msra.mxu0 0.0
        %3726 = vmatprep.subr.mxu0 0.0
        %3727 = vmatpush1.msra.mxu0 0.0
        %3728 = vmatprep.subr.mxu0 0.0
        %3729 = vmatpush1.msra.mxu0 0.0
        %3730 = vmatprep.subr.mxu0 0.0
        %3731 = vmatpush1.msra.mxu0 0.0
        %3732 = vmatprep.mubr.f32.mxu0 0.0
        %3733 = vmatmul.mubr.f32.gmra.mrb[0].mxu0 %v3584
        %v3734 = vpop.f32.mrb[0].mxu0
        %v3735 = vadd.f32 0.0, %v3734
        %v3736 = vpop.f32.mrb[0].mxu0
        %v3737 = vadd.f32 0.0, %v3736
        %3738 = vdwg.mxu0
        %3739 = vmatprep.subr.mxu0 %v609
        %3740 = vmatpush1.msra.mxu0 %v608
        %3741 = vmatprep.subr.mxu0 %v613
        %3742 = vmatpush1.msra.mxu0 %v612
        %3743 = vmatprep.subr.mxu0 %v617
        %3744 = vmatpush1.msra.mxu0 %v616
        %3745 = vmatprep.subr.mxu0 %v621
        %3746 = vmatpush1.msra.mxu0 %v620
        %3747 = vmatprep.subr.mxu0 %v625
        %3748 = vmatpush1.msra.mxu0 %v624
        %3749 = vmatprep.subr.mxu0 %v629
        %3750 = vmatpush1.msra.mxu0 %v628
        %3751 = vmatprep.subr.mxu0 %v633
        %3752 = vmatpush1.msra.mxu0 %v632
        %3753 = vmatprep.subr.mxu0 %v637
        %3754 = vmatpush1.msra.mxu0 %v636
        %3755 = vmatprep.subr.mxu0 %v641
        %3756 = vmatpush1.msra.mxu0 %v640
        %3757 = vmatprep.subr.mxu0 %v645
        %3758 = vmatpush1.msra.mxu0 %v644
        %3759 = vmatprep.subr.mxu0 %v649
        %3760 = vmatpush1.msra.mxu0 %v648
        %3761 = vmatprep.subr.mxu0 %v653
        %3762 = vmatpush1.msra.mxu0 %v652
        %3763 = vmatprep.subr.mxu0 %v657
        %3764 = vmatpush1.msra.mxu0 %v656
        %3765 = vmatprep.subr.mxu0 %v661
        %3766 = vmatpush1.msra.mxu0 %v660
        %3767 = vmatprep.subr.mxu0 %v665
        %3768 = vmatpush1.msra.mxu0 %v664
        %3769 = vmatprep.subr.mxu0 %v669
        %3770 = vmatpush1.msra.mxu0 %v668
        %3771 = vmatprep.subr.mxu0 0.0
        %3772 = vmatpush1.msra.mxu0 0.0
        %3773 = vmatprep.subr.mxu0 0.0
        %3774 = vmatpush1.msra.mxu0 0.0
        %3775 = vmatprep.subr.mxu0 0.0
        %3776 = vmatpush1.msra.mxu0 0.0
        %3777 = vmatprep.subr.mxu0 0.0
        %3778 = vmatpush1.msra.mxu0 0.0
        %3779 = vmatprep.subr.mxu0 0.0
        %3780 = vmatpush1.msra.mxu0 0.0
        %3781 = vmatprep.subr.mxu0 0.0
        %3782 = vmatpush1.msra.mxu0 0.0
        %3783 = vmatprep.subr.mxu0 0.0
        %3784 = vmatpush1.msra.mxu0 0.0
        %3785 = vmatprep.subr.mxu0 0.0
        %3786 = vmatpush1.msra.mxu0 0.0
        %3787 = vmatprep.subr.mxu0 0.0
        %3788 = vmatpush1.msra.mxu0 0.0
        %3789 = vmatprep.subr.mxu0 0.0
        %3790 = vmatpush1.msra.mxu0 0.0
        %3791 = vmatprep.subr.mxu0 0.0
        %3792 = vmatpush1.msra.mxu0 0.0
        %3793 = vmatprep.subr.mxu0 0.0
        %3794 = vmatpush1.msra.mxu0 0.0
        %3795 = vmatprep.subr.mxu0 0.0
        %3796 = vmatpush1.msra.mxu0 0.0
        %3797 = vmatprep.subr.mxu0 0.0
        %3798 = vmatpush1.msra.mxu0 0.0
        %3799 = vmatprep.subr.mxu0 0.0
        %3800 = vmatpush1.msra.mxu0 0.0
        %3801 = vmatprep.subr.mxu0 0.0
        %3802 = vmatpush1.msra.mxu0 0.0
        %3803 = vmatprep.mubr.f32.mxu0 0.0
        %3804 = vmatmul.mubr.f32.gmra.mrb[0].mxu0 %v3584
        %v3805 = vpop.f32.mrb[0].mxu0
        %v3806 = vadd.f32 0.0, %v3805
        %v3807 = vpop.f32.mrb[0].mxu0
        %v3808 = vadd.f32 0.0, %v3807
        %3809 = vdwg.mxu0
        %v3814 = vcombine.low %v3735, %v3737
        %v3815 = vcombine.high %v3735, %v3737
        %v3816 = vcombine.low %v3806, %v3808
        %v3817 = vcombine.high %v3806, %v3808
        %v3819 = vunpack.c.l.s4 1966171168
        %v3820 = vunpack.c.0.s8 %v3819
        %v3821 = vlaneseq
        %v3822 = vshrl.u32 %v3821, 7
        %v3823 = vsub.s32 %v3820, %v3822
        %v3824 = vrot.slane %v3814, %v3823
        %v3826 = vunpack.c.l.s4 1966171168
        %v3827 = vunpack.c.0.s8 %v3826
        %v3828 = vlaneseq
        %v3829 = vshrl.u32 %v3828, 7
        %v3830 = vsub.s32 %v3827, %v3829
        %v3831 = vrot.slane %v3815, %v3830
        %v3833 = vunpack.c.l.s4 1966171168
        %v3834 = vunpack.c.0.s8 %v3833
        %v3835 = vlaneseq
        %v3836 = vshrl.u32 %v3835, 7
        %v3837 = vsub.s32 %v3834, %v3836
        %v3838 = vrot.slane %v3816, %v3837
        %v3840 = vunpack.c.l.s4 1966171168
        %v3841 = vunpack.c.0.s8 %v3840
        %v3842 = vlaneseq
        %v3843 = vshrl.u32 %v3842, 7
        %v3844 = vsub.s32 %v3841, %v3843
        %v3845 = vrot.slane %v3817, %v3844
        %v3846 = vcombine.low %v3824, %v3838
        %v3847 = vcombine.high %v3824, %v3838
        %v3848 = vcombine.low %v3831, %v3845
        %v3849 = vcombine.high %v3831, %v3845
        %v3851 = vunpack.c.l.s4 1966171168
        %v3852 = vunpack.c.0.s8 %v3851
        %v3853 = vlaneseq
        %v3854 = vshrl.u32 %v3853, 7
        %v3855 = vsub.s32 %v3852, %v3854
        %v3856 = vrot.slane %v3846, %v3855
        %v3858 = vunpack.c.l.s4 1966171168
        %v3859 = vunpack.c.0.s8 %v3858
        %v3860 = vlaneseq
        %v3861 = vshrl.u32 %v3860, 7
        %v3862 = vsub.s32 %v3859, %v3861
        %v3863 = vrot.slane %v3848, %v3862
        %v3865 = vunpack.c.l.s4 1966171168
        %v3866 = vunpack.c.0.s8 %v3865
        %v3867 = vlaneseq
        %v3868 = vshrl.u32 %v3867, 7
        %v3869 = vsub.s32 %v3866, %v3868
        %v3870 = vrot.slane %v3847, %v3869
        %v3872 = vunpack.c.l.s4 1966171168
        %v3873 = vunpack.c.0.s8 %v3872
        %v3874 = vlaneseq
        %v3875 = vshrl.u32 %v3874, 7
        %v3876 = vsub.s32 %v3873, %v3875
        %v3877 = vrot.slane %v3849, %v3876
        %v3878 = vcombine.high %v3856, %v3856
        %v3879 = vcombine.high %v3863, %v3863
        %v3880 = vcombine.high %v3870, %v3870
        %v3881 = vcombine.high %v3877, %v3877
        %v3890 = vadd.f32 %v3653, %v3856
        %v3891 = vadd.f32 %v3655, %v3870
        %v3892 = vadd.f32 %v3657, %v3878
        %v3893 = vadd.f32 %v3659, %v3880
        %v3894 = vadd.f32 %v3661, %v3863
        %v3895 = vadd.f32 %v3663, %v3877
        %v3896 = vadd.f32 %v3665, %v3879
        %v3897 = vadd.f32 %v3667, %v3881
        %v3898 = vxor.u32 %v3890, 2147483648
        %v3899 = vxor.u32 %v3891, 2147483648
        %v3900 = vxor.u32 %v3892, 2147483648
        %v3901 = vxor.u32 %v3893, 2147483648
        %v3902 = vxor.u32 %v3894, 2147483648
        %v3903 = vxor.u32 %v3895, 2147483648
        %v3904 = vxor.u32 %v3896, 2147483648
        %v3905 = vxor.u32 %v3897, 2147483648
        %v3906 = vmul.f32 %v3898, 1.442695
        %v3907 = vpow.pop %v3906
        %v3908 = vmul.f32 %v3899, 1.442695
        %v3909 = vpow.pop %v3908
        %v3910 = vmul.f32 %v3900, 1.442695
        %v3911 = vpow.pop %v3910
        %v3912 = vmul.f32 %v3901, 1.442695
        %v3913 = vpow.pop %v3912
        %v3914 = vmul.f32 %v3902, 1.442695
        %v3915 = vpow.pop %v3914
        %v3916 = vmul.f32 %v3903, 1.442695
        %v3917 = vpow.pop %v3916
        %v3918 = vmul.f32 %v3904, 1.442695
        %v3919 = vpow.pop %v3918
        %v3920 = vmul.f32 %v3905, 1.442695
        %v3921 = vpow.pop %v3920
        %v3922 = vadd.f32 %v3907, 1.0
        %v3923 = vadd.f32 %v3909, 1.0
        %v3924 = vadd.f32 %v3911, 1.0
        %v3925 = vadd.f32 %v3913, 1.0
        %v3926 = vadd.f32 %v3915, 1.0
        %v3927 = vadd.f32 %v3917, 1.0
        %v3928 = vadd.f32 %v3919, 1.0
        %v3929 = vadd.f32 %v3921, 1.0
        %v3930 = vrcp.pop %v3922
        %v3931 = vmul.f32 1.0, %v3930
        %v3932 = vrcp.pop %v3923
        %v3933 = vmul.f32 1.0, %v3932
        %v3934 = vrcp.pop %v3924
        %v3935 = vmul.f32 1.0, %v3934
        %v3936 = vrcp.pop %v3925
        %v3937 = vmul.f32 1.0, %v3936
        %v3938 = vrcp.pop %v3926
        %v3939 = vmul.f32 1.0, %v3938
        %v3940 = vrcp.pop %v3927
        %v3941 = vmul.f32 1.0, %v3940
        %v3942 = vrcp.pop %v3928
        %v3943 = vmul.f32 1.0, %v3942
        %v3944 = vrcp.pop %v3929
        %v3945 = vmul.f32 1.0, %v3944
        %v3954 = vrot.slane %v3890, 1
        %v3955 = vrot.slane %v3891, 1
        %v3956 = vrot.slane %v3892, 1
        %v3957 = vrot.slane %v3893, 1
        %v3958 = vrot.slane %v3894, 1
        %v3959 = vrot.slane %v3895, 1
        %v3960 = vrot.slane %v3896, 1
        %v3961 = vrot.slane %v3897, 1
        %v3970 = vxor.u32 %v3954, 2147483648
        %v3971 = vxor.u32 %v3955, 2147483648
        %v3972 = vxor.u32 %v3956, 2147483648
        %v3973 = vxor.u32 %v3957, 2147483648
        %v3974 = vxor.u32 %v3958, 2147483648
        %v3975 = vxor.u32 %v3959, 2147483648
        %v3976 = vxor.u32 %v3960, 2147483648
        %v3977 = vxor.u32 %v3961, 2147483648
        %v3978 = vmul.f32 %v3970, 1.442695
        %v3979 = vpow.pop %v3978
        %v3980 = vmul.f32 %v3971, 1.442695
        %v3981 = vpow.pop %v3980
        %v3982 = vmul.f32 %v3972, 1.442695
        %v3983 = vpow.pop %v3982
        %v3984 = vmul.f32 %v3973, 1.442695
        %v3985 = vpow.pop %v3984
        %v3986 = vmul.f32 %v3974, 1.442695
        %v3987 = vpow.pop %v3986
        %v3988 = vmul.f32 %v3975, 1.442695
        %v3989 = vpow.pop %v3988
        %v3990 = vmul.f32 %v3976, 1.442695
        %v3991 = vpow.pop %v3990
        %v3992 = vmul.f32 %v3977, 1.442695
        %v3993 = vpow.pop %v3992
        %v3994 = vadd.f32 %v3979, 1.0
        %v3995 = vadd.f32 %v3981, 1.0
        %v3996 = vadd.f32 %v3983, 1.0
        %v3997 = vadd.f32 %v3985, 1.0
        %v3998 = vadd.f32 %v3987, 1.0
        %v3999 = vadd.f32 %v3989, 1.0
        %v4000 = vadd.f32 %v3991, 1.0
        %v4001 = vadd.f32 %v3993, 1.0
        %v4002 = vrcp.pop %v3994
        %v4003 = vmul.f32 1.0, %v4002
        %v4004 = vrcp.pop %v3995
        %v4005 = vmul.f32 1.0, %v4004
        %v4006 = vrcp.pop %v3996
        %v4007 = vmul.f32 1.0, %v4006
        %v4008 = vrcp.pop %v3997
        %v4009 = vmul.f32 1.0, %v4008
        %v4010 = vrcp.pop %v3998
        %v4011 = vmul.f32 1.0, %v4010
        %v4012 = vrcp.pop %v3999
        %v4013 = vmul.f32 1.0, %v4012
        %v4014 = vrcp.pop %v4000
        %v4015 = vmul.f32 1.0, %v4014
        %v4016 = vrcp.pop %v4001
        %v4017 = vmul.f32 1.0, %v4016
        %v4018 = vrot.slane %v3890, 2
        %v4019 = vrot.slane %v3891, 2
        %v4020 = vrot.slane %v3892, 2
        %v4021 = vrot.slane %v3893, 2
        %v4022 = vrot.slane %v3894, 2
        %v4023 = vrot.slane %v3895, 2
        %v4024 = vrot.slane %v3896, 2
        %v4025 = vrot.slane %v3897, 2
        %v4034 = vtanh.pop %v4018
        %v4035 = vtanh.pop %v4019
        %v4036 = vtanh.pop %v4020
        %v4037 = vtanh.pop %v4021
        %v4038 = vtanh.pop %v4022
        %v4039 = vtanh.pop %v4023
        %v4040 = vtanh.pop %v4024
        %v4041 = vtanh.pop %v4025
        %v4042 = vrot.slane %v3890, 3
        %v4043 = vrot.slane %v3891, 3
        %v4044 = vrot.slane %v3892, 3
        %v4045 = vrot.slane %v3893, 3
        %v4046 = vrot.slane %v3894, 3
        %v4047 = vrot.slane %v3895, 3
        %v4048 = vrot.slane %v3896, 3
        %v4049 = vrot.slane %v3897, 3
        %v4058 = vxor.u32 %v4042, 2147483648
        %v4059 = vxor.u32 %v4043, 2147483648
        %v4060 = vxor.u32 %v4044, 2147483648
        %v4061 = vxor.u32 %v4045, 2147483648
        %v4062 = vxor.u32 %v4046, 2147483648
        %v4063 = vxor.u32 %v4047, 2147483648
        %v4064 = vxor.u32 %v4048, 2147483648
        %v4065 = vxor.u32 %v4049, 2147483648
        %v4066 = vmul.f32 %v4058, 1.442695
        %v4067 = vpow.pop %v4066
        %v4068 = vmul.f32 %v4059, 1.442695
        %v4069 = vpow.pop %v4068
        %v4070 = vmul.f32 %v4060, 1.442695
        %v4071 = vpow.pop %v4070
        %v4072 = vmul.f32 %v4061, 1.442695
        %v4073 = vpow.pop %v4072
        %v4074 = vmul.f32 %v4062, 1.442695
        %v4075 = vpow.pop %v4074
        %v4076 = vmul.f32 %v4063, 1.442695
        %v4077 = vpow.pop %v4076
        %v4078 = vmul.f32 %v4064, 1.442695
        %v4079 = vpow.pop %v4078
        %v4080 = vmul.f32 %v4065, 1.442695
        %v4081 = vpow.pop %v4080
        %v4082 = vadd.f32 %v4067, 1.0
        %v4083 = vadd.f32 %v4069, 1.0
        %v4084 = vadd.f32 %v4071, 1.0
        %v4085 = vadd.f32 %v4073, 1.0
        %v4086 = vadd.f32 %v4075, 1.0
        %v4087 = vadd.f32 %v4077, 1.0
        %v4088 = vadd.f32 %v4079, 1.0
        %v4089 = vadd.f32 %v4081, 1.0
        %v4090 = vrcp.pop %v4082
        %v4091 = vmul.f32 1.0, %v4090
        %v4092 = vrcp.pop %v4083
        %v4093 = vmul.f32 1.0, %v4092
        %v4094 = vrcp.pop %v4084
        %v4095 = vmul.f32 1.0, %v4094
        %v4096 = vrcp.pop %v4085
        %v4097 = vmul.f32 1.0, %v4096
        %v4098 = vrcp.pop %v4086
        %v4099 = vmul.f32 1.0, %v4098
        %v4100 = vrcp.pop %v4087
        %v4101 = vmul.f32 1.0, %v4100
        %v4102 = vrcp.pop %v4088
        %v4103 = vmul.f32 1.0, %v4102
        %v4104 = vrcp.pop %v4089
        %v4105 = vmul.f32 1.0, %v4104
        %v4107 = vcombine.high %v3525, %v3525
        %v4109 = vunpack.c.l.s4 1966171168
        %v4110 = vunpack.c.0.s8 %v4109
        %v4111 = vlaneseq
        %v4112 = vshrl.u32 %v4111, 7
        %v4113 = vsub.s32 %v4110, %v4112
        %v4114 = vrot.slane %v3525, %v4113
        %v4116 = vunpack.c.l.s4 1966171168
        %v4117 = vunpack.c.0.s8 %v4116
        %v4118 = vlaneseq
        %v4119 = vshrl.u32 %v4118, 7
        %v4120 = vsub.s32 %v4117, %v4119
        %v4121 = vrot.slane %v4107, %v4120
        %v4122 = vcombine.high %v4114, %v4114
        %v4123 = vcombine.high %v4121, %v4121
        %v4125 = vunpack.c.l.s4 1966171168
        %v4126 = vunpack.c.0.s8 %v4125
        %v4127 = vlaneseq
        %v4128 = vshrl.u32 %v4127, 7
        %v4129 = vsub.s32 %v4126, %v4128
        %v4130 = vrot.slane %v4114, %v4129
        %v4132 = vunpack.c.l.s4 1966171168
        %v4133 = vunpack.c.0.s8 %v4132
        %v4134 = vlaneseq
        %v4135 = vshrl.u32 %v4134, 7
        %v4136 = vsub.s32 %v4133, %v4135
        %v4137 = vrot.slane %v4121, %v4136
        %v4139 = vunpack.c.l.s4 1966171168
        %v4140 = vunpack.c.0.s8 %v4139
        %v4141 = vlaneseq
        %v4142 = vshrl.u32 %v4141, 7
        %v4143 = vsub.s32 %v4140, %v4142
        %v4144 = vrot.slane %v4122, %v4143
        %v4146 = vunpack.c.l.s4 1966171168
        %v4147 = vunpack.c.0.s8 %v4146
        %v4148 = vlaneseq
        %v4149 = vshrl.u32 %v4148, 7
        %v4150 = vsub.s32 %v4147, %v4149
        %v4151 = vrot.slane %v4123, %v4150
        %v4152 = vcombine.high %v4130, %v4130
        %v4153 = vcombine.high %v4137, %v4137
        %v4154 = vcombine.high %v4144, %v4144
        %v4155 = vcombine.high %v4151, %v4151
        %v4164 = vmul.f32 %v4003, %v4130
        %v4165 = vmul.f32 %v4005, %v4144
        %v4166 = vmul.f32 %v4007, %v4152
        %v4167 = vmul.f32 %v4009, %v4154
        %v4168 = vmul.f32 %v4011, %v4137
        %v4169 = vmul.f32 %v4013, %v4151
        %v4170 = vmul.f32 %v4015, %v4153
        %v4171 = vmul.f32 %v4017, %v4155
        %v4172 = vmul.f32 %v3931, %v4034
        %v4173 = vmul.f32 %v3933, %v4035
        %v4174 = vmul.f32 %v3935, %v4036
        %v4175 = vmul.f32 %v3937, %v4037
        %v4176 = vmul.f32 %v3939, %v4038
        %v4177 = vmul.f32 %v3941, %v4039
        %v4178 = vmul.f32 %v3943, %v4040
        %v4179 = vmul.f32 %v3945, %v4041
        %v4180 = vadd.f32 %v4164, %v4172
        %v4181 = vadd.f32 %v4165, %v4173
        %v4182 = vadd.f32 %v4166, %v4174
        %v4183 = vadd.f32 %v4167, %v4175
        %v4184 = vadd.f32 %v4168, %v4176
        %v4185 = vadd.f32 %v4169, %v4177
        %v4186 = vadd.f32 %v4170, %v4178
        %v4187 = vadd.f32 %v4171, %v4179
        %v4188 = vtanh.pop %v4180
        %v4189 = vtanh.pop %v4181
        %v4190 = vtanh.pop %v4182
        %v4191 = vtanh.pop %v4183
        %v4192 = vtanh.pop %v4184
        %v4193 = vtanh.pop %v4185
        %v4194 = vtanh.pop %v4186
        %v4195 = vtanh.pop %v4187
        %v4196 = vmul.f32 %v4091, %v4188
        %v4197 = vmul.f32 %v4093, %v4189
        %v4198 = vmul.f32 %v4095, %v4190
        %v4199 = vmul.f32 %v4097, %v4191
        %v4200 = vmul.f32 %v4099, %v4192
        %v4201 = vmul.f32 %v4101, %v4193
        %v4202 = vmul.f32 %v4103, %v4194
        %v4203 = vmul.f32 %v4105, %v4195
        %s4204 = sadd.s32 %s671, 4
        %v4205 = vstv %s4204
        %vm4206 = vcmp.gt.s32.totalorder %v670, %v4205
        %v4207 = vsel %vm4206, 1, 0
        %4208 = vset.pattern.permute.xlu0 0
        %4209 = vperm.xlu0 %4208, %v4207
        %v4210 = vpop.permute.xlu0 %4209
        %vm4211 = vcmp.eq.s32.totalorder %v4210, 1
        %v4220 = vcombine.low %v4180, %v4181
        %v4221 = vcombine.low %v4182, %v4183
        %v4222 = vcombine.low %v4184, %v4185
        %v4223 = vcombine.low %v4186, %v4187
        %v4225 = vunpack.c.l.s4 1966171168
        %v4226 = vunpack.c.0.s8 %v4225
        %v4227 = vlaneseq
        %v4228 = vshrl.u32 %v4227, 7
        %v4229 = vsub.s32 %v4226, %v4228
        %v4230 = vrot.slane %v4220, %v4229
        %v4232 = vunpack.c.l.s4 1966171168
        %v4233 = vunpack.c.0.s8 %v4232
        %v4234 = vlaneseq
        %v4235 = vshrl.u32 %v4234, 7
        %v4236 = vsub.s32 %v4233, %v4235
        %v4237 = vrot.slane %v4221, %v4236
        %v4239 = vunpack.c.l.s4 1966171168
        %v4240 = vunpack.c.0.s8 %v4239
        %v4241 = vlaneseq
        %v4242 = vshrl.u32 %v4241, 7
        %v4243 = vsub.s32 %v4240, %v4242
        %v4244 = vrot.slane %v4222, %v4243
        %v4246 = vunpack.c.l.s4 1966171168
        %v4247 = vunpack.c.0.s8 %v4246
        %v4248 = vlaneseq
        %v4249 = vshrl.u32 %v4248, 7
        %v4250 = vsub.s32 %v4247, %v4249
        %v4251 = vrot.slane %v4223, %v4250
        %v4252 = vcombine.low %v4230, %v4237
        %v4253 = vcombine.low %v4244, %v4251
        %v4255 = vunpack.c.l.s4 1966171168
        %v4256 = vunpack.c.0.s8 %v4255
        %v4257 = vlaneseq
        %v4258 = vshrl.u32 %v4257, 7
        %v4259 = vsub.s32 %v4256, %v4258
        %v4260 = vrot.slane %v4252, %v4259
        %v4262 = vunpack.c.l.s4 1966171168
        %v4263 = vunpack.c.0.s8 %v4262
        %v4264 = vlaneseq
        %v4265 = vshrl.u32 %v4264, 7
        %v4266 = vsub.s32 %v4263, %v4265
        %v4267 = vrot.slane %v4253, %v4266
        %v4268 = vcombine.low %v4260, %v4267
        %v4270 = vsel %vm4211, %v4268, %v3525
        %v4279 = vcombine.low %v4196, %v4197
        %v4280 = vcombine.low %v4198, %v4199
        %v4281 = vcombine.low %v4200, %v4201
        %v4282 = vcombine.low %v4202, %v4203
        %v4284 = vunpack.c.l.s4 1966171168
        %v4285 = vunpack.c.0.s8 %v4284
        %v4286 = vlaneseq
        %v4287 = vshrl.u32 %v4286, 7
        %v4288 = vsub.s32 %v4285, %v4287
        %v4289 = vrot.slane %v4279, %v4288
        %v4291 = vunpack.c.l.s4 1966171168
        %v4292 = vunpack.c.0.s8 %v4291
        %v4293 = vlaneseq
        %v4294 = vshrl.u32 %v4293, 7
        %v4295 = vsub.s32 %v4292, %v4294
        %v4296 = vrot.slane %v4280, %v4295
        %v4298 = vunpack.c.l.s4 1966171168
        %v4299 = vunpack.c.0.s8 %v4298
        %v4300 = vlaneseq
        %v4301 = vshrl.u32 %v4300, 7
        %v4302 = vsub.s32 %v4299, %v4301
        %v4303 = vrot.slane %v4281, %v4302
        %v4305 = vunpack.c.l.s4 1966171168
        %v4306 = vunpack.c.0.s8 %v4305
        %v4307 = vlaneseq
        %v4308 = vshrl.u32 %v4307, 7
        %v4309 = vsub.s32 %v4306, %v4308
        %v4310 = vrot.slane %v4282, %v4309
        %v4311 = vcombine.low %v4289, %v4296
        %v4312 = vcombine.low %v4303, %v4310
        %v4314 = vunpack.c.l.s4 1966171168
        %v4315 = vunpack.c.0.s8 %v4314
        %v4316 = vlaneseq
        %v4317 = vshrl.u32 %v4316, 7
        %v4318 = vsub.s32 %v4315, %v4317
        %v4319 = vrot.slane %v4311, %v4318
        %v4321 = vunpack.c.l.s4 1966171168
        %v4322 = vunpack.c.0.s8 %v4321
        %v4323 = vlaneseq
        %v4324 = vshrl.u32 %v4323, 7
        %v4325 = vsub.s32 %v4322, %v4324
        %v4326 = vrot.slane %v4312, %v4325
        %v4327 = vcombine.low %v4319, %v4326
        %v4329 = vsel %vm4211, %v4327, %v3584
        %v4330 = vsel %vm4211, %v4327, 0.0
        %v4332 = vcombine.high %v4330, %v4330
        %v4334 = vunpack.c.l.s4 1966171168
        %v4335 = vunpack.c.0.s8 %v4334
        %v4336 = vlaneseq
        %v4337 = vshrl.u32 %v4336, 7
        %v4338 = vsub.s32 %v4335, %v4337
        %v4339 = vrot.slane %v4330, %v4338
        %v4341 = vunpack.c.l.s4 1966171168
        %v4342 = vunpack.c.0.s8 %v4341
        %v4343 = vlaneseq
        %v4344 = vshrl.u32 %v4343, 7
        %v4345 = vsub.s32 %v4342, %v4344
        %v4346 = vrot.slane %v4332, %v4345
        %v4347 = vcombine.high %v4339, %v4339
        %v4348 = vcombine.high %v4346, %v4346
        %v4350 = vunpack.c.l.s4 1966171168
        %v4351 = vunpack.c.0.s8 %v4350
        %v4352 = vlaneseq
        %v4353 = vshrl.u32 %v4352, 7
        %v4354 = vsub.s32 %v4351, %v4353
        %v4355 = vrot.slane %v4339, %v4354
        %v4357 = vunpack.c.l.s4 1966171168
        %v4358 = vunpack.c.0.s8 %v4357
        %v4359 = vlaneseq
        %v4360 = vshrl.u32 %v4359, 7
        %v4361 = vsub.s32 %v4358, %v4360
        %v4362 = vrot.slane %v4346, %v4361
        %v4364 = vunpack.c.l.s4 1966171168
        %v4365 = vunpack.c.0.s8 %v4364
        %v4366 = vlaneseq
        %v4367 = vshrl.u32 %v4366, 7
        %v4368 = vsub.s32 %v4365, %v4367
        %v4369 = vrot.slane %v4347, %v4368
        %v4371 = vunpack.c.l.s4 1966171168
        %v4372 = vunpack.c.0.s8 %v4371
        %v4373 = vlaneseq
        %v4374 = vshrl.u32 %v4373, 7
        %v4375 = vsub.s32 %v4372, %v4374
        %v4376 = vrot.slane %v4348, %v4375
        %v4377 = vcombine.high %v4355, %v4355
        %v4378 = vcombine.high %v4362, %v4362
        %v4379 = vcombine.high %v4369, %v4369
        %v4380 = vcombine.high %v4376, %v4376
        %4389 = vst [vmem:[%s270 + $0x4] sm:$0x1] %v4355
        %4390 = vst [vmem:[%s270 + $0xc] sm:$0x1] %v4369
        %4391 = vst [vmem:[%s270 + $0x14] sm:$0x1] %v4377
        %4392 = vst [vmem:[%s270 + $0x1c] sm:$0x1] %v4379
        %4393 = vst [vmem:[%s270 + $0x24] sm:$0x1] %v4362
        %4394 = vst [vmem:[%s270 + $0x2c] sm:$0x1] %v4376
        %4395 = vst [vmem:[%s270 + $0x34] sm:$0x1] %v4378
        %4396 = vst [vmem:[%s270 + $0x3c] sm:$0x1] %v4380
        %s4397 = scalar_lea.vmem [#allocation4], 5
        %v4398 = vld [vmem:[%s4397] ss:$8 sm:$0xf]
        %s4399 = scalar_lea.vmem [#allocation4], 37
        %v4400 = vld [vmem:[%s4399] ss:$8 sm:$0xf]
        %s4401 = scalar_lea.vmem [#allocation4], 69
        %v4402 = vld [vmem:[%s4401] ss:$8 sm:$0xf]
        %s4403 = scalar_lea.vmem [#allocation4], 101
        %v4404 = vld [vmem:[%s4403] ss:$8 sm:$0xf]
        %s4405 = scalar_lea.vmem [#allocation4], 133
        %v4406 = vld [vmem:[%s4405] ss:$8 sm:$0xf]
        %s4407 = scalar_lea.vmem [#allocation4], 165
        %v4408 = vld [vmem:[%s4407] ss:$8 sm:$0xf]
        %s4409 = scalar_lea.vmem [#allocation4], 197
        %v4410 = vld [vmem:[%s4409] ss:$8 sm:$0xf]
        %s4411 = scalar_lea.vmem [#allocation4], 229
        %v4412 = vld [vmem:[%s4411] ss:$8 sm:$0xf]
        %4413 = vmatprep.subr.mxu0 %v607
        %4414 = vmatpush1.msra.mxu0 %v606
        %4415 = vmatprep.subr.mxu0 %v611
        %4416 = vmatpush1.msra.mxu0 %v610
        %4417 = vmatprep.subr.mxu0 %v615
        %4418 = vmatpush1.msra.mxu0 %v614
        %4419 = vmatprep.subr.mxu0 %v619
        %4420 = vmatpush1.msra.mxu0 %v618
        %4421 = vmatprep.subr.mxu0 %v623
        %4422 = vmatpush1.msra.mxu0 %v622
        %4423 = vmatprep.subr.mxu0 %v627
        %4424 = vmatpush1.msra.mxu0 %v626
        %4425 = vmatprep.subr.mxu0 %v631
        %4426 = vmatpush1.msra.mxu0 %v630
        %4427 = vmatprep.subr.mxu0 %v635
        %4428 = vmatpush1.msra.mxu0 %v634
        %4429 = vmatprep.subr.mxu0 %v639
        %4430 = vmatpush1.msra.mxu0 %v638
        %4431 = vmatprep.subr.mxu0 %v643
        %4432 = vmatpush1.msra.mxu0 %v642
        %4433 = vmatprep.subr.mxu0 %v647
        %4434 = vmatpush1.msra.mxu0 %v646
        %4435 = vmatprep.subr.mxu0 %v651
        %4436 = vmatpush1.msra.mxu0 %v650
        %4437 = vmatprep.subr.mxu0 %v655
        %4438 = vmatpush1.msra.mxu0 %v654
        %4439 = vmatprep.subr.mxu0 %v659
        %4440 = vmatpush1.msra.mxu0 %v658
        %4441 = vmatprep.subr.mxu0 %v663
        %4442 = vmatpush1.msra.mxu0 %v662
        %4443 = vmatprep.subr.mxu0 %v667
        %4444 = vmatpush1.msra.mxu0 %v666
        %4445 = vmatprep.subr.mxu0 0.0
        %4446 = vmatpush1.msra.mxu0 0.0
        %4447 = vmatprep.subr.mxu0 0.0
        %4448 = vmatpush1.msra.mxu0 0.0
        %4449 = vmatprep.subr.mxu0 0.0
        %4450 = vmatpush1.msra.mxu0 0.0
        %4451 = vmatprep.subr.mxu0 0.0
        %4452 = vmatpush1.msra.mxu0 0.0
        %4453 = vmatprep.subr.mxu0 0.0
        %4454 = vmatpush1.msra.mxu0 0.0
        %4455 = vmatprep.subr.mxu0 0.0
        %4456 = vmatpush1.msra.mxu0 0.0
        %4457 = vmatprep.subr.mxu0 0.0
        %4458 = vmatpush1.msra.mxu0 0.0
        %4459 = vmatprep.subr.mxu0 0.0
        %4460 = vmatpush1.msra.mxu0 0.0
        %4461 = vmatprep.subr.mxu0 0.0
        %4462 = vmatpush1.msra.mxu0 0.0
        %4463 = vmatprep.subr.mxu0 0.0
        %4464 = vmatpush1.msra.mxu0 0.0
        %4465 = vmatprep.subr.mxu0 0.0
        %4466 = vmatpush1.msra.mxu0 0.0
        %4467 = vmatprep.subr.mxu0 0.0
        %4468 = vmatpush1.msra.mxu0 0.0
        %4469 = vmatprep.subr.mxu0 0.0
        %4470 = vmatpush1.msra.mxu0 0.0
        %4471 = vmatprep.subr.mxu0 0.0
        %4472 = vmatpush1.msra.mxu0 0.0
        %4473 = vmatprep.subr.mxu0 0.0
        %4474 = vmatpush1.msra.mxu0 0.0
        %4475 = vmatprep.subr.mxu0 0.0
        %4476 = vmatpush1.msra.mxu0 0.0
        %4477 = vmatprep.mubr.f32.mxu0 0.0
        %4478 = vmatmul.mubr.f32.gmra.mrb[0].mxu0 %v4329
        %v4479 = vpop.f32.mrb[0].mxu0
        %v4480 = vadd.f32 0.0, %v4479
        %v4481 = vpop.f32.mrb[0].mxu0
        %v4482 = vadd.f32 0.0, %v4481
        %4483 = vdwg.mxu0
        %4484 = vmatprep.subr.mxu0 %v609
        %4485 = vmatpush1.msra.mxu0 %v608
        %4486 = vmatprep.subr.mxu0 %v613
        %4487 = vmatpush1.msra.mxu0 %v612
        %4488 = vmatprep.subr.mxu0 %v617
        %4489 = vmatpush1.msra.mxu0 %v616
        %4490 = vmatprep.subr.mxu0 %v621
        %4491 = vmatpush1.msra.mxu0 %v620
        %4492 = vmatprep.subr.mxu0 %v625
        %4493 = vmatpush1.msra.mxu0 %v624
        %4494 = vmatprep.subr.mxu0 %v629
        %4495 = vmatpush1.msra.mxu0 %v628
        %4496 = vmatprep.subr.mxu0 %v633
        %4497 = vmatpush1.msra.mxu0 %v632
        %4498 = vmatprep.subr.mxu0 %v637
        %4499 = vmatpush1.msra.mxu0 %v636
        %4500 = vmatprep.subr.mxu0 %v641
        %4501 = vmatpush1.msra.mxu0 %v640
        %4502 = vmatprep.subr.mxu0 %v645
        %4503 = vmatpush1.msra.mxu0 %v644
        %4504 = vmatprep.subr.mxu0 %v649
        %4505 = vmatpush1.msra.mxu0 %v648
        %4506 = vmatprep.subr.mxu0 %v653
        %4507 = vmatpush1.msra.mxu0 %v652
        %4508 = vmatprep.subr.mxu0 %v657
        %4509 = vmatpush1.msra.mxu0 %v656
        %4510 = vmatprep.subr.mxu0 %v661
        %4511 = vmatpush1.msra.mxu0 %v660
        %4512 = vmatprep.subr.mxu0 %v665
        %4513 = vmatpush1.msra.mxu0 %v664
        %4514 = vmatprep.subr.mxu0 %v669
        %4515 = vmatpush1.msra.mxu0 %v668
        %4516 = vmatprep.subr.mxu0 0.0
        %4517 = vmatpush1.msra.mxu0 0.0
        %4518 = vmatprep.subr.mxu0 0.0
        %4519 = vmatpush1.msra.mxu0 0.0
        %4520 = vmatprep.subr.mxu0 0.0
        %4521 = vmatpush1.msra.mxu0 0.0
        %4522 = vmatprep.subr.mxu0 0.0
        %4523 = vmatpush1.msra.mxu0 0.0
        %4524 = vmatprep.subr.mxu0 0.0
        %4525 = vmatpush1.msra.mxu0 0.0
        %4526 = vmatprep.subr.mxu0 0.0
        %4527 = vmatpush1.msra.mxu0 0.0
        %4528 = vmatprep.subr.mxu0 0.0
        %4529 = vmatpush1.msra.mxu0 0.0
        %4530 = vmatprep.subr.mxu0 0.0
        %4531 = vmatpush1.msra.mxu0 0.0
        %4532 = vmatprep.subr.mxu0 0.0
        %4533 = vmatpush1.msra.mxu0 0.0
        %4534 = vmatprep.subr.mxu0 0.0
        %4535 = vmatpush1.msra.mxu0 0.0
        %4536 = vmatprep.subr.mxu0 0.0
        %4537 = vmatpush1.msra.mxu0 0.0
        %4538 = vmatprep.subr.mxu0 0.0
        %4539 = vmatpush1.msra.mxu0 0.0
        %4540 = vmatprep.subr.mxu0 0.0
        %4541 = vmatpush1.msra.mxu0 0.0
        %4542 = vmatprep.subr.mxu0 0.0
        %4543 = vmatpush1.msra.mxu0 0.0
        %4544 = vmatprep.subr.mxu0 0.0
        %4545 = vmatpush1.msra.mxu0 0.0
        %4546 = vmatprep.subr.mxu0 0.0
        %4547 = vmatpush1.msra.mxu0 0.0
        %4548 = vmatprep.mubr.f32.mxu0 0.0
        %4549 = vmatmul.mubr.f32.gmra.mrb[0].mxu0 %v4329
        %v4550 = vpop.f32.mrb[0].mxu0
        %v4551 = vadd.f32 0.0, %v4550
        %v4552 = vpop.f32.mrb[0].mxu0
        %v4553 = vadd.f32 0.0, %v4552
        %4554 = vdwg.mxu0
        %v4559 = vcombine.low %v4480, %v4482
        %v4560 = vcombine.high %v4480, %v4482
        %v4561 = vcombine.low %v4551, %v4553
        %v4562 = vcombine.high %v4551, %v4553
        %v4564 = vunpack.c.l.s4 1966171168
        %v4565 = vunpack.c.0.s8 %v4564
        %v4566 = vlaneseq
        %v4567 = vshrl.u32 %v4566, 7
        %v4568 = vsub.s32 %v4565, %v4567
        %v4569 = vrot.slane %v4559, %v4568
        %v4571 = vunpack.c.l.s4 1966171168
        %v4572 = vunpack.c.0.s8 %v4571
        %v4573 = vlaneseq
        %v4574 = vshrl.u32 %v4573, 7
        %v4575 = vsub.s32 %v4572, %v4574
        %v4576 = vrot.slane %v4560, %v4575
        %v4578 = vunpack.c.l.s4 1966171168
        %v4579 = vunpack.c.0.s8 %v4578
        %v4580 = vlaneseq
        %v4581 = vshrl.u32 %v4580, 7
        %v4582 = vsub.s32 %v4579, %v4581
        %v4583 = vrot.slane %v4561, %v4582
        %v4585 = vunpack.c.l.s4 1966171168
        %v4586 = vunpack.c.0.s8 %v4585
        %v4587 = vlaneseq
        %v4588 = vshrl.u32 %v4587, 7
        %v4589 = vsub.s32 %v4586, %v4588
        %v4590 = vrot.slane %v4562, %v4589
        %v4591 = vcombine.low %v4569, %v4583
        %v4592 = vcombine.high %v4569, %v4583
        %v4593 = vcombine.low %v4576, %v4590
        %v4594 = vcombine.high %v4576, %v4590
        %v4596 = vunpack.c.l.s4 1966171168
        %v4597 = vunpack.c.0.s8 %v4596
        %v4598 = vlaneseq
        %v4599 = vshrl.u32 %v4598, 7
        %v4600 = vsub.s32 %v4597, %v4599
        %v4601 = vrot.slane %v4591, %v4600
        %v4603 = vunpack.c.l.s4 1966171168
        %v4604 = vunpack.c.0.s8 %v4603
        %v4605 = vlaneseq
        %v4606 = vshrl.u32 %v4605, 7
        %v4607 = vsub.s32 %v4604, %v4606
        %v4608 = vrot.slane %v4593, %v4607
        %v4610 = vunpack.c.l.s4 1966171168
        %v4611 = vunpack.c.0.s8 %v4610
        %v4612 = vlaneseq
        %v4613 = vshrl.u32 %v4612, 7
        %v4614 = vsub.s32 %v4611, %v4613
        %v4615 = vrot.slane %v4592, %v4614
        %v4617 = vunpack.c.l.s4 1966171168
        %v4618 = vunpack.c.0.s8 %v4617
        %v4619 = vlaneseq
        %v4620 = vshrl.u32 %v4619, 7
        %v4621 = vsub.s32 %v4618, %v4620
        %v4622 = vrot.slane %v4594, %v4621
        %v4623 = vcombine.high %v4601, %v4601
        %v4624 = vcombine.high %v4608, %v4608
        %v4625 = vcombine.high %v4615, %v4615
        %v4626 = vcombine.high %v4622, %v4622
        %v4635 = vadd.f32 %v4398, %v4601
        %v4636 = vadd.f32 %v4400, %v4615
        %v4637 = vadd.f32 %v4402, %v4623
        %v4638 = vadd.f32 %v4404, %v4625
        %v4639 = vadd.f32 %v4406, %v4608
        %v4640 = vadd.f32 %v4408, %v4622
        %v4641 = vadd.f32 %v4410, %v4624
        %v4642 = vadd.f32 %v4412, %v4626
        %v4643 = vxor.u32 %v4635, 2147483648
        %v4644 = vxor.u32 %v4636, 2147483648
        %v4645 = vxor.u32 %v4637, 2147483648
        %v4646 = vxor.u32 %v4638, 2147483648
        %v4647 = vxor.u32 %v4639, 2147483648
        %v4648 = vxor.u32 %v4640, 2147483648
        %v4649 = vxor.u32 %v4641, 2147483648
        %v4650 = vxor.u32 %v4642, 2147483648
        %v4651 = vmul.f32 %v4643, 1.442695
        %v4652 = vpow.pop %v4651
        %v4653 = vmul.f32 %v4644, 1.442695
        %v4654 = vpow.pop %v4653
        %v4655 = vmul.f32 %v4645, 1.442695
        %v4656 = vpow.pop %v4655
        %v4657 = vmul.f32 %v4646, 1.442695
        %v4658 = vpow.pop %v4657
        %v4659 = vmul.f32 %v4647, 1.442695
        %v4660 = vpow.pop %v4659
        %v4661 = vmul.f32 %v4648, 1.442695
        %v4662 = vpow.pop %v4661
        %v4663 = vmul.f32 %v4649, 1.442695
        %v4664 = vpow.pop %v4663
        %v4665 = vmul.f32 %v4650, 1.442695
        %v4666 = vpow.pop %v4665
        %v4667 = vadd.f32 %v4652, 1.0
        %v4668 = vadd.f32 %v4654, 1.0
        %v4669 = vadd.f32 %v4656, 1.0
        %v4670 = vadd.f32 %v4658, 1.0
        %v4671 = vadd.f32 %v4660, 1.0
        %v4672 = vadd.f32 %v4662, 1.0
        %v4673 = vadd.f32 %v4664, 1.0
        %v4674 = vadd.f32 %v4666, 1.0
        %v4675 = vrcp.pop %v4667
        %v4676 = vmul.f32 1.0, %v4675
        %v4677 = vrcp.pop %v4668
        %v4678 = vmul.f32 1.0, %v4677
        %v4679 = vrcp.pop %v4669
        %v4680 = vmul.f32 1.0, %v4679
        %v4681 = vrcp.pop %v4670
        %v4682 = vmul.f32 1.0, %v4681
        %v4683 = vrcp.pop %v4671
        %v4684 = vmul.f32 1.0, %v4683
        %v4685 = vrcp.pop %v4672
        %v4686 = vmul.f32 1.0, %v4685
        %v4687 = vrcp.pop %v4673
        %v4688 = vmul.f32 1.0, %v4687
        %v4689 = vrcp.pop %v4674
        %v4690 = vmul.f32 1.0, %v4689
        %v4699 = vrot.slane %v4635, 1
        %v4700 = vrot.slane %v4636, 1
        %v4701 = vrot.slane %v4637, 1
        %v4702 = vrot.slane %v4638, 1
        %v4703 = vrot.slane %v4639, 1
        %v4704 = vrot.slane %v4640, 1
        %v4705 = vrot.slane %v4641, 1
        %v4706 = vrot.slane %v4642, 1
        %v4715 = vxor.u32 %v4699, 2147483648
        %v4716 = vxor.u32 %v4700, 2147483648
        %v4717 = vxor.u32 %v4701, 2147483648
        %v4718 = vxor.u32 %v4702, 2147483648
        %v4719 = vxor.u32 %v4703, 2147483648
        %v4720 = vxor.u32 %v4704, 2147483648
        %v4721 = vxor.u32 %v4705, 2147483648
        %v4722 = vxor.u32 %v4706, 2147483648
        %v4723 = vmul.f32 %v4715, 1.442695
        %v4724 = vpow.pop %v4723
        %v4725 = vmul.f32 %v4716, 1.442695
        %v4726 = vpow.pop %v4725
        %v4727 = vmul.f32 %v4717, 1.442695
        %v4728 = vpow.pop %v4727
        %v4729 = vmul.f32 %v4718, 1.442695
        %v4730 = vpow.pop %v4729
        %v4731 = vmul.f32 %v4719, 1.442695
        %v4732 = vpow.pop %v4731
        %v4733 = vmul.f32 %v4720, 1.442695
        %v4734 = vpow.pop %v4733
        %v4735 = vmul.f32 %v4721, 1.442695
        %v4736 = vpow.pop %v4735
        %v4737 = vmul.f32 %v4722, 1.442695
        %v4738 = vpow.pop %v4737
        %v4739 = vadd.f32 %v4724, 1.0
        %v4740 = vadd.f32 %v4726, 1.0
        %v4741 = vadd.f32 %v4728, 1.0
        %v4742 = vadd.f32 %v4730, 1.0
        %v4743 = vadd.f32 %v4732, 1.0
        %v4744 = vadd.f32 %v4734, 1.0
        %v4745 = vadd.f32 %v4736, 1.0
        %v4746 = vadd.f32 %v4738, 1.0
        %v4747 = vrcp.pop %v4739
        %v4748 = vmul.f32 1.0, %v4747
        %v4749 = vrcp.pop %v4740
        %v4750 = vmul.f32 1.0, %v4749
        %v4751 = vrcp.pop %v4741
        %v4752 = vmul.f32 1.0, %v4751
        %v4753 = vrcp.pop %v4742
        %v4754 = vmul.f32 1.0, %v4753
        %v4755 = vrcp.pop %v4743
        %v4756 = vmul.f32 1.0, %v4755
        %v4757 = vrcp.pop %v4744
        %v4758 = vmul.f32 1.0, %v4757
        %v4759 = vrcp.pop %v4745
        %v4760 = vmul.f32 1.0, %v4759
        %v4761 = vrcp.pop %v4746
        %v4762 = vmul.f32 1.0, %v4761
        %v4763 = vrot.slane %v4635, 2
        %v4764 = vrot.slane %v4636, 2
        %v4765 = vrot.slane %v4637, 2
        %v4766 = vrot.slane %v4638, 2
        %v4767 = vrot.slane %v4639, 2
        %v4768 = vrot.slane %v4640, 2
        %v4769 = vrot.slane %v4641, 2
        %v4770 = vrot.slane %v4642, 2
        %v4779 = vtanh.pop %v4763
        %v4780 = vtanh.pop %v4764
        %v4781 = vtanh.pop %v4765
        %v4782 = vtanh.pop %v4766
        %v4783 = vtanh.pop %v4767
        %v4784 = vtanh.pop %v4768
        %v4785 = vtanh.pop %v4769
        %v4786 = vtanh.pop %v4770
        %v4787 = vrot.slane %v4635, 3
        %v4788 = vrot.slane %v4636, 3
        %v4789 = vrot.slane %v4637, 3
        %v4790 = vrot.slane %v4638, 3
        %v4791 = vrot.slane %v4639, 3
        %v4792 = vrot.slane %v4640, 3
        %v4793 = vrot.slane %v4641, 3
        %v4794 = vrot.slane %v4642, 3
        %v4803 = vxor.u32 %v4787, 2147483648
        %v4804 = vxor.u32 %v4788, 2147483648
        %v4805 = vxor.u32 %v4789, 2147483648
        %v4806 = vxor.u32 %v4790, 2147483648
        %v4807 = vxor.u32 %v4791, 2147483648
        %v4808 = vxor.u32 %v4792, 2147483648
        %v4809 = vxor.u32 %v4793, 2147483648
        %v4810 = vxor.u32 %v4794, 2147483648
        %v4811 = vmul.f32 %v4803, 1.442695
        %v4812 = vpow.pop %v4811
        %v4813 = vmul.f32 %v4804, 1.442695
        %v4814 = vpow.pop %v4813
        %v4815 = vmul.f32 %v4805, 1.442695
        %v4816 = vpow.pop %v4815
        %v4817 = vmul.f32 %v4806, 1.442695
        %v4818 = vpow.pop %v4817
        %v4819 = vmul.f32 %v4807, 1.442695
        %v4820 = vpow.pop %v4819
        %v4821 = vmul.f32 %v4808, 1.442695
        %v4822 = vpow.pop %v4821
        %v4823 = vmul.f32 %v4809, 1.442695
        %v4824 = vpow.pop %v4823
        %v4825 = vmul.f32 %v4810, 1.442695
        %v4826 = vpow.pop %v4825
        %v4827 = vadd.f32 %v4812, 1.0
        %v4828 = vadd.f32 %v4814, 1.0
        %v4829 = vadd.f32 %v4816, 1.0
        %v4830 = vadd.f32 %v4818, 1.0
        %v4831 = vadd.f32 %v4820, 1.0
        %v4832 = vadd.f32 %v4822, 1.0
        %v4833 = vadd.f32 %v4824, 1.0
        %v4834 = vadd.f32 %v4826, 1.0
        %v4835 = vrcp.pop %v4827
        %v4836 = vmul.f32 1.0, %v4835
        %v4837 = vrcp.pop %v4828
        %v4838 = vmul.f32 1.0, %v4837
        %v4839 = vrcp.pop %v4829
        %v4840 = vmul.f32 1.0, %v4839
        %v4841 = vrcp.pop %v4830
        %v4842 = vmul.f32 1.0, %v4841
        %v4843 = vrcp.pop %v4831
        %v4844 = vmul.f32 1.0, %v4843
        %v4845 = vrcp.pop %v4832
        %v4846 = vmul.f32 1.0, %v4845
        %v4847 = vrcp.pop %v4833
        %v4848 = vmul.f32 1.0, %v4847
        %v4849 = vrcp.pop %v4834
        %v4850 = vmul.f32 1.0, %v4849
        %v4852 = vcombine.high %v4270, %v4270
        %v4854 = vunpack.c.l.s4 1966171168
        %v4855 = vunpack.c.0.s8 %v4854
        %v4856 = vlaneseq
        %v4857 = vshrl.u32 %v4856, 7
        %v4858 = vsub.s32 %v4855, %v4857
        %v4859 = vrot.slane %v4270, %v4858
        %v4861 = vunpack.c.l.s4 1966171168
        %v4862 = vunpack.c.0.s8 %v4861
        %v4863 = vlaneseq
        %v4864 = vshrl.u32 %v4863, 7
        %v4865 = vsub.s32 %v4862, %v4864
        %v4866 = vrot.slane %v4852, %v4865
        %v4867 = vcombine.high %v4859, %v4859
        %v4868 = vcombine.high %v4866, %v4866
        %v4870 = vunpack.c.l.s4 1966171168
        %v4871 = vunpack.c.0.s8 %v4870
        %v4872 = vlaneseq
        %v4873 = vshrl.u32 %v4872, 7
        %v4874 = vsub.s32 %v4871, %v4873
        %v4875 = vrot.slane %v4859, %v4874
        %v4877 = vunpack.c.l.s4 1966171168
        %v4878 = vunpack.c.0.s8 %v4877
        %v4879 = vlaneseq
        %v4880 = vshrl.u32 %v4879, 7
        %v4881 = vsub.s32 %v4878, %v4880
        %v4882 = vrot.slane %v4866, %v4881
        %v4884 = vunpack.c.l.s4 1966171168
        %v4885 = vunpack.c.0.s8 %v4884
        %v4886 = vlaneseq
        %v4887 = vshrl.u32 %v4886, 7
        %v4888 = vsub.s32 %v4885, %v4887
        %v4889 = vrot.slane %v4867, %v4888
        %v4891 = vunpack.c.l.s4 1966171168
        %v4892 = vunpack.c.0.s8 %v4891
        %v4893 = vlaneseq
        %v4894 = vshrl.u32 %v4893, 7
        %v4895 = vsub.s32 %v4892, %v4894
        %v4896 = vrot.slane %v4868, %v4895
        %v4897 = vcombine.high %v4875, %v4875
        %v4898 = vcombine.high %v4882, %v4882
        %v4899 = vcombine.high %v4889, %v4889
        %v4900 = vcombine.high %v4896, %v4896
        %v4909 = vmul.f32 %v4748, %v4875
        %v4910 = vmul.f32 %v4750, %v4889
        %v4911 = vmul.f32 %v4752, %v4897
        %v4912 = vmul.f32 %v4754, %v4899
        %v4913 = vmul.f32 %v4756, %v4882
        %v4914 = vmul.f32 %v4758, %v4896
        %v4915 = vmul.f32 %v4760, %v4898
        %v4916 = vmul.f32 %v4762, %v4900
        %v4917 = vmul.f32 %v4676, %v4779
        %v4918 = vmul.f32 %v4678, %v4780
        %v4919 = vmul.f32 %v4680, %v4781
        %v4920 = vmul.f32 %v4682, %v4782
        %v4921 = vmul.f32 %v4684, %v4783
        %v4922 = vmul.f32 %v4686, %v4784
        %v4923 = vmul.f32 %v4688, %v4785
        %v4924 = vmul.f32 %v4690, %v4786
        %v4925 = vadd.f32 %v4909, %v4917
        %v4926 = vadd.f32 %v4910, %v4918
        %v4927 = vadd.f32 %v4911, %v4919
        %v4928 = vadd.f32 %v4912, %v4920
        %v4929 = vadd.f32 %v4913, %v4921
        %v4930 = vadd.f32 %v4914, %v4922
        %v4931 = vadd.f32 %v4915, %v4923
        %v4932 = vadd.f32 %v4916, %v4924
        %v4933 = vtanh.pop %v4925
        %v4934 = vtanh.pop %v4926
        %v4935 = vtanh.pop %v4927
        %v4936 = vtanh.pop %v4928
        %v4937 = vtanh.pop %v4929
        %v4938 = vtanh.pop %v4930
        %v4939 = vtanh.pop %v4931
        %v4940 = vtanh.pop %v4932
        %v4941 = vmul.f32 %v4836, %v4933
        %v4942 = vmul.f32 %v4838, %v4934
        %v4943 = vmul.f32 %v4840, %v4935
        %v4944 = vmul.f32 %v4842, %v4936
        %v4945 = vmul.f32 %v4844, %v4937
        %v4946 = vmul.f32 %v4846, %v4938
        %v4947 = vmul.f32 %v4848, %v4939
        %v4948 = vmul.f32 %v4850, %v4940
        %s4949 = sadd.s32 %s671, 5
        %v4950 = vstv %s4949
        %vm4951 = vcmp.gt.s32.totalorder %v670, %v4950
        %v4952 = vsel %vm4951, 1, 0
        %4953 = vset.pattern.permute.xlu0 0
        %4954 = vperm.xlu0 %4953, %v4952
        %v4955 = vpop.permute.xlu0 %4954
        %vm4956 = vcmp.eq.s32.totalorder %v4955, 1
        %v4965 = vcombine.low %v4925, %v4926
        %v4966 = vcombine.low %v4927, %v4928
        %v4967 = vcombine.low %v4929, %v4930
        %v4968 = vcombine.low %v4931, %v4932
        %v4970 = vunpack.c.l.s4 1966171168
        %v4971 = vunpack.c.0.s8 %v4970
        %v4972 = vlaneseq
        %v4973 = vshrl.u32 %v4972, 7
        %v4974 = vsub.s32 %v4971, %v4973
        %v4975 = vrot.slane %v4965, %v4974
        %v4977 = vunpack.c.l.s4 1966171168
        %v4978 = vunpack.c.0.s8 %v4977
        %v4979 = vlaneseq
        %v4980 = vshrl.u32 %v4979, 7
        %v4981 = vsub.s32 %v4978, %v4980
        %v4982 = vrot.slane %v4966, %v4981
        %v4984 = vunpack.c.l.s4 1966171168
        %v4985 = vunpack.c.0.s8 %v4984
        %v4986 = vlaneseq
        %v4987 = vshrl.u32 %v4986, 7
        %v4988 = vsub.s32 %v4985, %v4987
        %v4989 = vrot.slane %v4967, %v4988
        %v4991 = vunpack.c.l.s4 1966171168
        %v4992 = vunpack.c.0.s8 %v4991
        %v4993 = vlaneseq
        %v4994 = vshrl.u32 %v4993, 7
        %v4995 = vsub.s32 %v4992, %v4994
        %v4996 = vrot.slane %v4968, %v4995
        %v4997 = vcombine.low %v4975, %v4982
        %v4998 = vcombine.low %v4989, %v4996
        %v5000 = vunpack.c.l.s4 1966171168
        %v5001 = vunpack.c.0.s8 %v5000
        %v5002 = vlaneseq
        %v5003 = vshrl.u32 %v5002, 7
        %v5004 = vsub.s32 %v5001, %v5003
        %v5005 = vrot.slane %v4997, %v5004
        %v5007 = vunpack.c.l.s4 1966171168
        %v5008 = vunpack.c.0.s8 %v5007
        %v5009 = vlaneseq
        %v5010 = vshrl.u32 %v5009, 7
        %v5011 = vsub.s32 %v5008, %v5010
        %v5012 = vrot.slane %v4998, %v5011
        %v5013 = vcombine.low %v5005, %v5012
        %v5015 = vsel %vm4956, %v5013, %v4270
        %v5024 = vcombine.low %v4941, %v4942
        %v5025 = vcombine.low %v4943, %v4944
        %v5026 = vcombine.low %v4945, %v4946
        %v5027 = vcombine.low %v4947, %v4948
        %v5029 = vunpack.c.l.s4 1966171168
        %v5030 = vunpack.c.0.s8 %v5029
        %v5031 = vlaneseq
        %v5032 = vshrl.u32 %v5031, 7
        %v5033 = vsub.s32 %v5030, %v5032
        %v5034 = vrot.slane %v5024, %v5033
        %v5036 = vunpack.c.l.s4 1966171168
        %v5037 = vunpack.c.0.s8 %v5036
        %v5038 = vlaneseq
        %v5039 = vshrl.u32 %v5038, 7
        %v5040 = vsub.s32 %v5037, %v5039
        %v5041 = vrot.slane %v5025, %v5040
        %v5043 = vunpack.c.l.s4 1966171168
        %v5044 = vunpack.c.0.s8 %v5043
        %v5045 = vlaneseq
        %v5046 = vshrl.u32 %v5045, 7
        %v5047 = vsub.s32 %v5044, %v5046
        %v5048 = vrot.slane %v5026, %v5047
        %v5050 = vunpack.c.l.s4 1966171168
        %v5051 = vunpack.c.0.s8 %v5050
        %v5052 = vlaneseq
        %v5053 = vshrl.u32 %v5052, 7
        %v5054 = vsub.s32 %v5051, %v5053
        %v5055 = vrot.slane %v5027, %v5054
        %v5056 = vcombine.low %v5034, %v5041
        %v5057 = vcombine.low %v5048, %v5055
        %v5059 = vunpack.c.l.s4 1966171168
        %v5060 = vunpack.c.0.s8 %v5059
        %v5061 = vlaneseq
        %v5062 = vshrl.u32 %v5061, 7
        %v5063 = vsub.s32 %v5060, %v5062
        %v5064 = vrot.slane %v5056, %v5063
        %v5066 = vunpack.c.l.s4 1966171168
        %v5067 = vunpack.c.0.s8 %v5066
        %v5068 = vlaneseq
        %v5069 = vshrl.u32 %v5068, 7
        %v5070 = vsub.s32 %v5067, %v5069
        %v5071 = vrot.slane %v5057, %v5070
        %v5072 = vcombine.low %v5064, %v5071
        %v5074 = vsel %vm4956, %v5072, %v4329
        %v5075 = vsel %vm4956, %v5072, 0.0
        %v5077 = vcombine.high %v5075, %v5075
        %v5079 = vunpack.c.l.s4 1966171168
        %v5080 = vunpack.c.0.s8 %v5079
        %v5081 = vlaneseq
        %v5082 = vshrl.u32 %v5081, 7
        %v5083 = vsub.s32 %v5080, %v5082
        %v5084 = vrot.slane %v5075, %v5083
        %v5086 = vunpack.c.l.s4 1966171168
        %v5087 = vunpack.c.0.s8 %v5086
        %v5088 = vlaneseq
        %v5089 = vshrl.u32 %v5088, 7
        %v5090 = vsub.s32 %v5087, %v5089
        %v5091 = vrot.slane %v5077, %v5090
        %v5092 = vcombine.high %v5084, %v5084
        %v5093 = vcombine.high %v5091, %v5091
        %v5095 = vunpack.c.l.s4 1966171168
        %v5096 = vunpack.c.0.s8 %v5095
        %v5097 = vlaneseq
        %v5098 = vshrl.u32 %v5097, 7
        %v5099 = vsub.s32 %v5096, %v5098
        %v5100 = vrot.slane %v5084, %v5099
        %v5102 = vunpack.c.l.s4 1966171168
        %v5103 = vunpack.c.0.s8 %v5102
        %v5104 = vlaneseq
        %v5105 = vshrl.u32 %v5104, 7
        %v5106 = vsub.s32 %v5103, %v5105
        %v5107 = vrot.slane %v5091, %v5106
        %v5109 = vunpack.c.l.s4 1966171168
        %v5110 = vunpack.c.0.s8 %v5109
        %v5111 = vlaneseq
        %v5112 = vshrl.u32 %v5111, 7
        %v5113 = vsub.s32 %v5110, %v5112
        %v5114 = vrot.slane %v5092, %v5113
        %v5116 = vunpack.c.l.s4 1966171168
        %v5117 = vunpack.c.0.s8 %v5116
        %v5118 = vlaneseq
        %v5119 = vshrl.u32 %v5118, 7
        %v5120 = vsub.s32 %v5117, %v5119
        %v5121 = vrot.slane %v5093, %v5120
        %v5122 = vcombine.high %v5100, %v5100
        %v5123 = vcombine.high %v5107, %v5107
        %v5124 = vcombine.high %v5114, %v5114
        %v5125 = vcombine.high %v5121, %v5121
        %5134 = vst [vmem:[%s270 + $0x5] sm:$0x1] %v5100
        %5135 = vst [vmem:[%s270 + $0xd] sm:$0x1] %v5114
        %5136 = vst [vmem:[%s270 + $0x15] sm:$0x1] %v5122
        %5137 = vst [vmem:[%s270 + $0x1d] sm:$0x1] %v5124
        %5138 = vst [vmem:[%s270 + $0x25] sm:$0x1] %v5107
        %5139 = vst [vmem:[%s270 + $0x2d] sm:$0x1] %v5121
        %5140 = vst [vmem:[%s270 + $0x35] sm:$0x1] %v5123
        %5141 = vst [vmem:[%s270 + $0x3d] sm:$0x1] %v5125
        %s5142 = scalar_lea.vmem [#allocation4], 6
        %v5143 = vld [vmem:[%s5142] ss:$8 sm:$0xf]
        %s5144 = scalar_lea.vmem [#allocation4], 38
        %v5145 = vld [vmem:[%s5144] ss:$8 sm:$0xf]
        %s5146 = scalar_lea.vmem [#allocation4], 70
        %v5147 = vld [vmem:[%s5146] ss:$8 sm:$0xf]
        %s5148 = scalar_lea.vmem [#allocation4], 102
        %v5149 = vld [vmem:[%s5148] ss:$8 sm:$0xf]
        %s5150 = scalar_lea.vmem [#allocation4], 134
        %v5151 = vld [vmem:[%s5150] ss:$8 sm:$0xf]
        %s5152 = scalar_lea.vmem [#allocation4], 166
        %v5153 = vld [vmem:[%s5152] ss:$8 sm:$0xf]
        %s5154 = scalar_lea.vmem [#allocation4], 198
        %v5155 = vld [vmem:[%s5154] ss:$8 sm:$0xf]
        %s5156 = scalar_lea.vmem [#allocation4], 230
        %v5157 = vld [vmem:[%s5156] ss:$8 sm:$0xf]
        %5158 = vmatprep.subr.mxu0 %v607
        %5159 = vmatpush1.msra.mxu0 %v606
        %5160 = vmatprep.subr.mxu0 %v611
        %5161 = vmatpush1.msra.mxu0 %v610
        %5162 = vmatprep.subr.mxu0 %v615
        %5163 = vmatpush1.msra.mxu0 %v614
        %5164 = vmatprep.subr.mxu0 %v619
        %5165 = vmatpush1.msra.mxu0 %v618
        %5166 = vmatprep.subr.mxu0 %v623
        %5167 = vmatpush1.msra.mxu0 %v622
        %5168 = vmatprep.subr.mxu0 %v627
        %5169 = vmatpush1.msra.mxu0 %v626
        %5170 = vmatprep.subr.mxu0 %v631
        %5171 = vmatpush1.msra.mxu0 %v630
        %5172 = vmatprep.subr.mxu0 %v635
        %5173 = vmatpush1.msra.mxu0 %v634
        %5174 = vmatprep.subr.mxu0 %v639
        %5175 = vmatpush1.msra.mxu0 %v638
        %5176 = vmatprep.subr.mxu0 %v643
        %5177 = vmatpush1.msra.mxu0 %v642
        %5178 = vmatprep.subr.mxu0 %v647
        %5179 = vmatpush1.msra.mxu0 %v646
        %5180 = vmatprep.subr.mxu0 %v651
        %5181 = vmatpush1.msra.mxu0 %v650
        %5182 = vmatprep.subr.mxu0 %v655
        %5183 = vmatpush1.msra.mxu0 %v654
        %5184 = vmatprep.subr.mxu0 %v659
        %5185 = vmatpush1.msra.mxu0 %v658
        %5186 = vmatprep.subr.mxu0 %v663
        %5187 = vmatpush1.msra.mxu0 %v662
        %5188 = vmatprep.subr.mxu0 %v667
        %5189 = vmatpush1.msra.mxu0 %v666
        %5190 = vmatprep.subr.mxu0 0.0
        %5191 = vmatpush1.msra.mxu0 0.0
        %5192 = vmatprep.subr.mxu0 0.0
        %5193 = vmatpush1.msra.mxu0 0.0
        %5194 = vmatprep.subr.mxu0 0.0
        %5195 = vmatpush1.msra.mxu0 0.0
        %5196 = vmatprep.subr.mxu0 0.0
        %5197 = vmatpush1.msra.mxu0 0.0
        %5198 = vmatprep.subr.mxu0 0.0
        %5199 = vmatpush1.msra.mxu0 0.0
        %5200 = vmatprep.subr.mxu0 0.0
        %5201 = vmatpush1.msra.mxu0 0.0
        %5202 = vmatprep.subr.mxu0 0.0
        %5203 = vmatpush1.msra.mxu0 0.0
        %5204 = vmatprep.subr.mxu0 0.0
        %5205 = vmatpush1.msra.mxu0 0.0
        %5206 = vmatprep.subr.mxu0 0.0
        %5207 = vmatpush1.msra.mxu0 0.0
        %5208 = vmatprep.subr.mxu0 0.0
        %5209 = vmatpush1.msra.mxu0 0.0
        %5210 = vmatprep.subr.mxu0 0.0
        %5211 = vmatpush1.msra.mxu0 0.0
        %5212 = vmatprep.subr.mxu0 0.0
        %5213 = vmatpush1.msra.mxu0 0.0
        %5214 = vmatprep.subr.mxu0 0.0
        %5215 = vmatpush1.msra.mxu0 0.0
        %5216 = vmatprep.subr.mxu0 0.0
        %5217 = vmatpush1.msra.mxu0 0.0
        %5218 = vmatprep.subr.mxu0 0.0
        %5219 = vmatpush1.msra.mxu0 0.0
        %5220 = vmatprep.subr.mxu0 0.0
        %5221 = vmatpush1.msra.mxu0 0.0
        %5222 = vmatprep.mubr.f32.mxu0 0.0
        %5223 = vmatmul.mubr.f32.gmra.mrb[0].mxu0 %v5074
        %v5224 = vpop.f32.mrb[0].mxu0
        %v5225 = vadd.f32 0.0, %v5224
        %v5226 = vpop.f32.mrb[0].mxu0
        %v5227 = vadd.f32 0.0, %v5226
        %5228 = vdwg.mxu0
        %5229 = vmatprep.subr.mxu0 %v609
        %5230 = vmatpush1.msra.mxu0 %v608
        %5231 = vmatprep.subr.mxu0 %v613
        %5232 = vmatpush1.msra.mxu0 %v612
        %5233 = vmatprep.subr.mxu0 %v617
        %5234 = vmatpush1.msra.mxu0 %v616
        %5235 = vmatprep.subr.mxu0 %v621
        %5236 = vmatpush1.msra.mxu0 %v620
        %5237 = vmatprep.subr.mxu0 %v625
        %5238 = vmatpush1.msra.mxu0 %v624
        %5239 = vmatprep.subr.mxu0 %v629
        %5240 = vmatpush1.msra.mxu0 %v628
        %5241 = vmatprep.subr.mxu0 %v633
        %5242 = vmatpush1.msra.mxu0 %v632
        %5243 = vmatprep.subr.mxu0 %v637
        %5244 = vmatpush1.msra.mxu0 %v636
        %5245 = vmatprep.subr.mxu0 %v641
        %5246 = vmatpush1.msra.mxu0 %v640
        %5247 = vmatprep.subr.mxu0 %v645
        %5248 = vmatpush1.msra.mxu0 %v644
        %5249 = vmatprep.subr.mxu0 %v649
        %5250 = vmatpush1.msra.mxu0 %v648
        %5251 = vmatprep.subr.mxu0 %v653
        %5252 = vmatpush1.msra.mxu0 %v652
        %5253 = vmatprep.subr.mxu0 %v657
        %5254 = vmatpush1.msra.mxu0 %v656
        %5255 = vmatprep.subr.mxu0 %v661
        %5256 = vmatpush1.msra.mxu0 %v660
        %5257 = vmatprep.subr.mxu0 %v665
        %5258 = vmatpush1.msra.mxu0 %v664
        %5259 = vmatprep.subr.mxu0 %v669
        %5260 = vmatpush1.msra.mxu0 %v668
        %5261 = vmatprep.subr.mxu0 0.0
        %5262 = vmatpush1.msra.mxu0 0.0
        %5263 = vmatprep.subr.mxu0 0.0
        %5264 = vmatpush1.msra.mxu0 0.0
        %5265 = vmatprep.subr.mxu0 0.0
        %5266 = vmatpush1.msra.mxu0 0.0
        %5267 = vmatprep.subr.mxu0 0.0
        %5268 = vmatpush1.msra.mxu0 0.0
        %5269 = vmatprep.subr.mxu0 0.0
        %5270 = vmatpush1.msra.mxu0 0.0
        %5271 = vmatprep.subr.mxu0 0.0
        %5272 = vmatpush1.msra.mxu0 0.0
        %5273 = vmatprep.subr.mxu0 0.0
        %5274 = vmatpush1.msra.mxu0 0.0
        %5275 = vmatprep.subr.mxu0 0.0
        %5276 = vmatpush1.msra.mxu0 0.0
        %5277 = vmatprep.subr.mxu0 0.0
        %5278 = vmatpush1.msra.mxu0 0.0
        %5279 = vmatprep.subr.mxu0 0.0
        %5280 = vmatpush1.msra.mxu0 0.0
        %5281 = vmatprep.subr.mxu0 0.0
        %5282 = vmatpush1.msra.mxu0 0.0
        %5283 = vmatprep.subr.mxu0 0.0
        %5284 = vmatpush1.msra.mxu0 0.0
        %5285 = vmatprep.subr.mxu0 0.0
        %5286 = vmatpush1.msra.mxu0 0.0
        %5287 = vmatprep.subr.mxu0 0.0
        %5288 = vmatpush1.msra.mxu0 0.0
        %5289 = vmatprep.subr.mxu0 0.0
        %5290 = vmatpush1.msra.mxu0 0.0
        %5291 = vmatprep.subr.mxu0 0.0
        %5292 = vmatpush1.msra.mxu0 0.0
        %5293 = vmatprep.mubr.f32.mxu0 0.0
        %5294 = vmatmul.mubr.f32.gmra.mrb[0].mxu0 %v5074
        %v5295 = vpop.f32.mrb[0].mxu0
        %v5296 = vadd.f32 0.0, %v5295
        %v5297 = vpop.f32.mrb[0].mxu0
        %v5298 = vadd.f32 0.0, %v5297
        %5299 = vdwg.mxu0
        %v5304 = vcombine.low %v5225, %v5227
        %v5305 = vcombine.high %v5225, %v5227
        %v5306 = vcombine.low %v5296, %v5298
        %v5307 = vcombine.high %v5296, %v5298
        %v5309 = vunpack.c.l.s4 1966171168
        %v5310 = vunpack.c.0.s8 %v5309
        %v5311 = vlaneseq
        %v5312 = vshrl.u32 %v5311, 7
        %v5313 = vsub.s32 %v5310, %v5312
        %v5314 = vrot.slane %v5304, %v5313
        %v5316 = vunpack.c.l.s4 1966171168
        %v5317 = vunpack.c.0.s8 %v5316
        %v5318 = vlaneseq
        %v5319 = vshrl.u32 %v5318, 7
        %v5320 = vsub.s32 %v5317, %v5319
        %v5321 = vrot.slane %v5305, %v5320
        %v5323 = vunpack.c.l.s4 1966171168
        %v5324 = vunpack.c.0.s8 %v5323
        %v5325 = vlaneseq
        %v5326 = vshrl.u32 %v5325, 7
        %v5327 = vsub.s32 %v5324, %v5326
        %v5328 = vrot.slane %v5306, %v5327
        %v5330 = vunpack.c.l.s4 1966171168
        %v5331 = vunpack.c.0.s8 %v5330
        %v5332 = vlaneseq
        %v5333 = vshrl.u32 %v5332, 7
        %v5334 = vsub.s32 %v5331, %v5333
        %v5335 = vrot.slane %v5307, %v5334
        %v5336 = vcombine.low %v5314, %v5328
        %v5337 = vcombine.high %v5314, %v5328
        %v5338 = vcombine.low %v5321, %v5335
        %v5339 = vcombine.high %v5321, %v5335
        %v5341 = vunpack.c.l.s4 1966171168
        %v5342 = vunpack.c.0.s8 %v5341
        %v5343 = vlaneseq
        %v5344 = vshrl.u32 %v5343, 7
        %v5345 = vsub.s32 %v5342, %v5344
        %v5346 = vrot.slane %v5336, %v5345
        %v5348 = vunpack.c.l.s4 1966171168
        %v5349 = vunpack.c.0.s8 %v5348
        %v5350 = vlaneseq
        %v5351 = vshrl.u32 %v5350, 7
        %v5352 = vsub.s32 %v5349, %v5351
        %v5353 = vrot.slane %v5338, %v5352
        %v5355 = vunpack.c.l.s4 1966171168
        %v5356 = vunpack.c.0.s8 %v5355
        %v5357 = vlaneseq
        %v5358 = vshrl.u32 %v5357, 7
        %v5359 = vsub.s32 %v5356, %v5358
        %v5360 = vrot.slane %v5337, %v5359
        %v5362 = vunpack.c.l.s4 1966171168
        %v5363 = vunpack.c.0.s8 %v5362
        %v5364 = vlaneseq
        %v5365 = vshrl.u32 %v5364, 7
        %v5366 = vsub.s32 %v5363, %v5365
        %v5367 = vrot.slane %v5339, %v5366
        %v5368 = vcombine.high %v5346, %v5346
        %v5369 = vcombine.high %v5353, %v5353
        %v5370 = vcombine.high %v5360, %v5360
        %v5371 = vcombine.high %v5367, %v5367
        %v5380 = vadd.f32 %v5143, %v5346
        %v5381 = vadd.f32 %v5145, %v5360
        %v5382 = vadd.f32 %v5147, %v5368
        %v5383 = vadd.f32 %v5149, %v5370
        %v5384 = vadd.f32 %v5151, %v5353
        %v5385 = vadd.f32 %v5153, %v5367
        %v5386 = vadd.f32 %v5155, %v5369
        %v5387 = vadd.f32 %v5157, %v5371
        %v5388 = vxor.u32 %v5380, 2147483648
        %v5389 = vxor.u32 %v5381, 2147483648
        %v5390 = vxor.u32 %v5382, 2147483648
        %v5391 = vxor.u32 %v5383, 2147483648
        %v5392 = vxor.u32 %v5384, 2147483648
        %v5393 = vxor.u32 %v5385, 2147483648
        %v5394 = vxor.u32 %v5386, 2147483648
        %v5395 = vxor.u32 %v5387, 2147483648
        %v5396 = vmul.f32 %v5388, 1.442695
        %v5397 = vpow.pop %v5396
        %v5398 = vmul.f32 %v5389, 1.442695
        %v5399 = vpow.pop %v5398
        %v5400 = vmul.f32 %v5390, 1.442695
        %v5401 = vpow.pop %v5400
        %v5402 = vmul.f32 %v5391, 1.442695
        %v5403 = vpow.pop %v5402
        %v5404 = vmul.f32 %v5392, 1.442695
        %v5405 = vpow.pop %v5404
        %v5406 = vmul.f32 %v5393, 1.442695
        %v5407 = vpow.pop %v5406
        %v5408 = vmul.f32 %v5394, 1.442695
        %v5409 = vpow.pop %v5408
        %v5410 = vmul.f32 %v5395, 1.442695
        %v5411 = vpow.pop %v5410
        %v5412 = vadd.f32 %v5397, 1.0
        %v5413 = vadd.f32 %v5399, 1.0
        %v5414 = vadd.f32 %v5401, 1.0
        %v5415 = vadd.f32 %v5403, 1.0
        %v5416 = vadd.f32 %v5405, 1.0
        %v5417 = vadd.f32 %v5407, 1.0
        %v5418 = vadd.f32 %v5409, 1.0
        %v5419 = vadd.f32 %v5411, 1.0
        %v5420 = vrcp.pop %v5412
        %v5421 = vmul.f32 1.0, %v5420
        %v5422 = vrcp.pop %v5413
        %v5423 = vmul.f32 1.0, %v5422
        %v5424 = vrcp.pop %v5414
        %v5425 = vmul.f32 1.0, %v5424
        %v5426 = vrcp.pop %v5415
        %v5427 = vmul.f32 1.0, %v5426
        %v5428 = vrcp.pop %v5416
        %v5429 = vmul.f32 1.0, %v5428
        %v5430 = vrcp.pop %v5417
        %v5431 = vmul.f32 1.0, %v5430
        %v5432 = vrcp.pop %v5418
        %v5433 = vmul.f32 1.0, %v5432
        %v5434 = vrcp.pop %v5419
        %v5435 = vmul.f32 1.0, %v5434
        %v5444 = vrot.slane %v5380, 1
        %v5445 = vrot.slane %v5381, 1
        %v5446 = vrot.slane %v5382, 1
        %v5447 = vrot.slane %v5383, 1
        %v5448 = vrot.slane %v5384, 1
        %v5449 = vrot.slane %v5385, 1
        %v5450 = vrot.slane %v5386, 1
        %v5451 = vrot.slane %v5387, 1
        %v5460 = vxor.u32 %v5444, 2147483648
        %v5461 = vxor.u32 %v5445, 2147483648
        %v5462 = vxor.u32 %v5446, 2147483648
        %v5463 = vxor.u32 %v5447, 2147483648
        %v5464 = vxor.u32 %v5448, 2147483648
        %v5465 = vxor.u32 %v5449, 2147483648
        %v5466 = vxor.u32 %v5450, 2147483648
        %v5467 = vxor.u32 %v5451, 2147483648
        %v5468 = vmul.f32 %v5460, 1.442695
        %v5469 = vpow.pop %v5468
        %v5470 = vmul.f32 %v5461, 1.442695
        %v5471 = vpow.pop %v5470
        %v5472 = vmul.f32 %v5462, 1.442695
        %v5473 = vpow.pop %v5472
        %v5474 = vmul.f32 %v5463, 1.442695
        %v5475 = vpow.pop %v5474
        %v5476 = vmul.f32 %v5464, 1.442695
        %v5477 = vpow.pop %v5476
        %v5478 = vmul.f32 %v5465, 1.442695
        %v5479 = vpow.pop %v5478
        %v5480 = vmul.f32 %v5466, 1.442695
        %v5481 = vpow.pop %v5480
        %v5482 = vmul.f32 %v5467, 1.442695
        %v5483 = vpow.pop %v5482
        %v5484 = vadd.f32 %v5469, 1.0
        %v5485 = vadd.f32 %v5471, 1.0
        %v5486 = vadd.f32 %v5473, 1.0
        %v5487 = vadd.f32 %v5475, 1.0
        %v5488 = vadd.f32 %v5477, 1.0
        %v5489 = vadd.f32 %v5479, 1.0
        %v5490 = vadd.f32 %v5481, 1.0
        %v5491 = vadd.f32 %v5483, 1.0
        %v5492 = vrcp.pop %v5484
        %v5493 = vmul.f32 1.0, %v5492
        %v5494 = vrcp.pop %v5485
        %v5495 = vmul.f32 1.0, %v5494
        %v5496 = vrcp.pop %v5486
        %v5497 = vmul.f32 1.0, %v5496
        %v5498 = vrcp.pop %v5487
        %v5499 = vmul.f32 1.0, %v5498
        %v5500 = vrcp.pop %v5488
        %v5501 = vmul.f32 1.0, %v5500
        %v5502 = vrcp.pop %v5489
        %v5503 = vmul.f32 1.0, %v5502
        %v5504 = vrcp.pop %v5490
        %v5505 = vmul.f32 1.0, %v5504
        %v5506 = vrcp.pop %v5491
        %v5507 = vmul.f32 1.0, %v5506
        %v5508 = vrot.slane %v5380, 2
        %v5509 = vrot.slane %v5381, 2
        %v5510 = vrot.slane %v5382, 2
        %v5511 = vrot.slane %v5383, 2
        %v5512 = vrot.slane %v5384, 2
        %v5513 = vrot.slane %v5385, 2
        %v5514 = vrot.slane %v5386, 2
        %v5515 = vrot.slane %v5387, 2
        %v5524 = vtanh.pop %v5508
        %v5525 = vtanh.pop %v5509
        %v5526 = vtanh.pop %v5510
        %v5527 = vtanh.pop %v5511
        %v5528 = vtanh.pop %v5512
        %v5529 = vtanh.pop %v5513
        %v5530 = vtanh.pop %v5514
        %v5531 = vtanh.pop %v5515
        %v5532 = vrot.slane %v5380, 3
        %v5533 = vrot.slane %v5381, 3
        %v5534 = vrot.slane %v5382, 3
        %v5535 = vrot.slane %v5383, 3
        %v5536 = vrot.slane %v5384, 3
        %v5537 = vrot.slane %v5385, 3
        %v5538 = vrot.slane %v5386, 3
        %v5539 = vrot.slane %v5387, 3
        %v5548 = vxor.u32 %v5532, 2147483648
        %v5549 = vxor.u32 %v5533, 2147483648
        %v5550 = vxor.u32 %v5534, 2147483648
        %v5551 = vxor.u32 %v5535, 2147483648
        %v5552 = vxor.u32 %v5536, 2147483648
        %v5553 = vxor.u32 %v5537, 2147483648
        %v5554 = vxor.u32 %v5538, 2147483648
        %v5555 = vxor.u32 %v5539, 2147483648
        %v5556 = vmul.f32 %v5548, 1.442695
        %v5557 = vpow.pop %v5556
        %v5558 = vmul.f32 %v5549, 1.442695
        %v5559 = vpow.pop %v5558
        %v5560 = vmul.f32 %v5550, 1.442695
        %v5561 = vpow.pop %v5560
        %v5562 = vmul.f32 %v5551, 1.442695
        %v5563 = vpow.pop %v5562
        %v5564 = vmul.f32 %v5552, 1.442695
        %v5565 = vpow.pop %v5564
        %v5566 = vmul.f32 %v5553, 1.442695
        %v5567 = vpow.pop %v5566
        %v5568 = vmul.f32 %v5554, 1.442695
        %v5569 = vpow.pop %v5568
        %v5570 = vmul.f32 %v5555, 1.442695
        %v5571 = vpow.pop %v5570
        %v5572 = vadd.f32 %v5557, 1.0
        %v5573 = vadd.f32 %v5559, 1.0
        %v5574 = vadd.f32 %v5561, 1.0
        %v5575 = vadd.f32 %v5563, 1.0
        %v5576 = vadd.f32 %v5565, 1.0
        %v5577 = vadd.f32 %v5567, 1.0
        %v5578 = vadd.f32 %v5569, 1.0
        %v5579 = vadd.f32 %v5571, 1.0
        %v5580 = vrcp.pop %v5572
        %v5581 = vmul.f32 1.0, %v5580
        %v5582 = vrcp.pop %v5573
        %v5583 = vmul.f32 1.0, %v5582
        %v5584 = vrcp.pop %v5574
        %v5585 = vmul.f32 1.0, %v5584
        %v5586 = vrcp.pop %v5575
        %v5587 = vmul.f32 1.0, %v5586
        %v5588 = vrcp.pop %v5576
        %v5589 = vmul.f32 1.0, %v5588
        %v5590 = vrcp.pop %v5577
        %v5591 = vmul.f32 1.0, %v5590
        %v5592 = vrcp.pop %v5578
        %v5593 = vmul.f32 1.0, %v5592
        %v5594 = vrcp.pop %v5579
        %v5595 = vmul.f32 1.0, %v5594
        %v5597 = vcombine.high %v5015, %v5015
        %v5599 = vunpack.c.l.s4 1966171168
        %v5600 = vunpack.c.0.s8 %v5599
        %v5601 = vlaneseq
        %v5602 = vshrl.u32 %v5601, 7
        %v5603 = vsub.s32 %v5600, %v5602
        %v5604 = vrot.slane %v5015, %v5603
        %v5606 = vunpack.c.l.s4 1966171168
        %v5607 = vunpack.c.0.s8 %v5606
        %v5608 = vlaneseq
        %v5609 = vshrl.u32 %v5608, 7
        %v5610 = vsub.s32 %v5607, %v5609
        %v5611 = vrot.slane %v5597, %v5610
        %v5612 = vcombine.high %v5604, %v5604
        %v5613 = vcombine.high %v5611, %v5611
        %v5615 = vunpack.c.l.s4 1966171168
        %v5616 = vunpack.c.0.s8 %v5615
        %v5617 = vlaneseq
        %v5618 = vshrl.u32 %v5617, 7
        %v5619 = vsub.s32 %v5616, %v5618
        %v5620 = vrot.slane %v5604, %v5619
        %v5622 = vunpack.c.l.s4 1966171168
        %v5623 = vunpack.c.0.s8 %v5622
        %v5624 = vlaneseq
        %v5625 = vshrl.u32 %v5624, 7
        %v5626 = vsub.s32 %v5623, %v5625
        %v5627 = vrot.slane %v5611, %v5626
        %v5629 = vunpack.c.l.s4 1966171168
        %v5630 = vunpack.c.0.s8 %v5629
        %v5631 = vlaneseq
        %v5632 = vshrl.u32 %v5631, 7
        %v5633 = vsub.s32 %v5630, %v5632
        %v5634 = vrot.slane %v5612, %v5633
        %v5636 = vunpack.c.l.s4 1966171168
        %v5637 = vunpack.c.0.s8 %v5636
        %v5638 = vlaneseq
        %v5639 = vshrl.u32 %v5638, 7
        %v5640 = vsub.s32 %v5637, %v5639
        %v5641 = vrot.slane %v5613, %v5640
        %v5642 = vcombine.high %v5620, %v5620
        %v5643 = vcombine.high %v5627, %v5627
        %v5644 = vcombine.high %v5634, %v5634
        %v5645 = vcombine.high %v5641, %v5641
        %v5654 = vmul.f32 %v5493, %v5620
        %v5655 = vmul.f32 %v5495, %v5634
        %v5656 = vmul.f32 %v5497, %v5642
        %v5657 = vmul.f32 %v5499, %v5644
        %v5658 = vmul.f32 %v5501, %v5627
        %v5659 = vmul.f32 %v5503, %v5641
        %v5660 = vmul.f32 %v5505, %v5643
        %v5661 = vmul.f32 %v5507, %v5645
        %v5662 = vmul.f32 %v5421, %v5524
        %v5663 = vmul.f32 %v5423, %v5525
        %v5664 = vmul.f32 %v5425, %v5526
        %v5665 = vmul.f32 %v5427, %v5527
        %v5666 = vmul.f32 %v5429, %v5528
        %v5667 = vmul.f32 %v5431, %v5529
        %v5668 = vmul.f32 %v5433, %v5530
        %v5669 = vmul.f32 %v5435, %v5531
        %v5670 = vadd.f32 %v5654, %v5662
        %v5671 = vadd.f32 %v5655, %v5663
        %v5672 = vadd.f32 %v5656, %v5664
        %v5673 = vadd.f32 %v5657, %v5665
        %v5674 = vadd.f32 %v5658, %v5666
        %v5675 = vadd.f32 %v5659, %v5667
        %v5676 = vadd.f32 %v5660, %v5668
        %v5677 = vadd.f32 %v5661, %v5669
        %v5678 = vtanh.pop %v5670
        %v5679 = vtanh.pop %v5671
        %v5680 = vtanh.pop %v5672
        %v5681 = vtanh.pop %v5673
        %v5682 = vtanh.pop %v5674
        %v5683 = vtanh.pop %v5675
        %v5684 = vtanh.pop %v5676
        %v5685 = vtanh.pop %v5677
        %v5686 = vmul.f32 %v5581, %v5678
        %v5687 = vmul.f32 %v5583, %v5679
        %v5688 = vmul.f32 %v5585, %v5680
        %v5689 = vmul.f32 %v5587, %v5681
        %v5690 = vmul.f32 %v5589, %v5682
        %v5691 = vmul.f32 %v5591, %v5683
        %v5692 = vmul.f32 %v5593, %v5684
        %v5693 = vmul.f32 %v5595, %v5685
        %s5694 = sadd.s32 %s671, 6
        %v5695 = vstv %s5694
        %vm5696 = vcmp.gt.s32.totalorder %v670, %v5695
        %v5697 = vsel %vm5696, 1, 0
        %5698 = vset.pattern.permute.xlu0 0
        %5699 = vperm.xlu0 %5698, %v5697
        %v5700 = vpop.permute.xlu0 %5699
        %vm5701 = vcmp.eq.s32.totalorder %v5700, 1
        %v5710 = vcombine.low %v5670, %v5671
        %v5711 = vcombine.low %v5672, %v5673
        %v5712 = vcombine.low %v5674, %v5675
        %v5713 = vcombine.low %v5676, %v5677
        %v5715 = vunpack.c.l.s4 1966171168
        %v5716 = vunpack.c.0.s8 %v5715
        %v5717 = vlaneseq
        %v5718 = vshrl.u32 %v5717, 7
        %v5719 = vsub.s32 %v5716, %v5718
        %v5720 = vrot.slane %v5710, %v5719
        %v5722 = vunpack.c.l.s4 1966171168
        %v5723 = vunpack.c.0.s8 %v5722
        %v5724 = vlaneseq
        %v5725 = vshrl.u32 %v5724, 7
        %v5726 = vsub.s32 %v5723, %v5725
        %v5727 = vrot.slane %v5711, %v5726
        %v5729 = vunpack.c.l.s4 1966171168
        %v5730 = vunpack.c.0.s8 %v5729
        %v5731 = vlaneseq
        %v5732 = vshrl.u32 %v5731, 7
        %v5733 = vsub.s32 %v5730, %v5732
        %v5734 = vrot.slane %v5712, %v5733
        %v5736 = vunpack.c.l.s4 1966171168
        %v5737 = vunpack.c.0.s8 %v5736
        %v5738 = vlaneseq
        %v5739 = vshrl.u32 %v5738, 7
        %v5740 = vsub.s32 %v5737, %v5739
        %v5741 = vrot.slane %v5713, %v5740
        %v5742 = vcombine.low %v5720, %v5727
        %v5743 = vcombine.low %v5734, %v5741
        %v5745 = vunpack.c.l.s4 1966171168
        %v5746 = vunpack.c.0.s8 %v5745
        %v5747 = vlaneseq
        %v5748 = vshrl.u32 %v5747, 7
        %v5749 = vsub.s32 %v5746, %v5748
        %v5750 = vrot.slane %v5742, %v5749
        %v5752 = vunpack.c.l.s4 1966171168
        %v5753 = vunpack.c.0.s8 %v5752
        %v5754 = vlaneseq
        %v5755 = vshrl.u32 %v5754, 7
        %v5756 = vsub.s32 %v5753, %v5755
        %v5757 = vrot.slane %v5743, %v5756
        %v5758 = vcombine.low %v5750, %v5757
        %v5760 = vsel %vm5701, %v5758, %v5015
        %v5769 = vcombine.low %v5686, %v5687
        %v5770 = vcombine.low %v5688, %v5689
        %v5771 = vcombine.low %v5690, %v5691
        %v5772 = vcombine.low %v5692, %v5693
        %v5774 = vunpack.c.l.s4 1966171168
        %v5775 = vunpack.c.0.s8 %v5774
        %v5776 = vlaneseq
        %v5777 = vshrl.u32 %v5776, 7
        %v5778 = vsub.s32 %v5775, %v5777
        %v5779 = vrot.slane %v5769, %v5778
        %v5781 = vunpack.c.l.s4 1966171168
        %v5782 = vunpack.c.0.s8 %v5781
        %v5783 = vlaneseq
        %v5784 = vshrl.u32 %v5783, 7
        %v5785 = vsub.s32 %v5782, %v5784
        %v5786 = vrot.slane %v5770, %v5785
        %v5788 = vunpack.c.l.s4 1966171168
        %v5789 = vunpack.c.0.s8 %v5788
        %v5790 = vlaneseq
        %v5791 = vshrl.u32 %v5790, 7
        %v5792 = vsub.s32 %v5789, %v5791
        %v5793 = vrot.slane %v5771, %v5792
        %v5795 = vunpack.c.l.s4 1966171168
        %v5796 = vunpack.c.0.s8 %v5795
        %v5797 = vlaneseq
        %v5798 = vshrl.u32 %v5797, 7
        %v5799 = vsub.s32 %v5796, %v5798
        %v5800 = vrot.slane %v5772, %v5799
        %v5801 = vcombine.low %v5779, %v5786
        %v5802 = vcombine.low %v5793, %v5800
        %v5804 = vunpack.c.l.s4 1966171168
        %v5805 = vunpack.c.0.s8 %v5804
        %v5806 = vlaneseq
        %v5807 = vshrl.u32 %v5806, 7
        %v5808 = vsub.s32 %v5805, %v5807
        %v5809 = vrot.slane %v5801, %v5808
        %v5811 = vunpack.c.l.s4 1966171168
        %v5812 = vunpack.c.0.s8 %v5811
        %v5813 = vlaneseq
        %v5814 = vshrl.u32 %v5813, 7
        %v5815 = vsub.s32 %v5812, %v5814
        %v5816 = vrot.slane %v5802, %v5815
        %v5817 = vcombine.low %v5809, %v5816
        %v5819 = vsel %vm5701, %v5817, %v5074
        %v5820 = vsel %vm5701, %v5817, 0.0
        %v5822 = vcombine.high %v5820, %v5820
        %v5824 = vunpack.c.l.s4 1966171168
        %v5825 = vunpack.c.0.s8 %v5824
        %v5826 = vlaneseq
        %v5827 = vshrl.u32 %v5826, 7
        %v5828 = vsub.s32 %v5825, %v5827
        %v5829 = vrot.slane %v5820, %v5828
        %v5831 = vunpack.c.l.s4 1966171168
        %v5832 = vunpack.c.0.s8 %v5831
        %v5833 = vlaneseq
        %v5834 = vshrl.u32 %v5833, 7
        %v5835 = vsub.s32 %v5832, %v5834
        %v5836 = vrot.slane %v5822, %v5835
        %v5837 = vcombine.high %v5829, %v5829
        %v5838 = vcombine.high %v5836, %v5836
        %v5840 = vunpack.c.l.s4 1966171168
        %v5841 = vunpack.c.0.s8 %v5840
        %v5842 = vlaneseq
        %v5843 = vshrl.u32 %v5842, 7
        %v5844 = vsub.s32 %v5841, %v5843
        %v5845 = vrot.slane %v5829, %v5844
        %v5847 = vunpack.c.l.s4 1966171168
        %v5848 = vunpack.c.0.s8 %v5847
        %v5849 = vlaneseq
        %v5850 = vshrl.u32 %v5849, 7
        %v5851 = vsub.s32 %v5848, %v5850
        %v5852 = vrot.slane %v5836, %v5851
        %v5854 = vunpack.c.l.s4 1966171168
        %v5855 = vunpack.c.0.s8 %v5854
        %v5856 = vlaneseq
        %v5857 = vshrl.u32 %v5856, 7
        %v5858 = vsub.s32 %v5855, %v5857
        %v5859 = vrot.slane %v5837, %v5858
        %v5861 = vunpack.c.l.s4 1966171168
        %v5862 = vunpack.c.0.s8 %v5861
        %v5863 = vlaneseq
        %v5864 = vshrl.u32 %v5863, 7
        %v5865 = vsub.s32 %v5862, %v5864
        %v5866 = vrot.slane %v5838, %v5865
        %v5867 = vcombine.high %v5845, %v5845
        %v5868 = vcombine.high %v5852, %v5852
        %v5869 = vcombine.high %v5859, %v5859
        %v5870 = vcombine.high %v5866, %v5866
        %5879 = vst [vmem:[%s270 + $0x6] sm:$0x1] %v5845
        %5880 = vst [vmem:[%s270 + $0xe] sm:$0x1] %v5859
        %5881 = vst [vmem:[%s270 + $0x16] sm:$0x1] %v5867
        %5882 = vst [vmem:[%s270 + $0x1e] sm:$0x1] %v5869
        %5883 = vst [vmem:[%s270 + $0x26] sm:$0x1] %v5852
        %5884 = vst [vmem:[%s270 + $0x2e] sm:$0x1] %v5866
        %5885 = vst [vmem:[%s270 + $0x36] sm:$0x1] %v5868
        %5886 = vst [vmem:[%s270 + $0x3e] sm:$0x1] %v5870
        %s5887 = scalar_lea.vmem [#allocation4], 7
        %v5888 = vld [vmem:[%s5887] ss:$8 sm:$0xf]
        %s5889 = scalar_lea.vmem [#allocation4], 39
        %v5890 = vld [vmem:[%s5889] ss:$8 sm:$0xf]
        %s5891 = scalar_lea.vmem [#allocation4], 71
        %v5892 = vld [vmem:[%s5891] ss:$8 sm:$0xf]
        %s5893 = scalar_lea.vmem [#allocation4], 103
        %v5894 = vld [vmem:[%s5893] ss:$8 sm:$0xf]
        %s5895 = scalar_lea.vmem [#allocation4], 135
        %v5896 = vld [vmem:[%s5895] ss:$8 sm:$0xf]
        %s5897 = scalar_lea.vmem [#allocation4], 167
        %v5898 = vld [vmem:[%s5897] ss:$8 sm:$0xf]
        %s5899 = scalar_lea.vmem [#allocation4], 199
        %v5900 = vld [vmem:[%s5899] ss:$8 sm:$0xf]
        %s5901 = scalar_lea.vmem [#allocation4], 231
        %v5902 = vld [vmem:[%s5901] ss:$8 sm:$0xf]
        %5903 = vmatprep.subr.mxu0 %v607
        %5904 = vmatpush1.msra.mxu0 %v606
        %5905 = vmatprep.subr.mxu0 %v611
        %5906 = vmatpush1.msra.mxu0 %v610
        %5907 = vmatprep.subr.mxu0 %v615
        %5908 = vmatpush1.msra.mxu0 %v614
        %5909 = vmatprep.subr.mxu0 %v619
        %5910 = vmatpush1.msra.mxu0 %v618
        %5911 = vmatprep.subr.mxu0 %v623
        %5912 = vmatpush1.msra.mxu0 %v622
        %5913 = vmatprep.subr.mxu0 %v627
        %5914 = vmatpush1.msra.mxu0 %v626
        %5915 = vmatprep.subr.mxu0 %v631
        %5916 = vmatpush1.msra.mxu0 %v630
        %5917 = vmatprep.subr.mxu0 %v635
        %5918 = vmatpush1.msra.mxu0 %v634
        %5919 = vmatprep.subr.mxu0 %v639
        %5920 = vmatpush1.msra.mxu0 %v638
        %5921 = vmatprep.subr.mxu0 %v643
        %5922 = vmatpush1.msra.mxu0 %v642
        %5923 = vmatprep.subr.mxu0 %v647
        %5924 = vmatpush1.msra.mxu0 %v646
        %5925 = vmatprep.subr.mxu0 %v651
        %5926 = vmatpush1.msra.mxu0 %v650
        %5927 = vmatprep.subr.mxu0 %v655
        %5928 = vmatpush1.msra.mxu0 %v654
        %5929 = vmatprep.subr.mxu0 %v659
        %5930 = vmatpush1.msra.mxu0 %v658
        %5931 = vmatprep.subr.mxu0 %v663
        %5932 = vmatpush1.msra.mxu0 %v662
        %5933 = vmatprep.subr.mxu0 %v667
        %5934 = vmatpush1.msra.mxu0 %v666
        %5935 = vmatprep.subr.mxu0 0.0
        %5936 = vmatpush1.msra.mxu0 0.0
        %5937 = vmatprep.subr.mxu0 0.0
        %5938 = vmatpush1.msra.mxu0 0.0
        %5939 = vmatprep.subr.mxu0 0.0
        %5940 = vmatpush1.msra.mxu0 0.0
        %5941 = vmatprep.subr.mxu0 0.0
        %5942 = vmatpush1.msra.mxu0 0.0
        %5943 = vmatprep.subr.mxu0 0.0
        %5944 = vmatpush1.msra.mxu0 0.0
        %5945 = vmatprep.subr.mxu0 0.0
        %5946 = vmatpush1.msra.mxu0 0.0
        %5947 = vmatprep.subr.mxu0 0.0
        %5948 = vmatpush1.msra.mxu0 0.0
        %5949 = vmatprep.subr.mxu0 0.0
        %5950 = vmatpush1.msra.mxu0 0.0
        %5951 = vmatprep.subr.mxu0 0.0
        %5952 = vmatpush1.msra.mxu0 0.0
        %5953 = vmatprep.subr.mxu0 0.0
        %5954 = vmatpush1.msra.mxu0 0.0
        %5955 = vmatprep.subr.mxu0 0.0
        %5956 = vmatpush1.msra.mxu0 0.0
        %5957 = vmatprep.subr.mxu0 0.0
        %5958 = vmatpush1.msra.mxu0 0.0
        %5959 = vmatprep.subr.mxu0 0.0
        %5960 = vmatpush1.msra.mxu0 0.0
        %5961 = vmatprep.subr.mxu0 0.0
        %5962 = vmatpush1.msra.mxu0 0.0
        %5963 = vmatprep.subr.mxu0 0.0
        %5964 = vmatpush1.msra.mxu0 0.0
        %5965 = vmatprep.subr.mxu0 0.0
        %5966 = vmatpush1.msra.mxu0 0.0
        %5967 = vmatprep.mubr.f32.mxu0 0.0
        %5968 = vmatmul.mubr.f32.gmra.mrb[0].mxu0 %v5819
        %v5969 = vpop.f32.mrb[0].mxu0
        %v5970 = vadd.f32 0.0, %v5969
        %v5971 = vpop.f32.mrb[0].mxu0
        %v5972 = vadd.f32 0.0, %v5971
        %5973 = vdwg.mxu0
        %5974 = vmatprep.subr.mxu0 %v609
        %5975 = vmatpush1.msra.mxu0 %v608
        %5976 = vmatprep.subr.mxu0 %v613
        %5977 = vmatpush1.msra.mxu0 %v612
        %5978 = vmatprep.subr.mxu0 %v617
        %5979 = vmatpush1.msra.mxu0 %v616
        %5980 = vmatprep.subr.mxu0 %v621
        %5981 = vmatpush1.msra.mxu0 %v620
        %5982 = vmatprep.subr.mxu0 %v625
        %5983 = vmatpush1.msra.mxu0 %v624
        %5984 = vmatprep.subr.mxu0 %v629
        %5985 = vmatpush1.msra.mxu0 %v628
        %5986 = vmatprep.subr.mxu0 %v633
        %5987 = vmatpush1.msra.mxu0 %v632
        %5988 = vmatprep.subr.mxu0 %v637
        %5989 = vmatpush1.msra.mxu0 %v636
        %5990 = vmatprep.subr.mxu0 %v641
        %5991 = vmatpush1.msra.mxu0 %v640
        %5992 = vmatprep.subr.mxu0 %v645
        %5993 = vmatpush1.msra.mxu0 %v644
        %5994 = vmatprep.subr.mxu0 %v649
        %5995 = vmatpush1.msra.mxu0 %v648
        %5996 = vmatprep.subr.mxu0 %v653
        %5997 = vmatpush1.msra.mxu0 %v652
        %5998 = vmatprep.subr.mxu0 %v657
        %5999 = vmatpush1.msra.mxu0 %v656
        %6000 = vmatprep.subr.mxu0 %v661
        %6001 = vmatpush1.msra.mxu0 %v660
        %6002 = vmatprep.subr.mxu0 %v665
        %6003 = vmatpush1.msra.mxu0 %v664
        %6004 = vmatprep.subr.mxu0 %v669
        %6005 = vmatpush1.msra.mxu0 %v668
        %6006 = vmatprep.subr.mxu0 0.0
        %6007 = vmatpush1.msra.mxu0 0.0
        %6008 = vmatprep.subr.mxu0 0.0
        %6009 = vmatpush1.msra.mxu0 0.0
        %6010 = vmatprep.subr.mxu0 0.0
        %6011 = vmatpush1.msra.mxu0 0.0
        %6012 = vmatprep.subr.mxu0 0.0
        %6013 = vmatpush1.msra.mxu0 0.0
        %6014 = vmatprep.subr.mxu0 0.0
        %6015 = vmatpush1.msra.mxu0 0.0
        %6016 = vmatprep.subr.mxu0 0.0
        %6017 = vmatpush1.msra.mxu0 0.0
        %6018 = vmatprep.subr.mxu0 0.0
        %6019 = vmatpush1.msra.mxu0 0.0
        %6020 = vmatprep.subr.mxu0 0.0
        %6021 = vmatpush1.msra.mxu0 0.0
        %6022 = vmatprep.subr.mxu0 0.0
        %6023 = vmatpush1.msra.mxu0 0.0
        %6024 = vmatprep.subr.mxu0 0.0
        %6025 = vmatpush1.msra.mxu0 0.0
        %6026 = vmatprep.subr.mxu0 0.0
        %6027 = vmatpush1.msra.mxu0 0.0
        %6028 = vmatprep.subr.mxu0 0.0
        %6029 = vmatpush1.msra.mxu0 0.0
        %6030 = vmatprep.subr.mxu0 0.0
        %6031 = vmatpush1.msra.mxu0 0.0
        %6032 = vmatprep.subr.mxu0 0.0
        %6033 = vmatpush1.msra.mxu0 0.0
        %6034 = vmatprep.subr.mxu0 0.0
        %6035 = vmatpush1.msra.mxu0 0.0
        %6036 = vmatprep.subr.mxu0 0.0
        %6037 = vmatpush1.msra.mxu0 0.0
        %6038 = vmatprep.mubr.f32.mxu0 0.0
        %6039 = vmatmul.mubr.f32.gmra.mrb[0].mxu0 %v5819
        %v6040 = vpop.f32.mrb[0].mxu0
        %v6041 = vadd.f32 0.0, %v6040
        %v6042 = vpop.f32.mrb[0].mxu0
        %v6043 = vadd.f32 0.0, %v6042
        %6044 = vdwg.mxu0
        %v6049 = vcombine.low %v5970, %v5972
        %v6050 = vcombine.high %v5970, %v5972
        %v6051 = vcombine.low %v6041, %v6043
        %v6052 = vcombine.high %v6041, %v6043
        %v6054 = vunpack.c.l.s4 1966171168
        %v6055 = vunpack.c.0.s8 %v6054
        %v6056 = vlaneseq
        %v6057 = vshrl.u32 %v6056, 7
        %v6058 = vsub.s32 %v6055, %v6057
        %v6059 = vrot.slane %v6049, %v6058
        %v6061 = vunpack.c.l.s4 1966171168
        %v6062 = vunpack.c.0.s8 %v6061
        %v6063 = vlaneseq
        %v6064 = vshrl.u32 %v6063, 7
        %v6065 = vsub.s32 %v6062, %v6064
        %v6066 = vrot.slane %v6050, %v6065
        %v6068 = vunpack.c.l.s4 1966171168
        %v6069 = vunpack.c.0.s8 %v6068
        %v6070 = vlaneseq
        %v6071 = vshrl.u32 %v6070, 7
        %v6072 = vsub.s32 %v6069, %v6071
        %v6073 = vrot.slane %v6051, %v6072
        %v6075 = vunpack.c.l.s4 1966171168
        %v6076 = vunpack.c.0.s8 %v6075
        %v6077 = vlaneseq
        %v6078 = vshrl.u32 %v6077, 7
        %v6079 = vsub.s32 %v6076, %v6078
        %v6080 = vrot.slane %v6052, %v6079
        %v6081 = vcombine.low %v6059, %v6073
        %v6082 = vcombine.high %v6059, %v6073
        %v6083 = vcombine.low %v6066, %v6080
        %v6084 = vcombine.high %v6066, %v6080
        %v6086 = vunpack.c.l.s4 1966171168
        %v6087 = vunpack.c.0.s8 %v6086
        %v6088 = vlaneseq
        %v6089 = vshrl.u32 %v6088, 7
        %v6090 = vsub.s32 %v6087, %v6089
        %v6091 = vrot.slane %v6081, %v6090
        %v6093 = vunpack.c.l.s4 1966171168
        %v6094 = vunpack.c.0.s8 %v6093
        %v6095 = vlaneseq
        %v6096 = vshrl.u32 %v6095, 7
        %v6097 = vsub.s32 %v6094, %v6096
        %v6098 = vrot.slane %v6083, %v6097
        %v6100 = vunpack.c.l.s4 1966171168
        %v6101 = vunpack.c.0.s8 %v6100
        %v6102 = vlaneseq
        %v6103 = vshrl.u32 %v6102, 7
        %v6104 = vsub.s32 %v6101, %v6103
        %v6105 = vrot.slane %v6082, %v6104
        %v6107 = vunpack.c.l.s4 1966171168
        %v6108 = vunpack.c.0.s8 %v6107
        %v6109 = vlaneseq
        %v6110 = vshrl.u32 %v6109, 7
        %v6111 = vsub.s32 %v6108, %v6110
        %v6112 = vrot.slane %v6084, %v6111
        %v6113 = vcombine.high %v6091, %v6091
        %v6114 = vcombine.high %v6098, %v6098
        %v6115 = vcombine.high %v6105, %v6105
        %v6116 = vcombine.high %v6112, %v6112
        %v6125 = vadd.f32 %v5888, %v6091
        %v6126 = vadd.f32 %v5890, %v6105
        %v6127 = vadd.f32 %v5892, %v6113
        %v6128 = vadd.f32 %v5894, %v6115
        %v6129 = vadd.f32 %v5896, %v6098
        %v6130 = vadd.f32 %v5898, %v6112
        %v6131 = vadd.f32 %v5900, %v6114
        %v6132 = vadd.f32 %v5902, %v6116
        %v6133 = vxor.u32 %v6125, 2147483648
        %v6134 = vxor.u32 %v6126, 2147483648
        %v6135 = vxor.u32 %v6127, 2147483648
        %v6136 = vxor.u32 %v6128, 2147483648
        %v6137 = vxor.u32 %v6129, 2147483648
        %v6138 = vxor.u32 %v6130, 2147483648
        %v6139 = vxor.u32 %v6131, 2147483648
        %v6140 = vxor.u32 %v6132, 2147483648
        %v6141 = vmul.f32 %v6133, 1.442695
        %v6142 = vpow.pop %v6141
        %v6143 = vmul.f32 %v6134, 1.442695
        %v6144 = vpow.pop %v6143
        %v6145 = vmul.f32 %v6135, 1.442695
        %v6146 = vpow.pop %v6145
        %v6147 = vmul.f32 %v6136, 1.442695
        %v6148 = vpow.pop %v6147
        %v6149 = vmul.f32 %v6137, 1.442695
        %v6150 = vpow.pop %v6149
        %v6151 = vmul.f32 %v6138, 1.442695
        %v6152 = vpow.pop %v6151
        %v6153 = vmul.f32 %v6139, 1.442695
        %v6154 = vpow.pop %v6153
        %v6155 = vmul.f32 %v6140, 1.442695
        %v6156 = vpow.pop %v6155
        %v6157 = vadd.f32 %v6142, 1.0
        %v6158 = vadd.f32 %v6144, 1.0
        %v6159 = vadd.f32 %v6146, 1.0
        %v6160 = vadd.f32 %v6148, 1.0
        %v6161 = vadd.f32 %v6150, 1.0
        %v6162 = vadd.f32 %v6152, 1.0
        %v6163 = vadd.f32 %v6154, 1.0
        %v6164 = vadd.f32 %v6156, 1.0
        %v6165 = vrcp.pop %v6157
        %v6166 = vmul.f32 1.0, %v6165
        %v6167 = vrcp.pop %v6158
        %v6168 = vmul.f32 1.0, %v6167
        %v6169 = vrcp.pop %v6159
        %v6170 = vmul.f32 1.0, %v6169
        %v6171 = vrcp.pop %v6160
        %v6172 = vmul.f32 1.0, %v6171
        %v6173 = vrcp.pop %v6161
        %v6174 = vmul.f32 1.0, %v6173
        %v6175 = vrcp.pop %v6162
        %v6176 = vmul.f32 1.0, %v6175
        %v6177 = vrcp.pop %v6163
        %v6178 = vmul.f32 1.0, %v6177
        %v6179 = vrcp.pop %v6164
        %v6180 = vmul.f32 1.0, %v6179
        %v6189 = vrot.slane %v6125, 1
        %v6190 = vrot.slane %v6126, 1
        %v6191 = vrot.slane %v6127, 1
        %v6192 = vrot.slane %v6128, 1
        %v6193 = vrot.slane %v6129, 1
        %v6194 = vrot.slane %v6130, 1
        %v6195 = vrot.slane %v6131, 1
        %v6196 = vrot.slane %v6132, 1
        %v6205 = vxor.u32 %v6189, 2147483648
        %v6206 = vxor.u32 %v6190, 2147483648
        %v6207 = vxor.u32 %v6191, 2147483648
        %v6208 = vxor.u32 %v6192, 2147483648
        %v6209 = vxor.u32 %v6193, 2147483648
        %v6210 = vxor.u32 %v6194, 2147483648
        %v6211 = vxor.u32 %v6195, 2147483648
        %v6212 = vxor.u32 %v6196, 2147483648
        %v6213 = vmul.f32 %v6205, 1.442695
        %v6214 = vpow.pop %v6213
        %v6215 = vmul.f32 %v6206, 1.442695
        %v6216 = vpow.pop %v6215
        %v6217 = vmul.f32 %v6207, 1.442695
        %v6218 = vpow.pop %v6217
        %v6219 = vmul.f32 %v6208, 1.442695
        %v6220 = vpow.pop %v6219
        %v6221 = vmul.f32 %v6209, 1.442695
        %v6222 = vpow.pop %v6221
        %v6223 = vmul.f32 %v6210, 1.442695
        %v6224 = vpow.pop %v6223
        %v6225 = vmul.f32 %v6211, 1.442695
        %v6226 = vpow.pop %v6225
        %v6227 = vmul.f32 %v6212, 1.442695
        %v6228 = vpow.pop %v6227
        %v6229 = vadd.f32 %v6214, 1.0
        %v6230 = vadd.f32 %v6216, 1.0
        %v6231 = vadd.f32 %v6218, 1.0
        %v6232 = vadd.f32 %v6220, 1.0
        %v6233 = vadd.f32 %v6222, 1.0
        %v6234 = vadd.f32 %v6224, 1.0
        %v6235 = vadd.f32 %v6226, 1.0
        %v6236 = vadd.f32 %v6228, 1.0
        %v6237 = vrcp.pop %v6229
        %v6238 = vmul.f32 1.0, %v6237
        %v6239 = vrcp.pop %v6230
        %v6240 = vmul.f32 1.0, %v6239
        %v6241 = vrcp.pop %v6231
        %v6242 = vmul.f32 1.0, %v6241
        %v6243 = vrcp.pop %v6232
        %v6244 = vmul.f32 1.0, %v6243
        %v6245 = vrcp.pop %v6233
        %v6246 = vmul.f32 1.0, %v6245
        %v6247 = vrcp.pop %v6234
        %v6248 = vmul.f32 1.0, %v6247
        %v6249 = vrcp.pop %v6235
        %v6250 = vmul.f32 1.0, %v6249
        %v6251 = vrcp.pop %v6236
        %v6252 = vmul.f32 1.0, %v6251
        %v6253 = vrot.slane %v6125, 2
        %v6254 = vrot.slane %v6126, 2
        %v6255 = vrot.slane %v6127, 2
        %v6256 = vrot.slane %v6128, 2
        %v6257 = vrot.slane %v6129, 2
        %v6258 = vrot.slane %v6130, 2
        %v6259 = vrot.slane %v6131, 2
        %v6260 = vrot.slane %v6132, 2
        %v6269 = vtanh.pop %v6253
        %v6270 = vtanh.pop %v6254
        %v6271 = vtanh.pop %v6255
        %v6272 = vtanh.pop %v6256
        %v6273 = vtanh.pop %v6257
        %v6274 = vtanh.pop %v6258
        %v6275 = vtanh.pop %v6259
        %v6276 = vtanh.pop %v6260
        %v6277 = vrot.slane %v6125, 3
        %v6278 = vrot.slane %v6126, 3
        %v6279 = vrot.slane %v6127, 3
        %v6280 = vrot.slane %v6128, 3
        %v6281 = vrot.slane %v6129, 3
        %v6282 = vrot.slane %v6130, 3
        %v6283 = vrot.slane %v6131, 3
        %v6284 = vrot.slane %v6132, 3
        %v6293 = vxor.u32 %v6277, 2147483648
        %v6294 = vxor.u32 %v6278, 2147483648
        %v6295 = vxor.u32 %v6279, 2147483648
        %v6296 = vxor.u32 %v6280, 2147483648
        %v6297 = vxor.u32 %v6281, 2147483648
        %v6298 = vxor.u32 %v6282, 2147483648
        %v6299 = vxor.u32 %v6283, 2147483648
        %v6300 = vxor.u32 %v6284, 2147483648
        %v6301 = vmul.f32 %v6293, 1.442695
        %v6302 = vpow.pop %v6301
        %v6303 = vmul.f32 %v6294, 1.442695
        %v6304 = vpow.pop %v6303
        %v6305 = vmul.f32 %v6295, 1.442695
        %v6306 = vpow.pop %v6305
        %v6307 = vmul.f32 %v6296, 1.442695
        %v6308 = vpow.pop %v6307
        %v6309 = vmul.f32 %v6297, 1.442695
        %v6310 = vpow.pop %v6309
        %v6311 = vmul.f32 %v6298, 1.442695
        %v6312 = vpow.pop %v6311
        %v6313 = vmul.f32 %v6299, 1.442695
        %v6314 = vpow.pop %v6313
        %v6315 = vmul.f32 %v6300, 1.442695
        %v6316 = vpow.pop %v6315
        %v6317 = vadd.f32 %v6302, 1.0
        %v6318 = vadd.f32 %v6304, 1.0
        %v6319 = vadd.f32 %v6306, 1.0
        %v6320 = vadd.f32 %v6308, 1.0
        %v6321 = vadd.f32 %v6310, 1.0
        %v6322 = vadd.f32 %v6312, 1.0
        %v6323 = vadd.f32 %v6314, 1.0
        %v6324 = vadd.f32 %v6316, 1.0
        %v6325 = vrcp.pop %v6317
        %v6326 = vmul.f32 1.0, %v6325
        %v6327 = vrcp.pop %v6318
        %v6328 = vmul.f32 1.0, %v6327
        %v6329 = vrcp.pop %v6319
        %v6330 = vmul.f32 1.0, %v6329
        %v6331 = vrcp.pop %v6320
        %v6332 = vmul.f32 1.0, %v6331
        %v6333 = vrcp.pop %v6321
        %v6334 = vmul.f32 1.0, %v6333
        %v6335 = vrcp.pop %v6322
        %v6336 = vmul.f32 1.0, %v6335
        %v6337 = vrcp.pop %v6323
        %v6338 = vmul.f32 1.0, %v6337
        %v6339 = vrcp.pop %v6324
        %v6340 = vmul.f32 1.0, %v6339
        %v6342 = vcombine.high %v5760, %v5760
        %v6344 = vunpack.c.l.s4 1966171168
        %v6345 = vunpack.c.0.s8 %v6344
        %v6346 = vlaneseq
        %v6347 = vshrl.u32 %v6346, 7
        %v6348 = vsub.s32 %v6345, %v6347
        %v6349 = vrot.slane %v5760, %v6348
        %v6351 = vunpack.c.l.s4 1966171168
        %v6352 = vunpack.c.0.s8 %v6351
        %v6353 = vlaneseq
        %v6354 = vshrl.u32 %v6353, 7
        %v6355 = vsub.s32 %v6352, %v6354
        %v6356 = vrot.slane %v6342, %v6355
        %v6357 = vcombine.high %v6349, %v6349
        %v6358 = vcombine.high %v6356, %v6356
        %v6360 = vunpack.c.l.s4 1966171168
        %v6361 = vunpack.c.0.s8 %v6360
        %v6362 = vlaneseq
        %v6363 = vshrl.u32 %v6362, 7
        %v6364 = vsub.s32 %v6361, %v6363
        %v6365 = vrot.slane %v6349, %v6364
        %v6367 = vunpack.c.l.s4 1966171168
        %v6368 = vunpack.c.0.s8 %v6367
        %v6369 = vlaneseq
        %v6370 = vshrl.u32 %v6369, 7
        %v6371 = vsub.s32 %v6368, %v6370
        %v6372 = vrot.slane %v6356, %v6371
        %v6374 = vunpack.c.l.s4 1966171168
        %v6375 = vunpack.c.0.s8 %v6374
        %v6376 = vlaneseq
        %v6377 = vshrl.u32 %v6376, 7
        %v6378 = vsub.s32 %v6375, %v6377
        %v6379 = vrot.slane %v6357, %v6378
        %v6381 = vunpack.c.l.s4 1966171168
        %v6382 = vunpack.c.0.s8 %v6381
        %v6383 = vlaneseq
        %v6384 = vshrl.u32 %v6383, 7
        %v6385 = vsub.s32 %v6382, %v6384
        %v6386 = vrot.slane %v6358, %v6385
        %v6387 = vcombine.high %v6365, %v6365
        %v6388 = vcombine.high %v6372, %v6372
        %v6389 = vcombine.high %v6379, %v6379
        %v6390 = vcombine.high %v6386, %v6386
        %v6399 = vmul.f32 %v6238, %v6365
        %v6400 = vmul.f32 %v6240, %v6379
        %v6401 = vmul.f32 %v6242, %v6387
        %v6402 = vmul.f32 %v6244, %v6389
        %v6403 = vmul.f32 %v6246, %v6372
        %v6404 = vmul.f32 %v6248, %v6386
        %v6405 = vmul.f32 %v6250, %v6388
        %v6406 = vmul.f32 %v6252, %v6390
        %v6407 = vmul.f32 %v6166, %v6269
        %v6408 = vmul.f32 %v6168, %v6270
        %v6409 = vmul.f32 %v6170, %v6271
        %v6410 = vmul.f32 %v6172, %v6272
        %v6411 = vmul.f32 %v6174, %v6273
        %v6412 = vmul.f32 %v6176, %v6274
        %v6413 = vmul.f32 %v6178, %v6275
        %v6414 = vmul.f32 %v6180, %v6276
        %v6415 = vadd.f32 %v6399, %v6407
        %v6416 = vadd.f32 %v6400, %v6408
        %v6417 = vadd.f32 %v6401, %v6409
        %v6418 = vadd.f32 %v6402, %v6410
        %v6419 = vadd.f32 %v6403, %v6411
        %v6420 = vadd.f32 %v6404, %v6412
        %v6421 = vadd.f32 %v6405, %v6413
        %v6422 = vadd.f32 %v6406, %v6414
        %v6423 = vtanh.pop %v6415
        %v6424 = vtanh.pop %v6416
        %v6425 = vtanh.pop %v6417
        %v6426 = vtanh.pop %v6418
        %v6427 = vtanh.pop %v6419
        %v6428 = vtanh.pop %v6420
        %v6429 = vtanh.pop %v6421
        %v6430 = vtanh.pop %v6422
        %v6431 = vmul.f32 %v6326, %v6423
        %v6432 = vmul.f32 %v6328, %v6424
        %v6433 = vmul.f32 %v6330, %v6425
        %v6434 = vmul.f32 %v6332, %v6426
        %v6435 = vmul.f32 %v6334, %v6427
        %v6436 = vmul.f32 %v6336, %v6428
        %v6437 = vmul.f32 %v6338, %v6429
        %v6438 = vmul.f32 %v6340, %v6430
        %s6439 = sadd.s32 %s671, 7
        %v6440 = vstv %s6439
        %vm6441 = vcmp.gt.s32.totalorder %v670, %v6440
        %v6442 = vsel %vm6441, 1, 0
        %6443 = vset.pattern.permute.xlu0 0
        %6444 = vperm.xlu0 %6443, %v6442
        %v6445 = vpop.permute.xlu0 %6444
        %vm6446 = vcmp.eq.s32.totalorder %v6445, 1
        %v6455 = vcombine.low %v6415, %v6416
        %v6456 = vcombine.low %v6417, %v6418
        %v6457 = vcombine.low %v6419, %v6420
        %v6458 = vcombine.low %v6421, %v6422
        %v6460 = vunpack.c.l.s4 1966171168
        %v6461 = vunpack.c.0.s8 %v6460
        %v6462 = vlaneseq
        %v6463 = vshrl.u32 %v6462, 7
        %v6464 = vsub.s32 %v6461, %v6463
        %v6465 = vrot.slane %v6455, %v6464
        %v6467 = vunpack.c.l.s4 1966171168
        %v6468 = vunpack.c.0.s8 %v6467
        %v6469 = vlaneseq
        %v6470 = vshrl.u32 %v6469, 7
        %v6471 = vsub.s32 %v6468, %v6470
        %v6472 = vrot.slane %v6456, %v6471
        %v6474 = vunpack.c.l.s4 1966171168
        %v6475 = vunpack.c.0.s8 %v6474
        %v6476 = vlaneseq
        %v6477 = vshrl.u32 %v6476, 7
        %v6478 = vsub.s32 %v6475, %v6477
        %v6479 = vrot.slane %v6457, %v6478
        %v6481 = vunpack.c.l.s4 1966171168
        %v6482 = vunpack.c.0.s8 %v6481
        %v6483 = vlaneseq
        %v6484 = vshrl.u32 %v6483, 7
        %v6485 = vsub.s32 %v6482, %v6484
        %v6486 = vrot.slane %v6458, %v6485
        %v6487 = vcombine.low %v6465, %v6472
        %v6488 = vcombine.low %v6479, %v6486
        %v6490 = vunpack.c.l.s4 1966171168
        %v6491 = vunpack.c.0.s8 %v6490
        %v6492 = vlaneseq
        %v6493 = vshrl.u32 %v6492, 7
        %v6494 = vsub.s32 %v6491, %v6493
        %v6495 = vrot.slane %v6487, %v6494
        %v6497 = vunpack.c.l.s4 1966171168
        %v6498 = vunpack.c.0.s8 %v6497
        %v6499 = vlaneseq
        %v6500 = vshrl.u32 %v6499, 7
        %v6501 = vsub.s32 %v6498, %v6500
        %v6502 = vrot.slane %v6488, %v6501
        %v6503 = vcombine.low %v6495, %v6502
        %v6505 = vsel %vm6446, %v6503, %v5760
        %v6514 = vcombine.low %v6431, %v6432
        %v6515 = vcombine.low %v6433, %v6434
        %v6516 = vcombine.low %v6435, %v6436
        %v6517 = vcombine.low %v6437, %v6438
        %v6519 = vunpack.c.l.s4 1966171168
        %v6520 = vunpack.c.0.s8 %v6519
        %v6521 = vlaneseq
        %v6522 = vshrl.u32 %v6521, 7
        %v6523 = vsub.s32 %v6520, %v6522
        %v6524 = vrot.slane %v6514, %v6523
        %v6526 = vunpack.c.l.s4 1966171168
        %v6527 = vunpack.c.0.s8 %v6526
        %v6528 = vlaneseq
        %v6529 = vshrl.u32 %v6528, 7
        %v6530 = vsub.s32 %v6527, %v6529
        %v6531 = vrot.slane %v6515, %v6530
        %v6533 = vunpack.c.l.s4 1966171168
        %v6534 = vunpack.c.0.s8 %v6533
        %v6535 = vlaneseq
        %v6536 = vshrl.u32 %v6535, 7
        %v6537 = vsub.s32 %v6534, %v6536
        %v6538 = vrot.slane %v6516, %v6537
        %v6540 = vunpack.c.l.s4 1966171168
        %v6541 = vunpack.c.0.s8 %v6540
        %v6542 = vlaneseq
        %v6543 = vshrl.u32 %v6542, 7
        %v6544 = vsub.s32 %v6541, %v6543
        %v6545 = vrot.slane %v6517, %v6544
        %v6546 = vcombine.low %v6524, %v6531
        %v6547 = vcombine.low %v6538, %v6545
        %v6549 = vunpack.c.l.s4 1966171168
        %v6550 = vunpack.c.0.s8 %v6549
        %v6551 = vlaneseq
        %v6552 = vshrl.u32 %v6551, 7
        %v6553 = vsub.s32 %v6550, %v6552
        %v6554 = vrot.slane %v6546, %v6553
        %v6556 = vunpack.c.l.s4 1966171168
        %v6557 = vunpack.c.0.s8 %v6556
        %v6558 = vlaneseq
        %v6559 = vshrl.u32 %v6558, 7
        %v6560 = vsub.s32 %v6557, %v6559
        %v6561 = vrot.slane %v6547, %v6560
        %v6562 = vcombine.low %v6554, %v6561
        %v6564 = vsel %vm6446, %v6562, %v5819
        %v6565 = vsel %vm6446, %v6562, 0.0
        %v6567 = vcombine.high %v6565, %v6565
        %v6569 = vunpack.c.l.s4 1966171168
        %v6570 = vunpack.c.0.s8 %v6569
        %v6571 = vlaneseq
        %v6572 = vshrl.u32 %v6571, 7
        %v6573 = vsub.s32 %v6570, %v6572
        %v6574 = vrot.slane %v6565, %v6573
        %v6576 = vunpack.c.l.s4 1966171168
        %v6577 = vunpack.c.0.s8 %v6576
        %v6578 = vlaneseq
        %v6579 = vshrl.u32 %v6578, 7
        %v6580 = vsub.s32 %v6577, %v6579
        %v6581 = vrot.slane %v6567, %v6580
        %v6582 = vcombine.high %v6574, %v6574
        %v6583 = vcombine.high %v6581, %v6581
        %v6585 = vunpack.c.l.s4 1966171168
        %v6586 = vunpack.c.0.s8 %v6585
        %v6587 = vlaneseq
        %v6588 = vshrl.u32 %v6587, 7
        %v6589 = vsub.s32 %v6586, %v6588
        %v6590 = vrot.slane %v6574, %v6589
        %v6592 = vunpack.c.l.s4 1966171168
        %v6593 = vunpack.c.0.s8 %v6592
        %v6594 = vlaneseq
        %v6595 = vshrl.u32 %v6594, 7
        %v6596 = vsub.s32 %v6593, %v6595
        %v6597 = vrot.slane %v6581, %v6596
        %v6599 = vunpack.c.l.s4 1966171168
        %v6600 = vunpack.c.0.s8 %v6599
        %v6601 = vlaneseq
        %v6602 = vshrl.u32 %v6601, 7
        %v6603 = vsub.s32 %v6600, %v6602
        %v6604 = vrot.slane %v6582, %v6603
        %v6606 = vunpack.c.l.s4 1966171168
        %v6607 = vunpack.c.0.s8 %v6606
        %v6608 = vlaneseq
        %v6609 = vshrl.u32 %v6608, 7
        %v6610 = vsub.s32 %v6607, %v6609
        %v6611 = vrot.slane %v6583, %v6610
        %v6612 = vcombine.high %v6590, %v6590
        %v6613 = vcombine.high %v6597, %v6597
        %v6614 = vcombine.high %v6604, %v6604
        %v6615 = vcombine.high %v6611, %v6611
        %6624 = vst [vmem:[%s270 + $0x7] sm:$0x1] %v6590
        %6625 = vst [vmem:[%s270 + $0xf] sm:$0x1] %v6604
        %6626 = vst [vmem:[%s270 + $0x17] sm:$0x1] %v6612
        %6627 = vst [vmem:[%s270 + $0x1f] sm:$0x1] %v6614
        %6628 = vst [vmem:[%s270 + $0x27] sm:$0x1] %v6597
        %6629 = vst [vmem:[%s270 + $0x2f] sm:$0x1] %v6611
        %6630 = vst [vmem:[%s270 + $0x37] sm:$0x1] %v6613
        %6631 = vst [vmem:[%s270 + $0x3f] sm:$0x1] %v6615
        %6632 = vst [vmem:[#allocation2] sm:$0xff] %v6564
        %6633 = vst [vmem:[#allocation3] sm:$0xff] %v6505
        %s6634 = sand.u32 %s141, 1
        %s6635 = scalar_lea.sflag [#allocation7], %s6634
        %s6636 = sand.u32 %s141, 1
        %s6637 = smul.addr %s6636, 64
        %s6638 = scalar_lea.vmem [#allocation11], %s6637
        // Predicated region
        $region57: #{tpu_custom_call.1} parent=39 // pred_check
          %p6639 = pneg %p151
        $region58: #{tpu_custom_call.1} parent=39 // pred_check_branch
          %6641 = sbr.rel (%p6639) target = $region60
        $region59: #{tpu_custom_call.1} parent=39 // pred_region
          %s6643 = ssub.s32 1024, 1024
          %6644 = vsyncadd %s6635, %s6643
          %s6645 = smul.addr %s23, 128
          %s6646 = scalar_lea.hbm %s5, %s6645
          %s6647 = sshll.u32 %s6638, 4
          %s6648 = int_to_ptr.vmem [resolvable:$true] %s6647
          %6653 = dma.vmem_to_hbm [thread:$0]  %s6648, 1024, %s6646, %s6635, 128, 384, 8
        $region60: #{tpu_custom_call.1} parent=39 // pred_fallthru
          _
      $region40: #{tpu_custom_call.1} parent=5 // pred_fallthru
        _
      %p6654 = scmp.le.s32.totalorder 2, %s18
      // Predicated region
      $region61: #{tpu_custom_call.1} parent=5 // pred_check
        %p6655 = pneg %p6654
      $region62: #{tpu_custom_call.1} parent=5 // pred_check_branch
        %6657 = sbr.rel (%p6655) target = $region64
      $region63: #{tpu_custom_call.1} parent=5 // pred_region
        %s6658 = ssub.s32 %s18, 2
        // Predicated region
        $region65: #{tpu_custom_call.1} parent=63 // pred_check
          %p6659 = pneg %p157
        $region66: #{tpu_custom_call.1} parent=63 // pred_check_branch
          %6661 = sbr.rel (%p6659) target = $region68
        $region67: #{tpu_custom_call.1} parent=63 // pred_region
          %s6662 = sand.u32 %s142, 1
          %s6663 = scalar_lea.sflag [#allocation7], %s6662
          %s6664 = sand.u32 %s142, 1
          %s6665 = smul.addr %s6664, 64
          %s6666 = scalar_lea.vmem [#allocation11], %s6665
          %6667 = dma.done %s6663, 1024
        $region68: #{tpu_custom_call.1} parent=63 // pred_fallthru
          _
      $region64: #{tpu_custom_call.1} parent=5 // pred_fallthru
        _
    $region6: #{tpu_custom_call.1} parent=1 // loop_footer
      %s22 = sadd.s32 1, %s18
    $region7: #{tpu_custom_call.1} parent=1 // loop_footer_branch
      %17 = sbr.rel target = $region3
    $region8: #{tpu_custom_call.1} parent=1 // loop_exit
      _
    %6668 = vsyncpa [#allocation6], 1
    %s6669 = scalar_lea.sflag [#allocation6], 1
    %6670 = vsyncpa %s6669, 1
    %6671 = vsyncpa [#allocation9], 1
    %6672 = vsyncpa [#allocation7], 1
    %s6673 = scalar_lea.sflag [#allocation7], 1
    %6674 = vsyncpa %s6673, 1

</llo_original>
